<compile_context>
chip_gen: v7x
topology: tpu7x:2x2x1
jax: 0.10.0
libtpu: 0.0.40
codegen_flags: <defaults>
</compile_context>

<pallas_src>
import math

import jax
import jax.numpy as jnp
import numpy as np
from jax.experimental import pallas as pl
from jax.experimental.pallas import tpu as pltpu

# ---------------- small but shape-consistent configuration ----------------
BATCH = 2
IN_CHANNELS = 3
IMG_SIZE = (32, 32)
PATCH = 8
EMBED = 64
NUM_HEADS = 4
HEAD_DIM = EMBED // NUM_HEADS
NUM_ENCODERS = 2
NUM_CLASSES = 10
NUM_TOKENS = (IMG_SIZE[0] // PATCH) * (IMG_SIZE[1] // PATCH)   # 16
SEQ = NUM_TOKENS + 1                                           # 17 (cls token)
PATCH_DIM = IN_CHANNELS * PATCH * PATCH                        # 192
FF_DIM = 4 * EMBED                                             # 256
LN_EPS = 1e-5

E_PAD = 128                     # lane-padded embedding width
HEAD_TILE = 128                 # each head occupies one full lane tile
QK_WIDTH = NUM_HEADS * HEAD_TILE   # 512


# ---------------------------- in-kernel helpers ----------------------------
def _ln_padded(x, w, b):
    """LayerNorm over the true EMBED features of a zero-lane-padded tensor."""
    s = jnp.sum(x, axis=-1, keepdims=True)
    ss = jnp.sum(x * x, axis=-1, keepdims=True)
    mu = s * (1.0 / EMBED)
    var = ss * (1.0 / EMBED) - mu * mu
    # padded lanes: (0 - mu) * rsqrt * 0 + 0 == 0, so padding stays zero.
    return (x - mu) * jax.lax.rsqrt(var + LN_EPS) * w + b


def _gelu_tanh(x):
    c = math.sqrt(2.0 / math.pi)
    return 0.5 * x * (1.0 + jnp.tanh(c * (x + 0.044715 * (x * x * x))))


# -------------------------------- fused kernel ------------------------------
def vit_kernel(tok_ref, wemb_ref, add_ref,
               ln1w_ref, ln1b_ref, wq_ref, bq_ref, wk_ref, bk_ref,
               wvo_ref, bvo_ref, ln2w_ref, ln2b_ref,
               w1_ref, b1_ref, w2_ref, b2_ref,
               hlnw_ref, hlnb_ref, whead_ref, bhead_ref, o_ref):
    # One image per grid step.  tok_ref: (1, SEQ, PATCH_DIM); row 0 is zeros so
    # add_ref supplies (cls + pos[0]) there and (bias + pos[i]) elsewhere.
    x = jnp.dot(tok_ref[0], wemb_ref[...],
                preferred_element_type=jnp.float32) + add_ref[...]     # (S, 128)

    for l in range(NUM_ENCODERS):
        # NOTE: the PyTorch module reassigns x = ln1(x), so both residual
        # branches start from the LayerNorm'd activations.
        xl = _ln_padded(x, ln1w_ref[l], ln1b_ref[l])                   # (S, 128)

        # ----- multi-head self-attention (per-head weights live in their own
        #       128-wide lane tiles; V and Wo are pre-folded) -----
        q = jnp.dot(xl, wq_ref[l], preferred_element_type=jnp.float32) + bq_ref[l]
        k = jnp.dot(xl, wk_ref[l], preferred_element_type=jnp.float32) + bk_ref[l]
        xvo = jnp.dot(xl, wvo_ref[l], preferred_element_type=jnp.float32)   # (S, 512)

        acc = None
        for h in range(NUM_HEADS):
            sl = slice(h * HEAD_TILE, (h + 1) * HEAD_TILE)             # 128-aligned
            s = jax.lax.dot_general(q[:, sl], k[:, sl],
                                    (((1,), (1,)), ((), ())),
                                    preferred_element_type=jnp.float32)  # (S, S)
            s = s - jnp.max(s, axis=-1, keepdims=True)
            e = jnp.exp(s)
            p = e * pl.reciprocal(jnp.sum(e, axis=-1, keepdims=True), approx=True)
            o_h = jnp.dot(p, xvo[:, sl], preferred_element_type=jnp.float32)
            acc = o_h if acc is None else acc + o_h
        x = xl + acc + bvo_ref[l]                                      # (S, 128)

        # ----- feed-forward -----
        x3 = _ln_padded(x, ln2w_ref[l], ln2b_ref[l])
        hdn = jnp.dot(x3, w1_ref[l], preferred_element_type=jnp.float32) + b1_ref[l]
        hdn = _gelu_tanh(hdn)
        x = x + jnp.dot(hdn, w2_ref[l], preferred_element_type=jnp.float32) + b2_ref[l]

    # ----- classification head on the cls token -----
    cls = x[0:1, :]                                                    # (1, 128)
    y = _ln_padded(cls, hlnw_ref[...], hlnb_ref[...])
    o_ref[0] = jnp.dot(y, whead_ref[...],
                       preferred_element_type=jnp.float32) + bhead_ref[...]


# ------------------------------ wrappers ------------------------------------
def _full_spec(a):
    shape = a.shape
    nd = len(shape)
    return pl.BlockSpec(shape, lambda *_: (0,) * nd)


@jax.jit
def vit_pallas(tokens, kparams):
    b_sz = tokens.shape[0]
    in_specs = ([pl.BlockSpec((1, SEQ, PATCH_DIM), lambda i: (i, 0, 0))]
                + [_full_spec(a) for a in kparams])
    out = pl.pallas_call(
        vit_kernel,
        out_shape=jax.ShapeDtypeStruct((b_sz, 1, E_PAD), jnp.float32),
        grid=(b_sz,),
        in_specs=in_specs,
        out_specs=pl.BlockSpec((1, 1, E_PAD), lambda i: (i, 0, 0)),
        compiler_params=pltpu.CompilerParams(dimension_semantics=("parallel",)),
    )(tokens, *kparams)
    return out[:, 0, :NUM_CLASSES]


def _unfold_patches(x):
    # Reproduces x.unfold(2,P,P).unfold(3,P,P).contiguous().view(B,-1,C*P*P)
    b, c, h, w = x.shape
    nh, nw = h // PATCH, w // PATCH
    p = x.reshape(b, c, nh, PATCH, nw, PATCH).transpose(0, 1, 2, 4, 3, 5)
    return p.reshape(b, -1, c * PATCH * PATCH)


def vit_forward(x, kparams):
    patches = _unfold_patches(x)                                  # (B, 16, 192)
    tokens = jnp.concatenate(
        [jnp.zeros((x.shape[0], 1, PATCH_DIM), jnp.float32), patches], axis=1)
    return vit_pallas(tokens, kparams)                            # (B, 10)


# -------------------- parameter prep (pure JAX, one-time) --------------------
def prepare_kernel_params(params):
    def pad_lane(a, width=E_PAD):
        return jnp.pad(a, ((0, 0), (0, width - a.shape[-1])))

    wemb = pad_lane(params["embed_w"])                                  # (192,128)
    add = jnp.concatenate([params["cls"] + params["pos"][0:1],
                           params["embed_b"] + params["pos"][1:]], axis=0)
    add = pad_lane(add)                                                 # (17,128)

    scale = 1.0 / math.sqrt(HEAD_DIM)
    names = ["ln1w", "ln1b", "wq", "bq", "wk", "bk", "wvo", "bvo",
             "ln2w", "ln2b", "w1", "b1", "w2", "b2"]
    per = {n: [] for n in names}

    for p in params["encoders"]:
        wq = p["w_qkv"][:, :EMBED]
        wk = p["w_qkv"][:, EMBED:2 * EMBED]
        wv = p["w_qkv"][:, 2 * EMBED:]
        bq = p["b_qkv"][:, :EMBED]
        bk = p["b_qkv"][:, EMBED:2 * EMBED]
        bv = p["b_qkv"][:, 2 * EMBED:]

        wq_blk, bq_blk, wk_blk, bk_blk, wvo_blk = [], [], [], [], []
        for h in range(NUM_HEADS):
            hs = slice(h * HEAD_DIM, (h + 1) * HEAD_DIM)
            wq_blk.append(jnp.pad(wq[:, hs] * scale,
                                  ((0, E_PAD - EMBED), (0, HEAD_TILE - HEAD_DIM))))
            bq_blk.append(jnp.pad(bq[:, hs] * scale,
                                  ((0, 0), (0, HEAD_TILE - HEAD_DIM))))
            wk_blk.append(jnp.pad(wk[:, hs],
                                  ((0, E_PAD - EMBED), (0, HEAD_TILE - HEAD_DIM))))
            bk_blk.append(jnp.pad(bk[:, hs],
                                  ((0, 0), (0, HEAD_TILE - HEAD_DIM))))
            wvo_h = wv[:, hs] @ p["w_o"][hs, :]                         # (64, 64)
            wvo_blk.append(jnp.pad(wvo_h, ((0, E_PAD - EMBED), (0, E_PAD - EMBED))))

        per["ln1w"].append(pad_lane(p["ln1_w"]))
        per["ln1b"].append(pad_lane(p["ln1_b"]))
        per["wq"].append(jnp.concatenate(wq_blk, axis=1))               # (128,512)
        per["bq"].append(jnp.concatenate(bq_blk, axis=1))               # (1,512)
        per["wk"].append(jnp.concatenate(wk_blk, axis=1))
        per["bk"].append(jnp.concatenate(bk_blk, axis=1))
        per["wvo"].append(jnp.concatenate(wvo_blk, axis=1))             # (128,512)
        per["bvo"].append(pad_lane(bv @ p["w_o"] + p["b_o"]))           # (1,128)
        per["ln2w"].append(pad_lane(p["ln2_w"]))
        per["ln2b"].append(pad_lane(p["ln2_b"]))
        per["w1"].append(jnp.pad(p["w_ff1"], ((0, E_PAD - EMBED), (0, 0))))
        per["b1"].append(p["b_ff1"])
        per["w2"].append(pad_lane(p["w_ff2"]))
        per["b2"].append(pad_lane(p["b_ff2"]))

    st = {n: jnp.stack(v, axis=0) for n, v in per.items()}
    head_w = jnp.pad(params["head_w"],
                     ((0, E_PAD - EMBED), (0, E_PAD - NUM_CLASSES)))
    head_b = jnp.pad(params["head_b"], ((0, 0), (0, E_PAD - NUM_CLASSES)))

    return (wemb, add,
            st["ln1w"], st["ln1b"], st["wq"], st["bq"], st["wk"], st["bk"],
            st["wvo"], st["bvo"], st["ln2w"], st["ln2b"],
            st["w1"], st["b1"], st["w2"], st["b2"],
            pad_lane(params["head_ln_w"]), pad_lane(params["head_ln_b"]),
            head_w, head_b)


# ----------------------- deterministic parameter init -----------------------
def init_params(key):
    keys = jax.random.split(key, 4 + NUM_ENCODERS)

    def lin(k, fan_in, fan_out):
        return 0.02 * jax.random.normal(k, (fan_in, fan_out), jnp.float32)

    params = {
        "cls": jax.random.normal(keys[0], (1, EMBED), jnp.float32),
        "pos": jax.random.normal(keys[1], (SEQ, EMBED), jnp.float32),
        "embed_w": lin(keys[2], PATCH_DIM, EMBED),
        "embed_b": jnp.zeros((1, EMBED), jnp.float32),
        "head_ln_w": jnp.ones((1, EMBED), jnp.float32),
        "head_ln_b": jnp.zeros((1, EMBED), jnp.float32),
        "head_w": lin(keys[3], EMBED, NUM_CLASSES),
        "head_b": jnp.zeros((1, NUM_CLASSES), jnp.float32),
        "encoders": [],
    }
    for l in range(NUM_ENCODERS):
        k = jax.random.split(keys[4 + l], 4)
        params["encoders"].append({
            "ln1_w": jnp.ones((1, EMBED), jnp.float32),
            "ln1_b": jnp.zeros((1, EMBED), jnp.float32),
            "w_qkv": lin(k[0], EMBED, 3 * EMBED),
            "b_qkv": jnp.zeros((1, 3 * EMBED), jnp.float32),
            "w_o": lin(k[1], EMBED, EMBED),
            "b_o": jnp.zeros((1, EMBED), jnp.float32),
            "ln2_w": jnp.ones((1, EMBED), jnp.float32),
            "ln2_b": jnp.zeros((1, EMBED), jnp.float32),
            "w_ff1": lin(k[2], EMBED, FF_DIM),
            "b_ff1": jnp.zeros((1, FF_DIM), jnp.float32),
            "w_ff2": lin(k[3], FF_DIM, EMBED),
            "b_ff2": jnp.zeros((1, EMBED), jnp.float32),
        })
    return params


# ------------------------------ pure-JAX reference ---------------------------
def _layernorm_ref(x, w, b):
    mu = jnp.mean(x, axis=-1, keepdims=True)
    var = jnp.mean((x - mu) ** 2, axis=-1, keepdims=True)
    return (x - mu) * jax.lax.rsqrt(var + LN_EPS) * w + b


def vit_reference(x, params):
    patches = _unfold_patches(x)
    b = x.shape[0]
    h = patches @ params["embed_w"] + params["embed_b"]
    cls = jnp.broadcast_to(params["cls"][None], (b, 1, EMBED))
    h = jnp.concatenate([cls, h], axis=1) + params["pos"][None]
    for p in params["encoders"]:
        x1 = _layernorm_ref(h, p["ln1_w"], p["ln1_b"])
        qkv = x1 @ p["w_qkv"] + p["b_qkv"]
        q, k, v = (qkv[..., :EMBED], qkv[..., EMBED:2 * EMBED], qkv[..., 2 * EMBED:])

        def heads(t):
            return t.reshape(b, SEQ, NUM_HEADS, HEAD_DIM).transpose(0, 2, 1, 3)

        qh, kh, vh = heads(q), heads(k), heads(v)
        s = (qh / math.sqrt(HEAD_DIM)) @ kh.transpose(0, 1, 3, 2)
        a = jax.nn.softmax(s, axis=-1)
        o = (a @ vh).transpose(0, 2, 1, 3).reshape(b, SEQ, EMBED)
        o = o @ p["w_o"] + p["b_o"]
        x2 = x1 + o
        x3 = _layernorm_ref(x2, p["ln2_w"], p["ln2_b"])
        f = x3 @ p["w_ff1"] + p["b_ff1"]
        f = jax.nn.gelu(f, approximate=False)
        f = f @ p["w_ff2"] + p["b_ff2"]
        h = x2 + f
    cls_out = h[:, 0, :]
    y = _layernorm_ref(cls_out, params["head_ln_w"], params["head_ln_b"])
    return y @ params["head_w"] + params["head_b"]


# ----------------------------------- main ------------------------------------
if __name__ == "__main__":
    key = jax.random.PRNGKey(0)
    kx, kp = jax.random.split(key)
    x = jax.random.normal(kx, (BATCH, IN_CHANNELS, IMG_SIZE[0], IMG_SIZE[1]),
                          jnp.float32)
    params = init_params(kp)

    with jax.default_matmul_precision("highest"):
        kparams = prepare_kernel_params(params)

    out = jax.block_until_ready(vit_forward(x, kparams))
    assert out.shape == (BATCH, NUM_CLASSES), out.shape

    with jax.default_matmul_precision("highest"):
        ref = jax.block_until_ready(vit_reference(x, params))
    np.testing.assert_allclose(np.asarray(out), np.asarray(ref),
                               rtol=1e-2, atol=1e-2)
    print("KERNEL_OK")
</pallas_src>

<mosaic_0001>
module attributes {stable_mosaic.version = 11 : i64} {
  func.func @vit_kernel(%arg0: i32, %arg1: memref<1x17x192xf32, #tpu.memory_space<vmem>>, %arg2: memref<192x128xf32, #tpu.memory_space<vmem>>, %arg3: memref<17x128xf32, #tpu.memory_space<vmem>>, %arg4: memref<2x1x128xf32, #tpu.memory_space<vmem>>, %arg5: memref<2x1x128xf32, #tpu.memory_space<vmem>>, %arg6: memref<2x128x512xf32, #tpu.memory_space<vmem>>, %arg7: memref<2x1x512xf32, #tpu.memory_space<vmem>>, %arg8: memref<2x128x512xf32, #tpu.memory_space<vmem>>, %arg9: memref<2x1x512xf32, #tpu.memory_space<vmem>>, %arg10: memref<2x128x512xf32, #tpu.memory_space<vmem>>, %arg11: memref<2x1x128xf32, #tpu.memory_space<vmem>>, %arg12: memref<2x1x128xf32, #tpu.memory_space<vmem>>, %arg13: memref<2x1x128xf32, #tpu.memory_space<vmem>>, %arg14: memref<2x128x256xf32, #tpu.memory_space<vmem>>, %arg15: memref<2x1x256xf32, #tpu.memory_space<vmem>>, %arg16: memref<2x256x128xf32, #tpu.memory_space<vmem>>, %arg17: memref<2x1x128xf32, #tpu.memory_space<vmem>>, %arg18: memref<1x128xf32, #tpu.memory_space<vmem>>, %arg19: memref<1x128xf32, #tpu.memory_space<vmem>>, %arg20: memref<128x128xf32, #tpu.memory_space<vmem>>, %arg21: memref<1x128xf32, #tpu.memory_space<vmem>>, %arg22: memref<1x1x128xf32, #tpu.memory_space<vmem>>) attributes {dimension_semantics = [#tpu.dimension_semantics<parallel>], iteration_bounds = array<i64: 2>, scalar_prefetch = 0 : i64, scratch_operands = 0 : i64, tpu.core_type = #tpu.core_type<tc>, window_params = [{transform_indices = @transform_0, window_bounds = array<i64: 1, 17, 192>}, {pipeline_mode = #tpu.pipeline_mode<synchronous>, transform_indices = @transform_1, window_bounds = array<i64: 192, 128>}, {pipeline_mode = #tpu.pipeline_mode<synchronous>, transform_indices = @transform_2, window_bounds = array<i64: 17, 128>}, {pipeline_mode = #tpu.pipeline_mode<synchronous>, transform_indices = @transform_3, window_bounds = array<i64: 2, 1, 128>}, {pipeline_mode = #tpu.pipeline_mode<synchronous>, transform_indices = @transform_4, window_bounds = array<i64: 2, 1, 128>}, {pipeline_mode = #tpu.pipeline_mode<synchronous>, transform_indices = @transform_5, window_bounds = array<i64: 2, 128, 512>}, {pipeline_mode = #tpu.pipeline_mode<synchronous>, transform_indices = @transform_6, window_bounds = array<i64: 2, 1, 512>}, {pipeline_mode = #tpu.pipeline_mode<synchronous>, transform_indices = @transform_7, window_bounds = array<i64: 2, 128, 512>}, {pipeline_mode = #tpu.pipeline_mode<synchronous>, transform_indices = @transform_8, window_bounds = array<i64: 2, 1, 512>}, {pipeline_mode = #tpu.pipeline_mode<synchronous>, transform_indices = @transform_9, window_bounds = array<i64: 2, 128, 512>}, {pipeline_mode = #tpu.pipeline_mode<synchronous>, transform_indices = @transform_10, window_bounds = array<i64: 2, 1, 128>}, {pipeline_mode = #tpu.pipeline_mode<synchronous>, transform_indices = @transform_11, window_bounds = array<i64: 2, 1, 128>}, {pipeline_mode = #tpu.pipeline_mode<synchronous>, transform_indices = @transform_12, window_bounds = array<i64: 2, 1, 128>}, {pipeline_mode = #tpu.pipeline_mode<synchronous>, transform_indices = @transform_13, window_bounds = array<i64: 2, 128, 256>}, {pipeline_mode = #tpu.pipeline_mode<synchronous>, transform_indices = @transform_14, window_bounds = array<i64: 2, 1, 256>}, {pipeline_mode = #tpu.pipeline_mode<synchronous>, transform_indices = @transform_15, window_bounds = array<i64: 2, 256, 128>}, {pipeline_mode = #tpu.pipeline_mode<synchronous>, transform_indices = @transform_16, window_bounds = array<i64: 2, 1, 128>}, {pipeline_mode = #tpu.pipeline_mode<synchronous>, transform_indices = @transform_17, window_bounds = array<i64: 1, 128>}, {pipeline_mode = #tpu.pipeline_mode<synchronous>, transform_indices = @transform_18, window_bounds = array<i64: 1, 128>}, {pipeline_mode = #tpu.pipeline_mode<synchronous>, transform_indices = @transform_19, window_bounds = array<i64: 128, 128>}, {pipeline_mode = #tpu.pipeline_mode<synchronous>, transform_indices = @transform_20, window_bounds = array<i64: 1, 128>}, {transform_indices = @transform_21, window_bounds = array<i64: 1, 1, 128>}]} {
    %c0 = arith.constant 0 : index
    %c0_0 = arith.constant 0 : index
    %c0_1 = arith.constant 0 : index
    %0 = vector.load %arg1[%c0, %c0_0, %c0_1] : memref<1x17x192xf32, #tpu.memory_space<vmem>>, vector<1x17x192xf32>
    %1 = vector.shape_cast %0 : vector<1x17x192xf32> to vector<17x192xf32>
    %c0_2 = arith.constant 0 : index
    %c0_3 = arith.constant 0 : index
    %2 = vector.load %arg2[%c0_2, %c0_3] : memref<192x128xf32, #tpu.memory_space<vmem>>, vector<192x128xf32>
    %cst = arith.constant dense<0.000000e+00> : vector<17x128xf32>
    %3 = tpu.matmul %1, %2, %cst {dimension_numbers = #tpu.dot_dimension_numbers<[1], [0], [0], [1], [0, 0, 1, 1], [], []>} : vector<17x192xf32>, vector<192x128xf32>, vector<17x128xf32> -> vector<17x128xf32>
    %c0_4 = arith.constant 0 : index
    %c0_5 = arith.constant 0 : index
    %4 = vector.load %arg3[%c0_4, %c0_5] : memref<17x128xf32, #tpu.memory_space<vmem>>, vector<17x128xf32>
    %5 = arith.addf %3, %4 : vector<17x128xf32>
    %c0_6 = arith.constant 0 : index
    %c0_7 = arith.constant 0 : index
    %c0_8 = arith.constant 0 : index
    %6 = vector.load %arg4[%c0_6, %c0_7, %c0_8] : memref<2x1x128xf32, #tpu.memory_space<vmem>>, vector<1x1x128xf32>
    %7 = vector.shape_cast %6 : vector<1x1x128xf32> to vector<1x128xf32>
    %c0_9 = arith.constant 0 : index
    %c0_10 = arith.constant 0 : index
    %c0_11 = arith.constant 0 : index
    %8 = vector.load %arg5[%c0_9, %c0_10, %c0_11] : memref<2x1x128xf32, #tpu.memory_space<vmem>>, vector<1x1x128xf32>
    %9 = vector.shape_cast %8 : vector<1x1x128xf32> to vector<1x128xf32>
    %cst_12 = arith.constant dense<0.000000e+00> : vector<17xf32>
    %10 = vector.multi_reduction <add>, %5, %cst_12 [1] : vector<17x128xf32> to vector<17xf32>
    %11 = vector.shape_cast %10 : vector<17xf32> to vector<17x1xf32>
    %12 = arith.mulf %5, %5 : vector<17x128xf32>
    %cst_13 = arith.constant dense<0.000000e+00> : vector<17xf32>
    %13 = vector.multi_reduction <add>, %12, %cst_13 [1] : vector<17x128xf32> to vector<17xf32>
    %14 = vector.shape_cast %13 : vector<17xf32> to vector<17x1xf32>
    %cst_14 = arith.constant 1.562500e-02 : f32
    %15 = vector.broadcast %cst_14 : f32 to vector<17x1xf32>
    %16 = arith.mulf %11, %15 : vector<17x1xf32>
    %cst_15 = arith.constant 1.562500e-02 : f32
    %17 = vector.broadcast %cst_15 : f32 to vector<17x1xf32>
    %18 = arith.mulf %14, %17 : vector<17x1xf32>
    %19 = arith.mulf %16, %16 : vector<17x1xf32>
    %20 = arith.subf %18, %19 : vector<17x1xf32>
    %21 = vector.broadcast %16 : vector<17x1xf32> to vector<17x128xf32>
    %22 = arith.subf %5, %21 : vector<17x128xf32>
    %cst_16 = arith.constant 9.99999974E-6 : f32
    %23 = vector.broadcast %cst_16 : f32 to vector<17x1xf32>
    %24 = arith.addf %20, %23 : vector<17x1xf32>
    %25 = math.rsqrt %24 : vector<17x1xf32>
    %26 = vector.broadcast %25 : vector<17x1xf32> to vector<17x128xf32>
    %27 = arith.mulf %22, %26 : vector<17x128xf32>
    %28 = vector.broadcast %7 : vector<1x128xf32> to vector<17x128xf32>
    %29 = arith.mulf %27, %28 : vector<17x128xf32>
    %30 = vector.broadcast %9 : vector<1x128xf32> to vector<17x128xf32>
    %31 = arith.addf %29, %30 : vector<17x128xf32>
    %c0_17 = arith.constant 0 : index
    %c0_18 = arith.constant 0 : index
    %c0_19 = arith.constant 0 : index
    %32 = vector.load %arg6[%c0_17, %c0_18, %c0_19] : memref<2x128x512xf32, #tpu.memory_space<vmem>>, vector<1x128x512xf32>
    %33 = vector.shape_cast %32 : vector<1x128x512xf32> to vector<128x512xf32>
    %cst_20 = arith.constant dense<0.000000e+00> : vector<17x512xf32>
    %34 = tpu.matmul %31, %33, %cst_20 {dimension_numbers = #tpu.dot_dimension_numbers<[1], [0], [0], [1], [0, 0, 1, 1], [], []>} : vector<17x128xf32>, vector<128x512xf32>, vector<17x512xf32> -> vector<17x512xf32>
    %c0_21 = arith.constant 0 : index
    %c0_22 = arith.constant 0 : index
    %c0_23 = arith.constant 0 : index
    %35 = vector.load %arg7[%c0_21, %c0_22, %c0_23] : memref<2x1x512xf32, #tpu.memory_space<vmem>>, vector<1x1x512xf32>
    %36 = vector.shape_cast %35 : vector<1x1x512xf32> to vector<1x512xf32>
    %37 = vector.broadcast %36 : vector<1x512xf32> to vector<17x512xf32>
    %38 = arith.addf %34, %37 : vector<17x512xf32>
    %c0_24 = arith.constant 0 : index
    %c0_25 = arith.constant 0 : index
    %c0_26 = arith.constant 0 : index
    %39 = vector.load %arg8[%c0_24, %c0_25, %c0_26] : memref<2x128x512xf32, #tpu.memory_space<vmem>>, vector<1x128x512xf32>
    %40 = vector.shape_cast %39 : vector<1x128x512xf32> to vector<128x512xf32>
    %cst_27 = arith.constant dense<0.000000e+00> : vector<17x512xf32>
    %41 = tpu.matmul %31, %40, %cst_27 {dimension_numbers = #tpu.dot_dimension_numbers<[1], [0], [0], [1], [0, 0, 1, 1], [], []>} : vector<17x128xf32>, vector<128x512xf32>, vector<17x512xf32> -> vector<17x512xf32>
    %c0_28 = arith.constant 0 : index
    %c0_29 = arith.constant 0 : index
    %c0_30 = arith.constant 0 : index
    %42 = vector.load %arg9[%c0_28, %c0_29, %c0_30] : memref<2x1x512xf32, #tpu.memory_space<vmem>>, vector<1x1x512xf32>
    %43 = vector.shape_cast %42 : vector<1x1x512xf32> to vector<1x512xf32>
    %44 = vector.broadcast %43 : vector<1x512xf32> to vector<17x512xf32>
    %45 = arith.addf %41, %44 : vector<17x512xf32>
    %c0_31 = arith.constant 0 : index
    %c0_32 = arith.constant 0 : index
    %c0_33 = arith.constant 0 : index
    %46 = vector.load %arg10[%c0_31, %c0_32, %c0_33] : memref<2x128x512xf32, #tpu.memory_space<vmem>>, vector<1x128x512xf32>
    %47 = vector.shape_cast %46 : vector<1x128x512xf32> to vector<128x512xf32>
    %cst_34 = arith.constant dense<0.000000e+00> : vector<17x512xf32>
    %48 = tpu.matmul %31, %47, %cst_34 {dimension_numbers = #tpu.dot_dimension_numbers<[1], [0], [0], [1], [0, 0, 1, 1], [], []>} : vector<17x128xf32>, vector<128x512xf32>, vector<17x512xf32> -> vector<17x512xf32>
    %49 = vector.extract_strided_slice %38 {offsets = [0, 0], sizes = [17, 128], strides = [1, 1]} : vector<17x512xf32> to vector<17x128xf32>
    %50 = vector.extract_strided_slice %45 {offsets = [0, 0], sizes = [17, 128], strides = [1, 1]} : vector<17x512xf32> to vector<17x128xf32>
    %cst_35 = arith.constant dense<0.000000e+00> : vector<17x17xf32>
    %51 = tpu.matmul %49, %50, %cst_35 {dimension_numbers = #tpu.dot_dimension_numbers<[1], [1], [0], [0], [0, 0, 1, 0], [], []>} : vector<17x128xf32>, vector<17x128xf32>, vector<17x17xf32> -> vector<17x17xf32>
    %cst_36 = arith.constant dense<0xFF800000> : vector<17xf32>
    %52 = vector.multi_reduction <maximumf>, %51, %cst_36 [1] : vector<17x17xf32> to vector<17xf32>
    %53 = vector.shape_cast %52 : vector<17xf32> to vector<17x1xf32>
    %54 = vector.broadcast %53 : vector<17x1xf32> to vector<17x17xf32>
    %55 = arith.subf %51, %54 : vector<17x17xf32>
    %56 = math.exp %55 : vector<17x17xf32>
    %cst_37 = arith.constant dense<0.000000e+00> : vector<17xf32>
    %57 = vector.multi_reduction <add>, %56, %cst_37 [1] : vector<17x17xf32> to vector<17xf32>
    %58 = vector.shape_cast %57 : vector<17xf32> to vector<17x1xf32>
    %59 = tpu.reciprocal %58 {approx = true} : vector<17x1xf32> -> vector<17x1xf32>
    %60 = vector.broadcast %59 : vector<17x1xf32> to vector<17x17xf32>
    %61 = arith.mulf %56, %60 : vector<17x17xf32>
    %62 = vector.extract_strided_slice %48 {offsets = [0, 0], sizes = [17, 128], strides = [1, 1]} : vector<17x512xf32> to vector<17x128xf32>
    %cst_38 = arith.constant dense<0.000000e+00> : vector<17x128xf32>
    %63 = tpu.matmul %61, %62, %cst_38 {dimension_numbers = #tpu.dot_dimension_numbers<[1], [0], [0], [1], [0, 0, 1, 1], [], []>} : vector<17x17xf32>, vector<17x128xf32>, vector<17x128xf32> -> vector<17x128xf32>
    %64 = vector.extract_strided_slice %38 {offsets = [0, 128], sizes = [17, 128], strides = [1, 1]} : vector<17x512xf32> to vector<17x128xf32>
    %65 = vector.extract_strided_slice %45 {offsets = [0, 128], sizes = [17, 128], strides = [1, 1]} : vector<17x512xf32> to vector<17x128xf32>
    %cst_39 = arith.constant dense<0.000000e+00> : vector<17x17xf32>
    %66 = tpu.matmul %64, %65, %cst_39 {dimension_numbers = #tpu.dot_dimension_numbers<[1], [1], [0], [0], [0, 0, 1, 0], [], []>} : vector<17x128xf32>, vector<17x128xf32>, vector<17x17xf32> -> vector<17x17xf32>
    %cst_40 = arith.constant dense<0xFF800000> : vector<17xf32>
    %67 = vector.multi_reduction <maximumf>, %66, %cst_40 [1] : vector<17x17xf32> to vector<17xf32>
    %68 = vector.shape_cast %67 : vector<17xf32> to vector<17x1xf32>
    %69 = vector.broadcast %68 : vector<17x1xf32> to vector<17x17xf32>
    %70 = arith.subf %66, %69 : vector<17x17xf32>
    %71 = math.exp %70 : vector<17x17xf32>
    %cst_41 = arith.constant dense<0.000000e+00> : vector<17xf32>
    %72 = vector.multi_reduction <add>, %71, %cst_41 [1] : vector<17x17xf32> to vector<17xf32>
    %73 = vector.shape_cast %72 : vector<17xf32> to vector<17x1xf32>
    %74 = tpu.reciprocal %73 {approx = true} : vector<17x1xf32> -> vector<17x1xf32>
    %75 = vector.broadcast %74 : vector<17x1xf32> to vector<17x17xf32>
    %76 = arith.mulf %71, %75 : vector<17x17xf32>
    %77 = vector.extract_strided_slice %48 {offsets = [0, 128], sizes = [17, 128], strides = [1, 1]} : vector<17x512xf32> to vector<17x128xf32>
    %cst_42 = arith.constant dense<0.000000e+00> : vector<17x128xf32>
    %78 = tpu.matmul %76, %77, %cst_42 {dimension_numbers = #tpu.dot_dimension_numbers<[1], [0], [0], [1], [0, 0, 1, 1], [], []>} : vector<17x17xf32>, vector<17x128xf32>, vector<17x128xf32> -> vector<17x128xf32>
    %79 = arith.addf %63, %78 : vector<17x128xf32>
    %80 = vector.extract_strided_slice %38 {offsets = [0, 256], sizes = [17, 128], strides = [1, 1]} : vector<17x512xf32> to vector<17x128xf32>
    %81 = vector.extract_strided_slice %45 {offsets = [0, 256], sizes = [17, 128], strides = [1, 1]} : vector<17x512xf32> to vector<17x128xf32>
    %cst_43 = arith.constant dense<0.000000e+00> : vector<17x17xf32>
    %82 = tpu.matmul %80, %81, %cst_43 {dimension_numbers = #tpu.dot_dimension_numbers<[1], [1], [0], [0], [0, 0, 1, 0], [], []>} : vector<17x128xf32>, vector<17x128xf32>, vector<17x17xf32> -> vector<17x17xf32>
    %cst_44 = arith.constant dense<0xFF800000> : vector<17xf32>
    %83 = vector.multi_reduction <maximumf>, %82, %cst_44 [1] : vector<17x17xf32> to vector<17xf32>
    %84 = vector.shape_cast %83 : vector<17xf32> to vector<17x1xf32>
    %85 = vector.broadcast %84 : vector<17x1xf32> to vector<17x17xf32>
    %86 = arith.subf %82, %85 : vector<17x17xf32>
    %87 = math.exp %86 : vector<17x17xf32>
    %cst_45 = arith.constant dense<0.000000e+00> : vector<17xf32>
    %88 = vector.multi_reduction <add>, %87, %cst_45 [1] : vector<17x17xf32> to vector<17xf32>
    %89 = vector.shape_cast %88 : vector<17xf32> to vector<17x1xf32>
    %90 = tpu.reciprocal %89 {approx = true} : vector<17x1xf32> -> vector<17x1xf32>
    %91 = vector.broadcast %90 : vector<17x1xf32> to vector<17x17xf32>
    %92 = arith.mulf %87, %91 : vector<17x17xf32>
    %93 = vector.extract_strided_slice %48 {offsets = [0, 256], sizes = [17, 128], strides = [1, 1]} : vector<17x512xf32> to vector<17x128xf32>
    %cst_46 = arith.constant dense<0.000000e+00> : vector<17x128xf32>
    %94 = tpu.matmul %92, %93, %cst_46 {dimension_numbers = #tpu.dot_dimension_numbers<[1], [0], [0], [1], [0, 0, 1, 1], [], []>} : vector<17x17xf32>, vector<17x128xf32>, vector<17x128xf32> -> vector<17x128xf32>
    %95 = arith.addf %79, %94 : vector<17x128xf32>
    %96 = vector.extract_strided_slice %38 {offsets = [0, 384], sizes = [17, 128], strides = [1, 1]} : vector<17x512xf32> to vector<17x128xf32>
    %97 = vector.extract_strided_slice %45 {offsets = [0, 384], sizes = [17, 128], strides = [1, 1]} : vector<17x512xf32> to vector<17x128xf32>
    %cst_47 = arith.constant dense<0.000000e+00> : vector<17x17xf32>
    %98 = tpu.matmul %96, %97, %cst_47 {dimension_numbers = #tpu.dot_dimension_numbers<[1], [1], [0], [0], [0, 0, 1, 0], [], []>} : vector<17x128xf32>, vector<17x128xf32>, vector<17x17xf32> -> vector<17x17xf32>
    %cst_48 = arith.constant dense<0xFF800000> : vector<17xf32>
    %99 = vector.multi_reduction <maximumf>, %98, %cst_48 [1] : vector<17x17xf32> to vector<17xf32>
    %100 = vector.shape_cast %99 : vector<17xf32> to vector<17x1xf32>
    %101 = vector.broadcast %100 : vector<17x1xf32> to vector<17x17xf32>
    %102 = arith.subf %98, %101 : vector<17x17xf32>
    %103 = math.exp %102 : vector<17x17xf32>
    %cst_49 = arith.constant dense<0.000000e+00> : vector<17xf32>
    %104 = vector.multi_reduction <add>, %103, %cst_49 [1] : vector<17x17xf32> to vector<17xf32>
    %105 = vector.shape_cast %104 : vector<17xf32> to vector<17x1xf32>
    %106 = tpu.reciprocal %105 {approx = true} : vector<17x1xf32> -> vector<17x1xf32>
    %107 = vector.broadcast %106 : vector<17x1xf32> to vector<17x17xf32>
    %108 = arith.mulf %103, %107 : vector<17x17xf32>
    %109 = vector.extract_strided_slice %48 {offsets = [0, 384], sizes = [17, 128], strides = [1, 1]} : vector<17x512xf32> to vector<17x128xf32>
    %cst_50 = arith.constant dense<0.000000e+00> : vector<17x128xf32>
    %110 = tpu.matmul %108, %109, %cst_50 {dimension_numbers = #tpu.dot_dimension_numbers<[1], [0], [0], [1], [0, 0, 1, 1], [], []>} : vector<17x17xf32>, vector<17x128xf32>, vector<17x128xf32> -> vector<17x128xf32>
    %111 = arith.addf %95, %110 : vector<17x128xf32>
    %112 = arith.addf %31, %111 : vector<17x128xf32>
    %c0_51 = arith.constant 0 : index
    %c0_52 = arith.constant 0 : index
    %c0_53 = arith.constant 0 : index
    %113 = vector.load %arg11[%c0_51, %c0_52, %c0_53] : memref<2x1x128xf32, #tpu.memory_space<vmem>>, vector<1x1x128xf32>
    %114 = vector.shape_cast %113 : vector<1x1x128xf32> to vector<1x128xf32>
    %115 = vector.broadcast %114 : vector<1x128xf32> to vector<17x128xf32>
    %116 = arith.addf %112, %115 : vector<17x128xf32>
    %c0_54 = arith.constant 0 : index
    %c0_55 = arith.constant 0 : index
    %c0_56 = arith.constant 0 : index
    %117 = vector.load %arg12[%c0_54, %c0_55, %c0_56] : memref<2x1x128xf32, #tpu.memory_space<vmem>>, vector<1x1x128xf32>
    %118 = vector.shape_cast %117 : vector<1x1x128xf32> to vector<1x128xf32>
    %c0_57 = arith.constant 0 : index
    %c0_58 = arith.constant 0 : index
    %c0_59 = arith.constant 0 : index
    %119 = vector.load %arg13[%c0_57, %c0_58, %c0_59] : memref<2x1x128xf32, #tpu.memory_space<vmem>>, vector<1x1x128xf32>
    %120 = vector.shape_cast %119 : vector<1x1x128xf32> to vector<1x128xf32>
    %cst_60 = arith.constant dense<0.000000e+00> : vector<17xf32>
    %121 = vector.multi_reduction <add>, %116, %cst_60 [1] : vector<17x128xf32> to vector<17xf32>
    %122 = vector.shape_cast %121 : vector<17xf32> to vector<17x1xf32>
    %123 = arith.mulf %116, %116 : vector<17x128xf32>
    %cst_61 = arith.constant dense<0.000000e+00> : vector<17xf32>
    %124 = vector.multi_reduction <add>, %123, %cst_61 [1] : vector<17x128xf32> to vector<17xf32>
    %125 = vector.shape_cast %124 : vector<17xf32> to vector<17x1xf32>
    %cst_62 = arith.constant 1.562500e-02 : f32
    %126 = vector.broadcast %cst_62 : f32 to vector<17x1xf32>
    %127 = arith.mulf %122, %126 : vector<17x1xf32>
    %cst_63 = arith.constant 1.562500e-02 : f32
    %128 = vector.broadcast %cst_63 : f32 to vector<17x1xf32>
    %129 = arith.mulf %125, %128 : vector<17x1xf32>
    %130 = arith.mulf %127, %127 : vector<17x1xf32>
    %131 = arith.subf %129, %130 : vector<17x1xf32>
    %132 = vector.broadcast %127 : vector<17x1xf32> to vector<17x128xf32>
    %133 = arith.subf %116, %132 : vector<17x128xf32>
    %cst_64 = arith.constant 9.99999974E-6 : f32
    %134 = vector.broadcast %cst_64 : f32 to vector<17x1xf32>
    %135 = arith.addf %131, %134 : vector<17x1xf32>
    %136 = math.rsqrt %135 : vector<17x1xf32>
    %137 = vector.broadcast %136 : vector<17x1xf32> to vector<17x128xf32>
    %138 = arith.mulf %133, %137 : vector<17x128xf32>
    %139 = vector.broadcast %118 : vector<1x128xf32> to vector<17x128xf32>
    %140 = arith.mulf %138, %139 : vector<17x128xf32>
    %141 = vector.broadcast %120 : vector<1x128xf32> to vector<17x128xf32>
    %142 = arith.addf %140, %141 : vector<17x128xf32>
    %c0_65 = arith.constant 0 : index
    %c0_66 = arith.constant 0 : index
    %c0_67 = arith.constant 0 : index
    %143 = vector.load %arg14[%c0_65, %c0_66, %c0_67] : memref<2x128x256xf32, #tpu.memory_space<vmem>>, vector<1x128x256xf32>
    %144 = vector.shape_cast %143 : vector<1x128x256xf32> to vector<128x256xf32>
    %cst_68 = arith.constant dense<0.000000e+00> : vector<17x256xf32>
    %145 = tpu.matmul %142, %144, %cst_68 {dimension_numbers = #tpu.dot_dimension_numbers<[1], [0], [0], [1], [0, 0, 1, 1], [], []>} : vector<17x128xf32>, vector<128x256xf32>, vector<17x256xf32> -> vector<17x256xf32>
    %c0_69 = arith.constant 0 : index
    %c0_70 = arith.constant 0 : index
    %c0_71 = arith.constant 0 : index
    %146 = vector.load %arg15[%c0_69, %c0_70, %c0_71] : memref<2x1x256xf32, #tpu.memory_space<vmem>>, vector<1x1x256xf32>
    %147 = vector.shape_cast %146 : vector<1x1x256xf32> to vector<1x256xf32>
    %148 = vector.broadcast %147 : vector<1x256xf32> to vector<17x256xf32>
    %149 = arith.addf %145, %148 : vector<17x256xf32>
    %cst_72 = arith.constant 5.000000e-01 : f32
    %150 = vector.broadcast %cst_72 : f32 to vector<17x256xf32>
    %151 = arith.mulf %150, %149 : vector<17x256xf32>
    %152 = arith.mulf %149, %149 : vector<17x256xf32>
    %153 = arith.mulf %152, %149 : vector<17x256xf32>
    %cst_73 = arith.constant 4.471500e-02 : f32
    %154 = vector.broadcast %cst_73 : f32 to vector<17x256xf32>
    %155 = arith.mulf %154, %153 : vector<17x256xf32>
    %156 = arith.addf %149, %155 : vector<17x256xf32>
    %cst_74 = arith.constant 0.797884583 : f32
    %157 = vector.broadcast %cst_74 : f32 to vector<17x256xf32>
    %158 = arith.mulf %157, %156 : vector<17x256xf32>
    %159 = math.tanh %158 : vector<17x256xf32>
    %cst_75 = arith.constant 1.000000e+00 : f32
    %160 = vector.broadcast %cst_75 : f32 to vector<17x256xf32>
    %161 = arith.addf %160, %159 : vector<17x256xf32>
    %162 = arith.mulf %151, %161 : vector<17x256xf32>
    %c0_76 = arith.constant 0 : index
    %c0_77 = arith.constant 0 : index
    %c0_78 = arith.constant 0 : index
    %163 = vector.load %arg16[%c0_76, %c0_77, %c0_78] : memref<2x256x128xf32, #tpu.memory_space<vmem>>, vector<1x256x128xf32>
    %164 = vector.shape_cast %163 : vector<1x256x128xf32> to vector<256x128xf32>
    %cst_79 = arith.constant dense<0.000000e+00> : vector<17x128xf32>
    %165 = tpu.matmul %162, %164, %cst_79 {dimension_numbers = #tpu.dot_dimension_numbers<[1], [0], [0], [1], [0, 0, 1, 1], [], []>} : vector<17x256xf32>, vector<256x128xf32>, vector<17x128xf32> -> vector<17x128xf32>
    %166 = arith.addf %116, %165 : vector<17x128xf32>
    %c0_80 = arith.constant 0 : index
    %c0_81 = arith.constant 0 : index
    %c0_82 = arith.constant 0 : index
    %167 = vector.load %arg17[%c0_80, %c0_81, %c0_82] : memref<2x1x128xf32, #tpu.memory_space<vmem>>, vector<1x1x128xf32>
    %168 = vector.shape_cast %167 : vector<1x1x128xf32> to vector<1x128xf32>
    %169 = vector.broadcast %168 : vector<1x128xf32> to vector<17x128xf32>
    %170 = arith.addf %166, %169 : vector<17x128xf32>
    %c1 = arith.constant 1 : index
    %c0_83 = arith.constant 0 : index
    %c0_84 = arith.constant 0 : index
    %171 = vector.load %arg4[%c1, %c0_83, %c0_84] : memref<2x1x128xf32, #tpu.memory_space<vmem>>, vector<1x1x128xf32>
    %172 = vector.shape_cast %171 : vector<1x1x128xf32> to vector<1x128xf32>
    %c1_85 = arith.constant 1 : index
    %c0_86 = arith.constant 0 : index
    %c0_87 = arith.constant 0 : index
    %173 = vector.load %arg5[%c1_85, %c0_86, %c0_87] : memref<2x1x128xf32, #tpu.memory_space<vmem>>, vector<1x1x128xf32>
    %174 = vector.shape_cast %173 : vector<1x1x128xf32> to vector<1x128xf32>
    %cst_88 = arith.constant dense<0.000000e+00> : vector<17xf32>
    %175 = vector.multi_reduction <add>, %170, %cst_88 [1] : vector<17x128xf32> to vector<17xf32>
    %176 = vector.shape_cast %175 : vector<17xf32> to vector<17x1xf32>
    %177 = arith.mulf %170, %170 : vector<17x128xf32>
    %cst_89 = arith.constant dense<0.000000e+00> : vector<17xf32>
    %178 = vector.multi_reduction <add>, %177, %cst_89 [1] : vector<17x128xf32> to vector<17xf32>
    %179 = vector.shape_cast %178 : vector<17xf32> to vector<17x1xf32>
    %cst_90 = arith.constant 1.562500e-02 : f32
    %180 = vector.broadcast %cst_90 : f32 to vector<17x1xf32>
    %181 = arith.mulf %176, %180 : vector<17x1xf32>
    %cst_91 = arith.constant 1.562500e-02 : f32
    %182 = vector.broadcast %cst_91 : f32 to vector<17x1xf32>
    %183 = arith.mulf %179, %182 : vector<17x1xf32>
    %184 = arith.mulf %181, %181 : vector<17x1xf32>
    %185 = arith.subf %183, %184 : vector<17x1xf32>
    %186 = vector.broadcast %181 : vector<17x1xf32> to vector<17x128xf32>
    %187 = arith.subf %170, %186 : vector<17x128xf32>
    %cst_92 = arith.constant 9.99999974E-6 : f32
    %188 = vector.broadcast %cst_92 : f32 to vector<17x1xf32>
    %189 = arith.addf %185, %188 : vector<17x1xf32>
    %190 = math.rsqrt %189 : vector<17x1xf32>
    %191 = vector.broadcast %190 : vector<17x1xf32> to vector<17x128xf32>
    %192 = arith.mulf %187, %191 : vector<17x128xf32>
    %193 = vector.broadcast %172 : vector<1x128xf32> to vector<17x128xf32>
    %194 = arith.mulf %192, %193 : vector<17x128xf32>
    %195 = vector.broadcast %174 : vector<1x128xf32> to vector<17x128xf32>
    %196 = arith.addf %194, %195 : vector<17x128xf32>
    %c1_93 = arith.constant 1 : index
    %c0_94 = arith.constant 0 : index
    %c0_95 = arith.constant 0 : index
    %197 = vector.load %arg6[%c1_93, %c0_94, %c0_95] : memref<2x128x512xf32, #tpu.memory_space<vmem>>, vector<1x128x512xf32>
    %198 = vector.shape_cast %197 : vector<1x128x512xf32> to vector<128x512xf32>
    %cst_96 = arith.constant dense<0.000000e+00> : vector<17x512xf32>
    %199 = tpu.matmul %196, %198, %cst_96 {dimension_numbers = #tpu.dot_dimension_numbers<[1], [0], [0], [1], [0, 0, 1, 1], [], []>} : vector<17x128xf32>, vector<128x512xf32>, vector<17x512xf32> -> vector<17x512xf32>
    %c1_97 = arith.constant 1 : index
    %c0_98 = arith.constant 0 : index
    %c0_99 = arith.constant 0 : index
    %200 = vector.load %arg7[%c1_97, %c0_98, %c0_99] : memref<2x1x512xf32, #tpu.memory_space<vmem>>, vector<1x1x512xf32>
    %201 = vector.shape_cast %200 : vector<1x1x512xf32> to vector<1x512xf32>
    %202 = vector.broadcast %201 : vector<1x512xf32> to vector<17x512xf32>
    %203 = arith.addf %199, %202 : vector<17x512xf32>
    %c1_100 = arith.constant 1 : index
    %c0_101 = arith.constant 0 : index
    %c0_102 = arith.constant 0 : index
    %204 = vector.load %arg8[%c1_100, %c0_101, %c0_102] : memref<2x128x512xf32, #tpu.memory_space<vmem>>, vector<1x128x512xf32>
    %205 = vector.shape_cast %204 : vector<1x128x512xf32> to vector<128x512xf32>
    %cst_103 = arith.constant dense<0.000000e+00> : vector<17x512xf32>
    %206 = tpu.matmul %196, %205, %cst_103 {dimension_numbers = #tpu.dot_dimension_numbers<[1], [0], [0], [1], [0, 0, 1, 1], [], []>} : vector<17x128xf32>, vector<128x512xf32>, vector<17x512xf32> -> vector<17x512xf32>
    %c1_104 = arith.constant 1 : index
    %c0_105 = arith.constant 0 : index
    %c0_106 = arith.constant 0 : index
    %207 = vector.load %arg9[%c1_104, %c0_105, %c0_106] : memref<2x1x512xf32, #tpu.memory_space<vmem>>, vector<1x1x512xf32>
    %208 = vector.shape_cast %207 : vector<1x1x512xf32> to vector<1x512xf32>
    %209 = vector.broadcast %208 : vector<1x512xf32> to vector<17x512xf32>
    %210 = arith.addf %206, %209 : vector<17x512xf32>
    %c1_107 = arith.constant 1 : index
    %c0_108 = arith.constant 0 : index
    %c0_109 = arith.constant 0 : index
    %211 = vector.load %arg10[%c1_107, %c0_108, %c0_109] : memref<2x128x512xf32, #tpu.memory_space<vmem>>, vector<1x128x512xf32>
    %212 = vector.shape_cast %211 : vector<1x128x512xf32> to vector<128x512xf32>
    %cst_110 = arith.constant dense<0.000000e+00> : vector<17x512xf32>
    %213 = tpu.matmul %196, %212, %cst_110 {dimension_numbers = #tpu.dot_dimension_numbers<[1], [0], [0], [1], [0, 0, 1, 1], [], []>} : vector<17x128xf32>, vector<128x512xf32>, vector<17x512xf32> -> vector<17x512xf32>
    %214 = vector.extract_strided_slice %203 {offsets = [0, 0], sizes = [17, 128], strides = [1, 1]} : vector<17x512xf32> to vector<17x128xf32>
    %215 = vector.extract_strided_slice %210 {offsets = [0, 0], sizes = [17, 128], strides = [1, 1]} : vector<17x512xf32> to vector<17x128xf32>
    %cst_111 = arith.constant dense<0.000000e+00> : vector<17x17xf32>
    %216 = tpu.matmul %214, %215, %cst_111 {dimension_numbers = #tpu.dot_dimension_numbers<[1], [1], [0], [0], [0, 0, 1, 0], [], []>} : vector<17x128xf32>, vector<17x128xf32>, vector<17x17xf32> -> vector<17x17xf32>
    %cst_112 = arith.constant dense<0xFF800000> : vector<17xf32>
    %217 = vector.multi_reduction <maximumf>, %216, %cst_112 [1] : vector<17x17xf32> to vector<17xf32>
    %218 = vector.shape_cast %217 : vector<17xf32> to vector<17x1xf32>
    %219 = vector.broadcast %218 : vector<17x1xf32> to vector<17x17xf32>
    %220 = arith.subf %216, %219 : vector<17x17xf32>
    %221 = math.exp %220 : vector<17x17xf32>
    %cst_113 = arith.constant dense<0.000000e+00> : vector<17xf32>
    %222 = vector.multi_reduction <add>, %221, %cst_113 [1] : vector<17x17xf32> to vector<17xf32>
    %223 = vector.shape_cast %222 : vector<17xf32> to vector<17x1xf32>
    %224 = tpu.reciprocal %223 {approx = true} : vector<17x1xf32> -> vector<17x1xf32>
    %225 = vector.broadcast %224 : vector<17x1xf32> to vector<17x17xf32>
    %226 = arith.mulf %221, %225 : vector<17x17xf32>
    %227 = vector.extract_strided_slice %213 {offsets = [0, 0], sizes = [17, 128], strides = [1, 1]} : vector<17x512xf32> to vector<17x128xf32>
    %cst_114 = arith.constant dense<0.000000e+00> : vector<17x128xf32>
    %228 = tpu.matmul %226, %227, %cst_114 {dimension_numbers = #tpu.dot_dimension_numbers<[1], [0], [0], [1], [0, 0, 1, 1], [], []>} : vector<17x17xf32>, vector<17x128xf32>, vector<17x128xf32> -> vector<17x128xf32>
    %229 = vector.extract_strided_slice %203 {offsets = [0, 128], sizes = [17, 128], strides = [1, 1]} : vector<17x512xf32> to vector<17x128xf32>
    %230 = vector.extract_strided_slice %210 {offsets = [0, 128], sizes = [17, 128], strides = [1, 1]} : vector<17x512xf32> to vector<17x128xf32>
    %cst_115 = arith.constant dense<0.000000e+00> : vector<17x17xf32>
    %231 = tpu.matmul %229, %230, %cst_115 {dimension_numbers = #tpu.dot_dimension_numbers<[1], [1], [0], [0], [0, 0, 1, 0], [], []>} : vector<17x128xf32>, vector<17x128xf32>, vector<17x17xf32> -> vector<17x17xf32>
    %cst_116 = arith.constant dense<0xFF800000> : vector<17xf32>
    %232 = vector.multi_reduction <maximumf>, %231, %cst_116 [1] : vector<17x17xf32> to vector<17xf32>
    %233 = vector.shape_cast %232 : vector<17xf32> to vector<17x1xf32>
    %234 = vector.broadcast %233 : vector<17x1xf32> to vector<17x17xf32>
    %235 = arith.subf %231, %234 : vector<17x17xf32>
    %236 = math.exp %235 : vector<17x17xf32>
    %cst_117 = arith.constant dense<0.000000e+00> : vector<17xf32>
    %237 = vector.multi_reduction <add>, %236, %cst_117 [1] : vector<17x17xf32> to vector<17xf32>
    %238 = vector.shape_cast %237 : vector<17xf32> to vector<17x1xf32>
    %239 = tpu.reciprocal %238 {approx = true} : vector<17x1xf32> -> vector<17x1xf32>
    %240 = vector.broadcast %239 : vector<17x1xf32> to vector<17x17xf32>
    %241 = arith.mulf %236, %240 : vector<17x17xf32>
    %242 = vector.extract_strided_slice %213 {offsets = [0, 128], sizes = [17, 128], strides = [1, 1]} : vector<17x512xf32> to vector<17x128xf32>
    %cst_118 = arith.constant dense<0.000000e+00> : vector<17x128xf32>
    %243 = tpu.matmul %241, %242, %cst_118 {dimension_numbers = #tpu.dot_dimension_numbers<[1], [0], [0], [1], [0, 0, 1, 1], [], []>} : vector<17x17xf32>, vector<17x128xf32>, vector<17x128xf32> -> vector<17x128xf32>
    %244 = arith.addf %228, %243 : vector<17x128xf32>
    %245 = vector.extract_strided_slice %203 {offsets = [0, 256], sizes = [17, 128], strides = [1, 1]} : vector<17x512xf32> to vector<17x128xf32>
    %246 = vector.extract_strided_slice %210 {offsets = [0, 256], sizes = [17, 128], strides = [1, 1]} : vector<17x512xf32> to vector<17x128xf32>
    %cst_119 = arith.constant dense<0.000000e+00> : vector<17x17xf32>
    %247 = tpu.matmul %245, %246, %cst_119 {dimension_numbers = #tpu.dot_dimension_numbers<[1], [1], [0], [0], [0, 0, 1, 0], [], []>} : vector<17x128xf32>, vector<17x128xf32>, vector<17x17xf32> -> vector<17x17xf32>
    %cst_120 = arith.constant dense<0xFF800000> : vector<17xf32>
    %248 = vector.multi_reduction <maximumf>, %247, %cst_120 [1] : vector<17x17xf32> to vector<17xf32>
    %249 = vector.shape_cast %248 : vector<17xf32> to vector<17x1xf32>
    %250 = vector.broadcast %249 : vector<17x1xf32> to vector<17x17xf32>
    %251 = arith.subf %247, %250 : vector<17x17xf32>
    %252 = math.exp %251 : vector<17x17xf32>
    %cst_121 = arith.constant dense<0.000000e+00> : vector<17xf32>
    %253 = vector.multi_reduction <add>, %252, %cst_121 [1] : vector<17x17xf32> to vector<17xf32>
    %254 = vector.shape_cast %253 : vector<17xf32> to vector<17x1xf32>
    %255 = tpu.reciprocal %254 {approx = true} : vector<17x1xf32> -> vector<17x1xf32>
    %256 = vector.broadcast %255 : vector<17x1xf32> to vector<17x17xf32>
    %257 = arith.mulf %252, %256 : vector<17x17xf32>
    %258 = vector.extract_strided_slice %213 {offsets = [0, 256], sizes = [17, 128], strides = [1, 1]} : vector<17x512xf32> to vector<17x128xf32>
    %cst_122 = arith.constant dense<0.000000e+00> : vector<17x128xf32>
    %259 = tpu.matmul %257, %258, %cst_122 {dimension_numbers = #tpu.dot_dimension_numbers<[1], [0], [0], [1], [0, 0, 1, 1], [], []>} : vector<17x17xf32>, vector<17x128xf32>, vector<17x128xf32> -> vector<17x128xf32>
    %260 = arith.addf %244, %259 : vector<17x128xf32>
    %261 = vector.extract_strided_slice %203 {offsets = [0, 384], sizes = [17, 128], strides = [1, 1]} : vector<17x512xf32> to vector<17x128xf32>
    %262 = vector.extract_strided_slice %210 {offsets = [0, 384], sizes = [17, 128], strides = [1, 1]} : vector<17x512xf32> to vector<17x128xf32>
    %cst_123 = arith.constant dense<0.000000e+00> : vector<17x17xf32>
    %263 = tpu.matmul %261, %262, %cst_123 {dimension_numbers = #tpu.dot_dimension_numbers<[1], [1], [0], [0], [0, 0, 1, 0], [], []>} : vector<17x128xf32>, vector<17x128xf32>, vector<17x17xf32> -> vector<17x17xf32>
    %cst_124 = arith.constant dense<0xFF800000> : vector<17xf32>
    %264 = vector.multi_reduction <maximumf>, %263, %cst_124 [1] : vector<17x17xf32> to vector<17xf32>
    %265 = vector.shape_cast %264 : vector<17xf32> to vector<17x1xf32>
    %266 = vector.broadcast %265 : vector<17x1xf32> to vector<17x17xf32>
    %267 = arith.subf %263, %266 : vector<17x17xf32>
    %268 = math.exp %267 : vector<17x17xf32>
    %cst_125 = arith.constant dense<0.000000e+00> : vector<17xf32>
    %269 = vector.multi_reduction <add>, %268, %cst_125 [1] : vector<17x17xf32> to vector<17xf32>
    %270 = vector.shape_cast %269 : vector<17xf32> to vector<17x1xf32>
    %271 = tpu.reciprocal %270 {approx = true} : vector<17x1xf32> -> vector<17x1xf32>
    %272 = vector.broadcast %271 : vector<17x1xf32> to vector<17x17xf32>
    %273 = arith.mulf %268, %272 : vector<17x17xf32>
    %274 = vector.extract_strided_slice %213 {offsets = [0, 384], sizes = [17, 128], strides = [1, 1]} : vector<17x512xf32> to vector<17x128xf32>
    %cst_126 = arith.constant dense<0.000000e+00> : vector<17x128xf32>
    %275 = tpu.matmul %273, %274, %cst_126 {dimension_numbers = #tpu.dot_dimension_numbers<[1], [0], [0], [1], [0, 0, 1, 1], [], []>} : vector<17x17xf32>, vector<17x128xf32>, vector<17x128xf32> -> vector<17x128xf32>
    %276 = arith.addf %260, %275 : vector<17x128xf32>
    %277 = arith.addf %196, %276 : vector<17x128xf32>
    %c1_127 = arith.constant 1 : index
    %c0_128 = arith.constant 0 : index
    %c0_129 = arith.constant 0 : index
    %278 = vector.load %arg11[%c1_127, %c0_128, %c0_129] : memref<2x1x128xf32, #tpu.memory_space<vmem>>, vector<1x1x128xf32>
    %279 = vector.shape_cast %278 : vector<1x1x128xf32> to vector<1x128xf32>
    %280 = vector.broadcast %279 : vector<1x128xf32> to vector<17x128xf32>
    %281 = arith.addf %277, %280 : vector<17x128xf32>
    %c1_130 = arith.constant 1 : index
    %c0_131 = arith.constant 0 : index
    %c0_132 = arith.constant 0 : index
    %282 = vector.load %arg12[%c1_130, %c0_131, %c0_132] : memref<2x1x128xf32, #tpu.memory_space<vmem>>, vector<1x1x128xf32>
    %283 = vector.shape_cast %282 : vector<1x1x128xf32> to vector<1x128xf32>
    %c1_133 = arith.constant 1 : index
    %c0_134 = arith.constant 0 : index
    %c0_135 = arith.constant 0 : index
    %284 = vector.load %arg13[%c1_133, %c0_134, %c0_135] : memref<2x1x128xf32, #tpu.memory_space<vmem>>, vector<1x1x128xf32>
    %285 = vector.shape_cast %284 : vector<1x1x128xf32> to vector<1x128xf32>
    %cst_136 = arith.constant dense<0.000000e+00> : vector<17xf32>
    %286 = vector.multi_reduction <add>, %281, %cst_136 [1] : vector<17x128xf32> to vector<17xf32>
    %287 = vector.shape_cast %286 : vector<17xf32> to vector<17x1xf32>
    %288 = arith.mulf %281, %281 : vector<17x128xf32>
    %cst_137 = arith.constant dense<0.000000e+00> : vector<17xf32>
    %289 = vector.multi_reduction <add>, %288, %cst_137 [1] : vector<17x128xf32> to vector<17xf32>
    %290 = vector.shape_cast %289 : vector<17xf32> to vector<17x1xf32>
    %cst_138 = arith.constant 1.562500e-02 : f32
    %291 = vector.broadcast %cst_138 : f32 to vector<17x1xf32>
    %292 = arith.mulf %287, %291 : vector<17x1xf32>
    %cst_139 = arith.constant 1.562500e-02 : f32
    %293 = vector.broadcast %cst_139 : f32 to vector<17x1xf32>
    %294 = arith.mulf %290, %293 : vector<17x1xf32>
    %295 = arith.mulf %292, %292 : vector<17x1xf32>
    %296 = arith.subf %294, %295 : vector<17x1xf32>
    %297 = vector.broadcast %292 : vector<17x1xf32> to vector<17x128xf32>
    %298 = arith.subf %281, %297 : vector<17x128xf32>
    %cst_140 = arith.constant 9.99999974E-6 : f32
    %299 = vector.broadcast %cst_140 : f32 to vector<17x1xf32>
    %300 = arith.addf %296, %299 : vector<17x1xf32>
    %301 = math.rsqrt %300 : vector<17x1xf32>
    %302 = vector.broadcast %301 : vector<17x1xf32> to vector<17x128xf32>
    %303 = arith.mulf %298, %302 : vector<17x128xf32>
    %304 = vector.broadcast %283 : vector<1x128xf32> to vector<17x128xf32>
    %305 = arith.mulf %303, %304 : vector<17x128xf32>
    %306 = vector.broadcast %285 : vector<1x128xf32> to vector<17x128xf32>
    %307 = arith.addf %305, %306 : vector<17x128xf32>
    %c1_141 = arith.constant 1 : index
    %c0_142 = arith.constant 0 : index
    %c0_143 = arith.constant 0 : index
    %308 = vector.load %arg14[%c1_141, %c0_142, %c0_143] : memref<2x128x256xf32, #tpu.memory_space<vmem>>, vector<1x128x256xf32>
    %309 = vector.shape_cast %308 : vector<1x128x256xf32> to vector<128x256xf32>
    %cst_144 = arith.constant dense<0.000000e+00> : vector<17x256xf32>
    %310 = tpu.matmul %307, %309, %cst_144 {dimension_numbers = #tpu.dot_dimension_numbers<[1], [0], [0], [1], [0, 0, 1, 1], [], []>} : vector<17x128xf32>, vector<128x256xf32>, vector<17x256xf32> -> vector<17x256xf32>
    %c1_145 = arith.constant 1 : index
    %c0_146 = arith.constant 0 : index
    %c0_147 = arith.constant 0 : index
    %311 = vector.load %arg15[%c1_145, %c0_146, %c0_147] : memref<2x1x256xf32, #tpu.memory_space<vmem>>, vector<1x1x256xf32>
    %312 = vector.shape_cast %311 : vector<1x1x256xf32> to vector<1x256xf32>
    %313 = vector.broadcast %312 : vector<1x256xf32> to vector<17x256xf32>
    %314 = arith.addf %310, %313 : vector<17x256xf32>
    %cst_148 = arith.constant 5.000000e-01 : f32
    %315 = vector.broadcast %cst_148 : f32 to vector<17x256xf32>
    %316 = arith.mulf %315, %314 : vector<17x256xf32>
    %317 = arith.mulf %314, %314 : vector<17x256xf32>
    %318 = arith.mulf %317, %314 : vector<17x256xf32>
    %cst_149 = arith.constant 4.471500e-02 : f32
    %319 = vector.broadcast %cst_149 : f32 to vector<17x256xf32>
    %320 = arith.mulf %319, %318 : vector<17x256xf32>
    %321 = arith.addf %314, %320 : vector<17x256xf32>
    %cst_150 = arith.constant 0.797884583 : f32
    %322 = vector.broadcast %cst_150 : f32 to vector<17x256xf32>
    %323 = arith.mulf %322, %321 : vector<17x256xf32>
    %324 = math.tanh %323 : vector<17x256xf32>
    %cst_151 = arith.constant 1.000000e+00 : f32
    %325 = vector.broadcast %cst_151 : f32 to vector<17x256xf32>
    %326 = arith.addf %325, %324 : vector<17x256xf32>
    %327 = arith.mulf %316, %326 : vector<17x256xf32>
    %c1_152 = arith.constant 1 : index
    %c0_153 = arith.constant 0 : index
    %c0_154 = arith.constant 0 : index
    %328 = vector.load %arg16[%c1_152, %c0_153, %c0_154] : memref<2x256x128xf32, #tpu.memory_space<vmem>>, vector<1x256x128xf32>
    %329 = vector.shape_cast %328 : vector<1x256x128xf32> to vector<256x128xf32>
    %cst_155 = arith.constant dense<0.000000e+00> : vector<17x128xf32>
    %330 = tpu.matmul %327, %329, %cst_155 {dimension_numbers = #tpu.dot_dimension_numbers<[1], [0], [0], [1], [0, 0, 1, 1], [], []>} : vector<17x256xf32>, vector<256x128xf32>, vector<17x128xf32> -> vector<17x128xf32>
    %331 = arith.addf %281, %330 : vector<17x128xf32>
    %c1_156 = arith.constant 1 : index
    %c0_157 = arith.constant 0 : index
    %c0_158 = arith.constant 0 : index
    %332 = vector.load %arg17[%c1_156, %c0_157, %c0_158] : memref<2x1x128xf32, #tpu.memory_space<vmem>>, vector<1x1x128xf32>
    %333 = vector.shape_cast %332 : vector<1x1x128xf32> to vector<1x128xf32>
    %334 = vector.broadcast %333 : vector<1x128xf32> to vector<17x128xf32>
    %335 = arith.addf %331, %334 : vector<17x128xf32>
    %336 = vector.extract_strided_slice %335 {offsets = [0, 0], sizes = [1, 128], strides = [1, 1]} : vector<17x128xf32> to vector<1x128xf32>
    %c0_159 = arith.constant 0 : index
    %c0_160 = arith.constant 0 : index
    %337 = vector.load %arg18[%c0_159, %c0_160] : memref<1x128xf32, #tpu.memory_space<vmem>>, vector<1x128xf32>
    %c0_161 = arith.constant 0 : index
    %c0_162 = arith.constant 0 : index
    %338 = vector.load %arg19[%c0_161, %c0_162] : memref<1x128xf32, #tpu.memory_space<vmem>>, vector<1x128xf32>
    %cst_163 = arith.constant dense<0.000000e+00> : vector<1xf32>
    %339 = vector.multi_reduction <add>, %336, %cst_163 [1] : vector<1x128xf32> to vector<1xf32>
    %340 = vector.shape_cast %339 : vector<1xf32> to vector<1x1xf32>
    %341 = arith.mulf %336, %336 : vector<1x128xf32>
    %cst_164 = arith.constant dense<0.000000e+00> : vector<1xf32>
    %342 = vector.multi_reduction <add>, %341, %cst_164 [1] : vector<1x128xf32> to vector<1xf32>
    %343 = vector.shape_cast %342 : vector<1xf32> to vector<1x1xf32>
    %cst_165 = arith.constant 1.562500e-02 : f32
    %344 = vector.broadcast %cst_165 : f32 to vector<1x1xf32>
    %345 = arith.mulf %340, %344 : vector<1x1xf32>
    %cst_166 = arith.constant 1.562500e-02 : f32
    %346 = vector.broadcast %cst_166 : f32 to vector<1x1xf32>
    %347 = arith.mulf %343, %346 : vector<1x1xf32>
    %348 = arith.mulf %345, %345 : vector<1x1xf32>
    %349 = arith.subf %347, %348 : vector<1x1xf32>
    %350 = vector.broadcast %345 : vector<1x1xf32> to vector<1x128xf32>
    %351 = arith.subf %336, %350 : vector<1x128xf32>
    %cst_167 = arith.constant 9.99999974E-6 : f32
    %352 = vector.broadcast %cst_167 : f32 to vector<1x1xf32>
    %353 = arith.addf %349, %352 : vector<1x1xf32>
    %354 = math.rsqrt %353 : vector<1x1xf32>
    %355 = vector.broadcast %354 : vector<1x1xf32> to vector<1x128xf32>
    %356 = arith.mulf %351, %355 : vector<1x128xf32>
    %357 = arith.mulf %356, %337 : vector<1x128xf32>
    %358 = arith.addf %357, %338 : vector<1x128xf32>
    %c0_168 = arith.constant 0 : index
    %c0_169 = arith.constant 0 : index
    %359 = vector.load %arg20[%c0_168, %c0_169] : memref<128x128xf32, #tpu.memory_space<vmem>>, vector<128x128xf32>
    %cst_170 = arith.constant dense<0.000000e+00> : vector<1x128xf32>
    %360 = tpu.matmul %358, %359, %cst_170 {dimension_numbers = #tpu.dot_dimension_numbers<[1], [0], [0], [1], [0, 0, 1, 1], [], []>} : vector<1x128xf32>, vector<128x128xf32>, vector<1x128xf32> -> vector<1x128xf32>
    %c0_171 = arith.constant 0 : index
    %c0_172 = arith.constant 0 : index
    %361 = vector.load %arg21[%c0_171, %c0_172] : memref<1x128xf32, #tpu.memory_space<vmem>>, vector<1x128xf32>
    %362 = arith.addf %360, %361 : vector<1x128xf32>
    %c0_173 = arith.constant 0 : index
    %c0_174 = arith.constant 0 : index
    %c0_175 = arith.constant 0 : index
    %363 = vector.load %arg22[%c0_173, %c0_174, %c0_175] : memref<1x1x128xf32, #tpu.memory_space<vmem>>, vector<1x1x128xf32>
    %364 = vector.shape_cast %363 : vector<1x1x128xf32> to vector<1x128xf32>
    %365 = vector.shape_cast %362 : vector<1x128xf32> to vector<1x1x128xf32>
    tpu.vector_store %arg22[%c0_173, %c0_174, %c0_175], %365 {strides = array<i32>} : memref<1x1x128xf32, #tpu.memory_space<vmem>>, vector<1x1x128xf32>,
    return
  }
  func.func @transform_0(%arg0: i32) -> (i32, i32, i32) {
    %c0_i32 = arith.constant 0 : i32
    %c0_i32_0 = arith.constant 0 : i32
    %c0_i32_1 = arith.constant 0 : i32
    return %arg0, %c0_i32, %c0_i32_0 : i32, i32, i32
  }
  func.func @transform_1(%arg0: i32) -> (i32, i32) {
    %c0_i32 = arith.constant 0 : i32
    %c0_i32_0 = arith.constant 0 : i32
    %c0_i32_1 = arith.constant 0 : i32
    return %c0_i32, %c0_i32_0 : i32, i32
  }
  func.func @transform_2(%arg0: i32) -> (i32, i32) {
    %c0_i32 = arith.constant 0 : i32
    %c0_i32_0 = arith.constant 0 : i32
    %c0_i32_1 = arith.constant 0 : i32
    return %c0_i32, %c0_i32_0 : i32, i32
  }
  func.func @transform_3(%arg0: i32) -> (i32, i32, i32) {
    %c0_i32 = arith.constant 0 : i32
    %c0_i32_0 = arith.constant 0 : i32
    %c0_i32_1 = arith.constant 0 : i32
    %c0_i32_2 = arith.constant 0 : i32
    return %c0_i32, %c0_i32_0, %c0_i32_1 : i32, i32, i32
  }
  func.func @transform_4(%arg0: i32) -> (i32, i32, i32) {
    %c0_i32 = arith.constant 0 : i32
    %c0_i32_0 = arith.constant 0 : i32
    %c0_i32_1 = arith.constant 0 : i32
    %c0_i32_2 = arith.constant 0 : i32
    return %c0_i32, %c0_i32_0, %c0_i32_1 : i32, i32, i32
  }
  func.func @transform_5(%arg0: i32) -> (i32, i32, i32) {
    %c0_i32 = arith.constant 0 : i32
    %c0_i32_0 = arith.constant 0 : i32
    %c0_i32_1 = arith.constant 0 : i32
    %c0_i32_2 = arith.constant 0 : i32
    return %c0_i32, %c0_i32_0, %c0_i32_1 : i32, i32, i32
  }
  func.func @transform_6(%arg0: i32) -> (i32, i32, i32) {
    %c0_i32 = arith.constant 0 : i32
    %c0_i32_0 = arith.constant 0 : i32
    %c0_i32_1 = arith.constant 0 : i32
    %c0_i32_2 = arith.constant 0 : i32
    return %c0_i32, %c0_i32_0, %c0_i32_1 : i32, i32, i32
  }
  func.func @transform_7(%arg0: i32) -> (i32, i32, i32) {
    %c0_i32 = arith.constant 0 : i32
    %c0_i32_0 = arith.constant 0 : i32
    %c0_i32_1 = arith.constant 0 : i32
    %c0_i32_2 = arith.constant 0 : i32
    return %c0_i32, %c0_i32_0, %c0_i32_1 : i32, i32, i32
  }
  func.func @transform_8(%arg0: i32) -> (i32, i32, i32) {
    %c0_i32 = arith.constant 0 : i32
    %c0_i32_0 = arith.constant 0 : i32
    %c0_i32_1 = arith.constant 0 : i32
    %c0_i32_2 = arith.constant 0 : i32
    return %c0_i32, %c0_i32_0, %c0_i32_1 : i32, i32, i32
  }
  func.func @transform_9(%arg0: i32) -> (i32, i32, i32) {
    %c0_i32 = arith.constant 0 : i32
    %c0_i32_0 = arith.constant 0 : i32
    %c0_i32_1 = arith.constant 0 : i32
    %c0_i32_2 = arith.constant 0 : i32
    return %c0_i32, %c0_i32_0, %c0_i32_1 : i32, i32, i32
  }
  func.func @transform_10(%arg0: i32) -> (i32, i32, i32) {
    %c0_i32 = arith.constant 0 : i32
    %c0_i32_0 = arith.constant 0 : i32
    %c0_i32_1 = arith.constant 0 : i32
    %c0_i32_2 = arith.constant 0 : i32
    return %c0_i32, %c0_i32_0, %c0_i32_1 : i32, i32, i32
  }
  func.func @transform_11(%arg0: i32) -> (i32, i32, i32) {
    %c0_i32 = arith.constant 0 : i32
    %c0_i32_0 = arith.constant 0 : i32
    %c0_i32_1 = arith.constant 0 : i32
    %c0_i32_2 = arith.constant 0 : i32
    return %c0_i32, %c0_i32_0, %c0_i32_1 : i32, i32, i32
  }
  func.func @transform_12(%arg0: i32) -> (i32, i32, i32) {
    %c0_i32 = arith.constant 0 : i32
    %c0_i32_0 = arith.constant 0 : i32
    %c0_i32_1 = arith.constant 0 : i32
    %c0_i32_2 = arith.constant 0 : i32
    return %c0_i32, %c0_i32_0, %c0_i32_1 : i32, i32, i32
  }
  func.func @transform_13(%arg0: i32) -> (i32, i32, i32) {
    %c0_i32 = arith.constant 0 : i32
    %c0_i32_0 = arith.constant 0 : i32
    %c0_i32_1 = arith.constant 0 : i32
    %c0_i32_2 = arith.constant 0 : i32
    return %c0_i32, %c0_i32_0, %c0_i32_1 : i32, i32, i32
  }
  func.func @transform_14(%arg0: i32) -> (i32, i32, i32) {
    %c0_i32 = arith.constant 0 : i32
    %c0_i32_0 = arith.constant 0 : i32
    %c0_i32_1 = arith.constant 0 : i32
    %c0_i32_2 = arith.constant 0 : i32
    return %c0_i32, %c0_i32_0, %c0_i32_1 : i32, i32, i32
  }
  func.func @transform_15(%arg0: i32) -> (i32, i32, i32) {
    %c0_i32 = arith.constant 0 : i32
    %c0_i32_0 = arith.constant 0 : i32
    %c0_i32_1 = arith.constant 0 : i32
    %c0_i32_2 = arith.constant 0 : i32
    return %c0_i32, %c0_i32_0, %c0_i32_1 : i32, i32, i32
  }
  func.func @transform_16(%arg0: i32) -> (i32, i32, i32) {
    %c0_i32 = arith.constant 0 : i32
    %c0_i32_0 = arith.constant 0 : i32
    %c0_i32_1 = arith.constant 0 : i32
    %c0_i32_2 = arith.constant 0 : i32
    return %c0_i32, %c0_i32_0, %c0_i32_1 : i32, i32, i32
  }
  func.func @transform_17(%arg0: i32) -> (i32, i32) {
    %c0_i32 = arith.constant 0 : i32
    %c0_i32_0 = arith.constant 0 : i32
    %c0_i32_1 = arith.constant 0 : i32
    return %c0_i32, %c0_i32_0 : i32, i32
  }
  func.func @transform_18(%arg0: i32) -> (i32, i32) {
    %c0_i32 = arith.constant 0 : i32
    %c0_i32_0 = arith.constant 0 : i32
    %c0_i32_1 = arith.constant 0 : i32
    return %c0_i32, %c0_i32_0 : i32, i32
  }
  func.func @transform_19(%arg0: i32) -> (i32, i32) {
    %c0_i32 = arith.constant 0 : i32
    %c0_i32_0 = arith.constant 0 : i32
    %c0_i32_1 = arith.constant 0 : i32
    return %c0_i32, %c0_i32_0 : i32, i32
  }
  func.func @transform_20(%arg0: i32) -> (i32, i32) {
    %c0_i32 = arith.constant 0 : i32
    %c0_i32_0 = arith.constant 0 : i32
    %c0_i32_1 = arith.constant 0 : i32
    return %c0_i32, %c0_i32_0 : i32, i32
  }
  func.func @transform_21(%arg0: i32) -> (i32, i32, i32) {
    %c0_i32 = arith.constant 0 : i32
    %c0_i32_0 = arith.constant 0 : i32
    %c0_i32_1 = arith.constant 0 : i32
    return %arg0, %c0_i32, %c0_i32_0 : i32, i32, i32
  }
}

</mosaic_0001>

<llo_original>
// kernel: vit_pallas.1
$region0: #{vit_pallas.1}
  #allocation0 [shape = 'u32[]', space=smem, size = 0x4, offset = 0x4, fixed_abs, tag = 'smem constant byte address 0x4 - core index']
  #allocation1 [shape = 'u32[144,128]{1,0:T(1,128)}', space=vmem, size = 0x12000, scoped, tag = 'internal scratch']
  %s0 = inlined_call_operand.vmem [shape: f32[2,17,192], index: 0, kind: input, shape index: {}]
  %s1 = inlined_call_operand.hbm [shape: f32[192,128], index: 1, kind: input, shape index: {}]
  %s2 = inlined_call_operand.vmem [shape: f32[17,128], index: 2, kind: input, shape index: {}]
  %s3 = inlined_call_operand.vmem [shape: f32[2,1,128], index: 3, kind: input, shape index: {}]
  %s4 = inlined_call_operand.vmem [shape: f32[2,1,128], index: 4, kind: input, shape index: {}]
  %s5 = inlined_call_operand.hbm [shape: f32[2,128,512], index: 5, kind: input, shape index: {}]
  %s6 = inlined_call_operand.vmem [shape: f32[2,1,512], index: 6, kind: input, shape index: {}]
  %s7 = inlined_call_operand.hbm [shape: f32[2,128,512], index: 7, kind: input, shape index: {}]
  %s8 = inlined_call_operand.vmem [shape: f32[2,1,512], index: 8, kind: input, shape index: {}]
  %s9 = inlined_call_operand.hbm [shape: f32[2,128,512], index: 9, kind: input, shape index: {}]
  %s10 = inlined_call_operand.vmem [shape: f32[2,1,128], index: 10, kind: input, shape index: {}]
  %s11 = inlined_call_operand.vmem [shape: f32[2,1,128], index: 11, kind: input, shape index: {}]
  %s12 = inlined_call_operand.vmem [shape: f32[2,1,128], index: 12, kind: input, shape index: {}]
  %s13 = inlined_call_operand.hbm [shape: f32[2,128,256], index: 13, kind: input, shape index: {}]
  %s14 = inlined_call_operand.vmem [shape: f32[2,1,256], index: 14, kind: input, shape index: {}]
  %s15 = inlined_call_operand.hbm [shape: f32[2,256,128], index: 15, kind: input, shape index: {}]
  %s16 = inlined_call_operand.vmem [shape: f32[2,1,128], index: 16, kind: input, shape index: {}]
  %s17 = inlined_call_operand.vmem [shape: f32[1,128], index: 17, kind: input, shape index: {}]
  %s18 = inlined_call_operand.vmem [shape: f32[1,128], index: 18, kind: input, shape index: {}]
  %s19 = inlined_call_operand.vmem [shape: f32[128,128], index: 19, kind: input, shape index: {}]
  %s20 = inlined_call_operand.vmem [shape: f32[1,128], index: 20, kind: input, shape index: {}]
  %s21 = inlined_call_operand.hbm [shape: f32[2,1,128], index: 21, kind: output, shape index: {}]
  %s22 = sld [smem:[#allocation0]]
  $region141: #{vit_pallas.1} parent=0
    _
  %s24 = ssub.s32 1, %s22
  %s25 = scalar_select 0, %s24, %s22
  $region1: #{vit_pallas.1} parent=0
    #allocation2 [shape = 'u8[98304]{0}', space=vmem, size = 0x18000, scoped, tag = 'input window, operand 1, single buffered']
    #allocation3 [shape = 's32[2]{0}', space=sflag, size = 0x8, scoped, tag = 'scoped memory for vit_pallas.1']
    #allocation4 [shape = 's32[2]{0}', space=sflag, size = 0x8, scoped, tag = 'scoped memory for vit_pallas.1']
    #allocation5 [shape = 'u8[524288]{0}', space=vmem, size = 0x80000, scoped, tag = 'input window, operand 5, single buffered']
    #allocation6 [shape = 's32[1]{0}', space=sflag, size = 0x4, scoped, tag = 'scoped memory for vit_pallas.1']
    #allocation7 [shape = 'u8[524288]{0}', space=vmem, size = 0x80000, scoped, tag = 'input window, operand 7, single buffered']
    #allocation8 [shape = 'u8[524288]{0}', space=vmem, size = 0x80000, scoped, tag = 'input window, operand 9, single buffered']
    #allocation9 [shape = 's32[1]{0}', space=sflag, size = 0x4, scoped, tag = 'scoped memory for vit_pallas.1']
    #allocation10 [shape = 'u8[262144]{0}', space=vmem, size = 0x40000, scoped, tag = 'input window, operand 13, single buffered']
    #allocation11 [shape = 'u8[262144]{0}', space=vmem, size = 0x40000, scoped, tag = 'input window, operand 15, single buffered']
    #allocation12 [shape = 's32[1]{0}', space=sflag, size = 0x4, scoped, tag = 'scoped memory for vit_pallas.1']
    #allocation13 [shape = 'u8[1024]{0}', space=vmem, size = 0x400, scoped, tag = 'output window, operand 0']
    %26 = vsyncpa [#allocation3], 0
    %27 = vsyncpa [#allocation6], 0
    %28 = vsyncpa [#allocation9], 0
    %29 = vsyncpa [#allocation12], 0
    %30 = vsyncpa [#allocation4], 0
    %s31 = scalar_lea.sflag [#allocation4], 1
    %32 = vsyncpa %s31, 0
    loop: start=0, step=1, limit=4
    $region2: #{vit_pallas.1} parent=1 // loop_pre_header
      _
    $region3: #{vit_pallas.1} parent=1 // loop_header
      %s34 = sphi 0, %s38
      %p35 = scmp.ge.s32.totalorder %s34, 4
      %s44 = sphi 0, %s46
      %s47 = sphi 0, %s44
      %s48 = sphi 0, %s47
      %s64 = sphi 0, %s48
      %s68 = sphi 0, %s68
      %s70 = sphi 0, %s68
      %s71 = sphi 0, %s70
      %s85 = sphi 0, %s71
      %s89 = sphi 0, %s89
      %s91 = sphi 0, %s89
      %s92 = sphi 0, %s91
      %s106 = sphi 0, %s92
      %s110 = sphi 0, %s110
      %s112 = sphi 0, %s110
      %s113 = sphi 0, %s112
      %s127 = sphi 0, %s113
      %s131 = sphi 0, %s131
      %s133 = sphi 0, %s131
      %s134 = sphi 0, %s133
      %s148 = sphi 0, %s134
      %s152 = sphi 0, %s152
      %s154 = sphi 0, %s152
      %s155 = sphi 0, %s154
      %s169 = sphi 0, %s155
      %s173 = sphi 0, %s173
      %s175 = sphi 0, %s173
      %s176 = sphi 0, %s175
      %s190 = sphi 0, %s176
      %s194 = sphi 0, %s194
      %s196 = sphi 0, %s194
      %s197 = sphi 0, %s196
      %s211 = sphi 0, %s197
      %s215 = sphi 0, %s215
      %s217 = sphi 0, %s215
      %s218 = sphi 0, %s217
      %s232 = sphi 0, %s218
      %s236 = sphi 0, %s236
      %s238 = sphi 0, %s236
      %s239 = sphi 0, %s238
      %s253 = sphi 0, %s239
      %s257 = sphi 0, %s257
      %s259 = sphi 0, %s257
      %s260 = sphi 0, %s259
      %s274 = sphi 0, %s260
      %s278 = sphi 0, %s278
      %s280 = sphi 0, %s278
      %s281 = sphi 0, %s280
      %s295 = sphi 0, %s281
      %s299 = sphi 0, %s299
      %s301 = sphi 0, %s299
      %s302 = sphi 0, %s301
      %s316 = sphi 0, %s302
      %s320 = sphi 0, %s320
      %s322 = sphi 0, %s320
      %s323 = sphi 0, %s322
      %s337 = sphi 0, %s323
      %s341 = sphi 0, %s341
      %s343 = sphi 0, %s341
      %s344 = sphi 0, %s343
      %s358 = sphi 0, %s344
      %s362 = sphi 0, %s362
      %s364 = sphi 0, %s362
      %s365 = sphi 0, %s364
      %s379 = sphi 0, %s365
      %s383 = sphi 0, %s383
      %s385 = sphi 0, %s383
      %s386 = sphi 0, %s385
      %s400 = sphi 0, %s386
      %s404 = sphi 0, %s404
      %s406 = sphi 0, %s404
      %s407 = sphi 0, %s406
      %s421 = sphi 0, %s407
      %s425 = sphi 0, %s425
      %s427 = sphi 0, %s425
      %s428 = sphi 0, %s427
      %s442 = sphi 0, %s428
      %s446 = sphi 0, %s446
      %s448 = sphi 0, %s446
      %s449 = sphi 0, %s448
      %s463 = sphi 0, %s449
      %s467 = sphi 0, %s467
      %s469 = sphi 0, %s467
      %s470 = sphi 0, %s469
      %s484 = sphi 0, %s470
      %s490 = sphi 0, %s492
      %s493 = sphi 0, %s490
      %s494 = sphi 0, %s493
      %s510 = sphi 0, %s494
    $region4: #{vit_pallas.1} parent=1 // loop_header_branch
      %37 = sbr.rel (%p35) target = $region8
    $region5: #{vit_pallas.1} parent=1 // loop_body
      %s39 = ssub.s32 %s34, 1
      %s40 = ssub.s32 %s34, 2
      %s41 = sadd.s32 %s34, 1
      %s42 = ssub.s32 %s34, %s41
      %p43 = scmp.eq.s32.totalorder %s42, 0
      %s45 = sadd.s32 %s44, 1
      %s46 = scalar_select %p43, %s44, %s45
      %p49 = pneg %p43
      %p50 = scmp.eq.s32.totalorder %s34, 1
      %p51 = por %p49, %p50
      %p52 = scmp.ne.s32.totalorder %s44, %s47
      %p53 = scmp.eq.s32.totalorder %s34, 0
      %p54 = por %p52, %p53
      %p55 = scmp.ne.s32.totalorder %s44, %s47
      %p56 = scmp.eq.s32.totalorder %s39, 1
      %p57 = por %p55, %p56
      %p58 = scmp.ne.s32.totalorder %s47, %s48
      %p59 = scmp.eq.s32.totalorder %s39, 0
      %p60 = por %p58, %p59
      %p61 = scmp.ne.s32.totalorder %s47, %s48
      %p62 = scmp.eq.s32.totalorder %s40, 1
      %p63 = por %p61, %p62
      %p65 = scmp.ne.s32.totalorder %s48, %s64
      %p66 = scmp.eq.s32.totalorder %s40, 0
      %p67 = por %p65, %p66
      %s69 = sadd.s32 %s68, 1
      %p72 = scmp.eq.s32.totalorder %s34, 1
      %p73 = scmp.ne.s32.totalorder %s68, %s70
      %p74 = scmp.eq.s32.totalorder %s34, 0
      %p75 = por %p73, %p74
      %p76 = scmp.ne.s32.totalorder %s68, %s70
      %p77 = scmp.eq.s32.totalorder %s39, 1
      %p78 = por %p76, %p77
      %p79 = scmp.ne.s32.totalorder %s70, %s71
      %p80 = scmp.eq.s32.totalorder %s39, 0
      %p81 = por %p79, %p80
      %p82 = scmp.ne.s32.totalorder %s70, %s71
      %p83 = scmp.eq.s32.totalorder %s40, 1
      %p84 = por %p82, %p83
      %p86 = scmp.ne.s32.totalorder %s71, %s85
      %p87 = scmp.eq.s32.totalorder %s40, 0
      %p88 = por %p86, %p87
      %s90 = sadd.s32 %s89, 1
      %p93 = scmp.eq.s32.totalorder %s34, 1
      %p94 = scmp.ne.s32.totalorder %s89, %s91
      %p95 = scmp.eq.s32.totalorder %s34, 0
      %p96 = por %p94, %p95
      %p97 = scmp.ne.s32.totalorder %s89, %s91
      %p98 = scmp.eq.s32.totalorder %s39, 1
      %p99 = por %p97, %p98
      %p100 = scmp.ne.s32.totalorder %s91, %s92
      %p101 = scmp.eq.s32.totalorder %s39, 0
      %p102 = por %p100, %p101
      %p103 = scmp.ne.s32.totalorder %s91, %s92
      %p104 = scmp.eq.s32.totalorder %s40, 1
      %p105 = por %p103, %p104
      %p107 = scmp.ne.s32.totalorder %s92, %s106
      %p108 = scmp.eq.s32.totalorder %s40, 0
      %p109 = por %p107, %p108
      %s111 = sadd.s32 %s110, 1
      %p114 = scmp.eq.s32.totalorder %s34, 1
      %p115 = scmp.ne.s32.totalorder %s110, %s112
      %p116 = scmp.eq.s32.totalorder %s34, 0
      %p117 = por %p115, %p116
      %p118 = scmp.ne.s32.totalorder %s110, %s112
      %p119 = scmp.eq.s32.totalorder %s39, 1
      %p120 = por %p118, %p119
      %p121 = scmp.ne.s32.totalorder %s112, %s113
      %p122 = scmp.eq.s32.totalorder %s39, 0
      %p123 = por %p121, %p122
      %p124 = scmp.ne.s32.totalorder %s112, %s113
      %p125 = scmp.eq.s32.totalorder %s40, 1
      %p126 = por %p124, %p125
      %p128 = scmp.ne.s32.totalorder %s113, %s127
      %p129 = scmp.eq.s32.totalorder %s40, 0
      %p130 = por %p128, %p129
      %s132 = sadd.s32 %s131, 1
      %p135 = scmp.eq.s32.totalorder %s34, 1
      %p136 = scmp.ne.s32.totalorder %s131, %s133
      %p137 = scmp.eq.s32.totalorder %s34, 0
      %p138 = por %p136, %p137
      %p139 = scmp.ne.s32.totalorder %s131, %s133
      %p140 = scmp.eq.s32.totalorder %s39, 1
      %p141 = por %p139, %p140
      %p142 = scmp.ne.s32.totalorder %s133, %s134
      %p143 = scmp.eq.s32.totalorder %s39, 0
      %p144 = por %p142, %p143
      %p145 = scmp.ne.s32.totalorder %s133, %s134
      %p146 = scmp.eq.s32.totalorder %s40, 1
      %p147 = por %p145, %p146
      %p149 = scmp.ne.s32.totalorder %s134, %s148
      %p150 = scmp.eq.s32.totalorder %s40, 0
      %p151 = por %p149, %p150
      %s153 = sadd.s32 %s152, 1
      %p156 = scmp.eq.s32.totalorder %s34, 1
      %p157 = scmp.ne.s32.totalorder %s152, %s154
      %p158 = scmp.eq.s32.totalorder %s34, 0
      %p159 = por %p157, %p158
      %p160 = scmp.ne.s32.totalorder %s152, %s154
      %p161 = scmp.eq.s32.totalorder %s39, 1
      %p162 = por %p160, %p161
      %p163 = scmp.ne.s32.totalorder %s154, %s155
      %p164 = scmp.eq.s32.totalorder %s39, 0
      %p165 = por %p163, %p164
      %p166 = scmp.ne.s32.totalorder %s154, %s155
      %p167 = scmp.eq.s32.totalorder %s40, 1
      %p168 = por %p166, %p167
      %p170 = scmp.ne.s32.totalorder %s155, %s169
      %p171 = scmp.eq.s32.totalorder %s40, 0
      %p172 = por %p170, %p171
      %s174 = sadd.s32 %s173, 1
      %p177 = scmp.eq.s32.totalorder %s34, 1
      %p178 = scmp.ne.s32.totalorder %s173, %s175
      %p179 = scmp.eq.s32.totalorder %s34, 0
      %p180 = por %p178, %p179
      %p181 = scmp.ne.s32.totalorder %s173, %s175
      %p182 = scmp.eq.s32.totalorder %s39, 1
      %p183 = por %p181, %p182
      %p184 = scmp.ne.s32.totalorder %s175, %s176
      %p185 = scmp.eq.s32.totalorder %s39, 0
      %p186 = por %p184, %p185
      %p187 = scmp.ne.s32.totalorder %s175, %s176
      %p188 = scmp.eq.s32.totalorder %s40, 1
      %p189 = por %p187, %p188
      %p191 = scmp.ne.s32.totalorder %s176, %s190
      %p192 = scmp.eq.s32.totalorder %s40, 0
      %p193 = por %p191, %p192
      %s195 = sadd.s32 %s194, 1
      %p198 = scmp.eq.s32.totalorder %s34, 1
      %p199 = scmp.ne.s32.totalorder %s194, %s196
      %p200 = scmp.eq.s32.totalorder %s34, 0
      %p201 = por %p199, %p200
      %p202 = scmp.ne.s32.totalorder %s194, %s196
      %p203 = scmp.eq.s32.totalorder %s39, 1
      %p204 = por %p202, %p203
      %p205 = scmp.ne.s32.totalorder %s196, %s197
      %p206 = scmp.eq.s32.totalorder %s39, 0
      %p207 = por %p205, %p206
      %p208 = scmp.ne.s32.totalorder %s196, %s197
      %p209 = scmp.eq.s32.totalorder %s40, 1
      %p210 = por %p208, %p209
      %p212 = scmp.ne.s32.totalorder %s197, %s211
      %p213 = scmp.eq.s32.totalorder %s40, 0
      %p214 = por %p212, %p213
      %s216 = sadd.s32 %s215, 1
      %p219 = scmp.eq.s32.totalorder %s34, 1
      %p220 = scmp.ne.s32.totalorder %s215, %s217
      %p221 = scmp.eq.s32.totalorder %s34, 0
      %p222 = por %p220, %p221
      %p223 = scmp.ne.s32.totalorder %s215, %s217
      %p224 = scmp.eq.s32.totalorder %s39, 1
      %p225 = por %p223, %p224
      %p226 = scmp.ne.s32.totalorder %s217, %s218
      %p227 = scmp.eq.s32.totalorder %s39, 0
      %p228 = por %p226, %p227
      %p229 = scmp.ne.s32.totalorder %s217, %s218
      %p230 = scmp.eq.s32.totalorder %s40, 1
      %p231 = por %p229, %p230
      %p233 = scmp.ne.s32.totalorder %s218, %s232
      %p234 = scmp.eq.s32.totalorder %s40, 0
      %p235 = por %p233, %p234
      %s237 = sadd.s32 %s236, 1
      %p240 = scmp.eq.s32.totalorder %s34, 1
      %p241 = scmp.ne.s32.totalorder %s236, %s238
      %p242 = scmp.eq.s32.totalorder %s34, 0
      %p243 = por %p241, %p242
      %p244 = scmp.ne.s32.totalorder %s236, %s238
      %p245 = scmp.eq.s32.totalorder %s39, 1
      %p246 = por %p244, %p245
      %p247 = scmp.ne.s32.totalorder %s238, %s239
      %p248 = scmp.eq.s32.totalorder %s39, 0
      %p249 = por %p247, %p248
      %p250 = scmp.ne.s32.totalorder %s238, %s239
      %p251 = scmp.eq.s32.totalorder %s40, 1
      %p252 = por %p250, %p251
      %p254 = scmp.ne.s32.totalorder %s239, %s253
      %p255 = scmp.eq.s32.totalorder %s40, 0
      %p256 = por %p254, %p255
      %s258 = sadd.s32 %s257, 1
      %p261 = scmp.eq.s32.totalorder %s34, 1
      %p262 = scmp.ne.s32.totalorder %s257, %s259
      %p263 = scmp.eq.s32.totalorder %s34, 0
      %p264 = por %p262, %p263
      %p265 = scmp.ne.s32.totalorder %s257, %s259
      %p266 = scmp.eq.s32.totalorder %s39, 1
      %p267 = por %p265, %p266
      %p268 = scmp.ne.s32.totalorder %s259, %s260
      %p269 = scmp.eq.s32.totalorder %s39, 0
      %p270 = por %p268, %p269
      %p271 = scmp.ne.s32.totalorder %s259, %s260
      %p272 = scmp.eq.s32.totalorder %s40, 1
      %p273 = por %p271, %p272
      %p275 = scmp.ne.s32.totalorder %s260, %s274
      %p276 = scmp.eq.s32.totalorder %s40, 0
      %p277 = por %p275, %p276
      %s279 = sadd.s32 %s278, 1
      %p282 = scmp.eq.s32.totalorder %s34, 1
      %p283 = scmp.ne.s32.totalorder %s278, %s280
      %p284 = scmp.eq.s32.totalorder %s34, 0
      %p285 = por %p283, %p284
      %p286 = scmp.ne.s32.totalorder %s278, %s280
      %p287 = scmp.eq.s32.totalorder %s39, 1
      %p288 = por %p286, %p287
      %p289 = scmp.ne.s32.totalorder %s280, %s281
      %p290 = scmp.eq.s32.totalorder %s39, 0
      %p291 = por %p289, %p290
      %p292 = scmp.ne.s32.totalorder %s280, %s281
      %p293 = scmp.eq.s32.totalorder %s40, 1
      %p294 = por %p292, %p293
      %p296 = scmp.ne.s32.totalorder %s281, %s295
      %p297 = scmp.eq.s32.totalorder %s40, 0
      %p298 = por %p296, %p297
      %s300 = sadd.s32 %s299, 1
      %p303 = scmp.eq.s32.totalorder %s34, 1
      %p304 = scmp.ne.s32.totalorder %s299, %s301
      %p305 = scmp.eq.s32.totalorder %s34, 0
      %p306 = por %p304, %p305
      %p307 = scmp.ne.s32.totalorder %s299, %s301
      %p308 = scmp.eq.s32.totalorder %s39, 1
      %p309 = por %p307, %p308
      %p310 = scmp.ne.s32.totalorder %s301, %s302
      %p311 = scmp.eq.s32.totalorder %s39, 0
      %p312 = por %p310, %p311
      %p313 = scmp.ne.s32.totalorder %s301, %s302
      %p314 = scmp.eq.s32.totalorder %s40, 1
      %p315 = por %p313, %p314
      %p317 = scmp.ne.s32.totalorder %s302, %s316
      %p318 = scmp.eq.s32.totalorder %s40, 0
      %p319 = por %p317, %p318
      %s321 = sadd.s32 %s320, 1
      %p324 = scmp.eq.s32.totalorder %s34, 1
      %p325 = scmp.ne.s32.totalorder %s320, %s322
      %p326 = scmp.eq.s32.totalorder %s34, 0
      %p327 = por %p325, %p326
      %p328 = scmp.ne.s32.totalorder %s320, %s322
      %p329 = scmp.eq.s32.totalorder %s39, 1
      %p330 = por %p328, %p329
      %p331 = scmp.ne.s32.totalorder %s322, %s323
      %p332 = scmp.eq.s32.totalorder %s39, 0
      %p333 = por %p331, %p332
      %p334 = scmp.ne.s32.totalorder %s322, %s323
      %p335 = scmp.eq.s32.totalorder %s40, 1
      %p336 = por %p334, %p335
      %p338 = scmp.ne.s32.totalorder %s323, %s337
      %p339 = scmp.eq.s32.totalorder %s40, 0
      %p340 = por %p338, %p339
      %s342 = sadd.s32 %s341, 1
      %p345 = scmp.eq.s32.totalorder %s34, 1
      %p346 = scmp.ne.s32.totalorder %s341, %s343
      %p347 = scmp.eq.s32.totalorder %s34, 0
      %p348 = por %p346, %p347
      %p349 = scmp.ne.s32.totalorder %s341, %s343
      %p350 = scmp.eq.s32.totalorder %s39, 1
      %p351 = por %p349, %p350
      %p352 = scmp.ne.s32.totalorder %s343, %s344
      %p353 = scmp.eq.s32.totalorder %s39, 0
      %p354 = por %p352, %p353
      %p355 = scmp.ne.s32.totalorder %s343, %s344
      %p356 = scmp.eq.s32.totalorder %s40, 1
      %p357 = por %p355, %p356
      %p359 = scmp.ne.s32.totalorder %s344, %s358
      %p360 = scmp.eq.s32.totalorder %s40, 0
      %p361 = por %p359, %p360
      %s363 = sadd.s32 %s362, 1
      %p366 = scmp.eq.s32.totalorder %s34, 1
      %p367 = scmp.ne.s32.totalorder %s362, %s364
      %p368 = scmp.eq.s32.totalorder %s34, 0
      %p369 = por %p367, %p368
      %p370 = scmp.ne.s32.totalorder %s362, %s364
      %p371 = scmp.eq.s32.totalorder %s39, 1
      %p372 = por %p370, %p371
      %p373 = scmp.ne.s32.totalorder %s364, %s365
      %p374 = scmp.eq.s32.totalorder %s39, 0
      %p375 = por %p373, %p374
      %p376 = scmp.ne.s32.totalorder %s364, %s365
      %p377 = scmp.eq.s32.totalorder %s40, 1
      %p378 = por %p376, %p377
      %p380 = scmp.ne.s32.totalorder %s365, %s379
      %p381 = scmp.eq.s32.totalorder %s40, 0
      %p382 = por %p380, %p381
      %s384 = sadd.s32 %s383, 1
      %p387 = scmp.eq.s32.totalorder %s34, 1
      %p388 = scmp.ne.s32.totalorder %s383, %s385
      %p389 = scmp.eq.s32.totalorder %s34, 0
      %p390 = por %p388, %p389
      %p391 = scmp.ne.s32.totalorder %s383, %s385
      %p392 = scmp.eq.s32.totalorder %s39, 1
      %p393 = por %p391, %p392
      %p394 = scmp.ne.s32.totalorder %s385, %s386
      %p395 = scmp.eq.s32.totalorder %s39, 0
      %p396 = por %p394, %p395
      %p397 = scmp.ne.s32.totalorder %s385, %s386
      %p398 = scmp.eq.s32.totalorder %s40, 1
      %p399 = por %p397, %p398
      %p401 = scmp.ne.s32.totalorder %s386, %s400
      %p402 = scmp.eq.s32.totalorder %s40, 0
      %p403 = por %p401, %p402
      %s405 = sadd.s32 %s404, 1
      %p408 = scmp.eq.s32.totalorder %s34, 1
      %p409 = scmp.ne.s32.totalorder %s404, %s406
      %p410 = scmp.eq.s32.totalorder %s34, 0
      %p411 = por %p409, %p410
      %p412 = scmp.ne.s32.totalorder %s404, %s406
      %p413 = scmp.eq.s32.totalorder %s39, 1
      %p414 = por %p412, %p413
      %p415 = scmp.ne.s32.totalorder %s406, %s407
      %p416 = scmp.eq.s32.totalorder %s39, 0
      %p417 = por %p415, %p416
      %p418 = scmp.ne.s32.totalorder %s406, %s407
      %p419 = scmp.eq.s32.totalorder %s40, 1
      %p420 = por %p418, %p419
      %p422 = scmp.ne.s32.totalorder %s407, %s421
      %p423 = scmp.eq.s32.totalorder %s40, 0
      %p424 = por %p422, %p423
      %s426 = sadd.s32 %s425, 1
      %p429 = scmp.eq.s32.totalorder %s34, 1
      %p430 = scmp.ne.s32.totalorder %s425, %s427
      %p431 = scmp.eq.s32.totalorder %s34, 0
      %p432 = por %p430, %p431
      %p433 = scmp.ne.s32.totalorder %s425, %s427
      %p434 = scmp.eq.s32.totalorder %s39, 1
      %p435 = por %p433, %p434
      %p436 = scmp.ne.s32.totalorder %s427, %s428
      %p437 = scmp.eq.s32.totalorder %s39, 0
      %p438 = por %p436, %p437
      %p439 = scmp.ne.s32.totalorder %s427, %s428
      %p440 = scmp.eq.s32.totalorder %s40, 1
      %p441 = por %p439, %p440
      %p443 = scmp.ne.s32.totalorder %s428, %s442
      %p444 = scmp.eq.s32.totalorder %s40, 0
      %p445 = por %p443, %p444
      %s447 = sadd.s32 %s446, 1
      %p450 = scmp.eq.s32.totalorder %s34, 1
      %p451 = scmp.ne.s32.totalorder %s446, %s448
      %p452 = scmp.eq.s32.totalorder %s34, 0
      %p453 = por %p451, %p452
      %p454 = scmp.ne.s32.totalorder %s446, %s448
      %p455 = scmp.eq.s32.totalorder %s39, 1
      %p456 = por %p454, %p455
      %p457 = scmp.ne.s32.totalorder %s448, %s449
      %p458 = scmp.eq.s32.totalorder %s39, 0
      %p459 = por %p457, %p458
      %p460 = scmp.ne.s32.totalorder %s448, %s449
      %p461 = scmp.eq.s32.totalorder %s40, 1
      %p462 = por %p460, %p461
      %p464 = scmp.ne.s32.totalorder %s449, %s463
      %p465 = scmp.eq.s32.totalorder %s40, 0
      %p466 = por %p464, %p465
      %s468 = sadd.s32 %s467, 1
      %p471 = scmp.eq.s32.totalorder %s34, 1
      %p472 = scmp.ne.s32.totalorder %s467, %s469
      %p473 = scmp.eq.s32.totalorder %s34, 0
      %p474 = por %p472, %p473
      %p475 = scmp.ne.s32.totalorder %s467, %s469
      %p476 = scmp.eq.s32.totalorder %s39, 1
      %p477 = por %p475, %p476
      %p478 = scmp.ne.s32.totalorder %s469, %s470
      %p479 = scmp.eq.s32.totalorder %s39, 0
      %p480 = por %p478, %p479
      %p481 = scmp.ne.s32.totalorder %s469, %s470
      %p482 = scmp.eq.s32.totalorder %s40, 1
      %p483 = por %p481, %p482
      %p485 = scmp.ne.s32.totalorder %s470, %s484
      %p486 = scmp.eq.s32.totalorder %s40, 0
      %p487 = por %p485, %p486
      %s488 = ssub.s32 %s34, %s41
      %p489 = scmp.eq.s32.totalorder %s488, 0
      %s491 = sadd.s32 %s490, 1
      %s492 = scalar_select %p489, %s490, %s491
      %p495 = pneg %p489
      %p496 = scmp.eq.s32.totalorder %s34, 1
      %p497 = por %p495, %p496
      %p498 = scmp.ne.s32.totalorder %s490, %s493
      %p499 = scmp.eq.s32.totalorder %s34, 0
      %p500 = por %p498, %p499
      %p501 = scmp.ne.s32.totalorder %s490, %s493
      %p502 = scmp.eq.s32.totalorder %s39, 1
      %p503 = por %p501, %p502
      %p504 = scmp.ne.s32.totalorder %s493, %s494
      %p505 = scmp.eq.s32.totalorder %s39, 0
      %p506 = por %p504, %p505
      %p507 = scmp.ne.s32.totalorder %s493, %s494
      %p508 = scmp.eq.s32.totalorder %s40, 1
      %p509 = por %p507, %p508
      %p511 = scmp.ne.s32.totalorder %s494, %s510
      %p512 = scmp.eq.s32.totalorder %s40, 0
      %p513 = por %p511, %p512
      %p514 = scmp.le.s32.totalorder 1, %s34
      %p515 = scmp.lt.s32.totalorder %s34, 3
      %p516 = pnand %p514, %p515
      %p517 = pneg %p516
      // Predicated region
      $region9: #{vit_pallas.1} parent=5 // pred_check
        _
      $region10: #{vit_pallas.1} parent=5 // pred_check_branch
        %519 = sbr.rel (%p516) target = $region12
      $region11: #{vit_pallas.1} parent=5 // pred_region
        %s520 = ssub.s32 %s34, 1
        // Predicated region
        $region13: #{vit_pallas.1} parent=11 // pred_check
          %p521 = pneg %p81
        $region14: #{vit_pallas.1} parent=11 // pred_check_branch
          %523 = sbr.rel (%p521) target = $region16
        $region15: #{vit_pallas.1} parent=11 // pred_region
          %s525 = ssub.s32 3072, 3072
          %526 = vsyncadd [#allocation3], %s525
          %s527 = sshll.u32 [#allocation2], 4
          %s528 = int_to_ptr.vmem [resolvable:$true] %s527
          %533 = dma.hbm_to_vmem [thread:$0]  %s1, 3072, %s528, [#allocation3], 128, 128, 8
        $region16: #{vit_pallas.1} parent=11 // pred_fallthru
          _
        // Predicated region
        $region17: #{vit_pallas.1} parent=11 // pred_check
          %p534 = pneg %p102
        $region18: #{vit_pallas.1} parent=11 // pred_check_branch
          %536 = sbr.rel (%p534) target = $region20
        $region19: #{vit_pallas.1} parent=11 // pred_region
          _
        $region20: #{vit_pallas.1} parent=11 // pred_fallthru
          _
        // Predicated region
        $region21: #{vit_pallas.1} parent=11 // pred_check
          %p537 = pneg %p123
        $region22: #{vit_pallas.1} parent=11 // pred_check_branch
          %539 = sbr.rel (%p537) target = $region24
        $region23: #{vit_pallas.1} parent=11 // pred_region
          _
        $region24: #{vit_pallas.1} parent=11 // pred_fallthru
          _
        // Predicated region
        $region25: #{vit_pallas.1} parent=11 // pred_check
          %p540 = pneg %p144
        $region26: #{vit_pallas.1} parent=11 // pred_check_branch
          %542 = sbr.rel (%p540) target = $region28
        $region27: #{vit_pallas.1} parent=11 // pred_region
          _
        $region28: #{vit_pallas.1} parent=11 // pred_fallthru
          _
        // Predicated region
        $region29: #{vit_pallas.1} parent=11 // pred_check
          %p543 = pneg %p165
        $region30: #{vit_pallas.1} parent=11 // pred_check_branch
          %545 = sbr.rel (%p543) target = $region32
        $region31: #{vit_pallas.1} parent=11 // pred_region
          %s547 = ssub.s32 16384, 16384
          %548 = vsyncadd [#allocation6], %s547
          %s549 = sshll.u32 [#allocation5], 4
          %s550 = int_to_ptr.vmem [resolvable:$true] %s549
          %555 = dma.hbm_to_vmem [thread:$0]  %s5, 16384, %s550, [#allocation6], 512, 512, 32
        $region32: #{vit_pallas.1} parent=11 // pred_fallthru
          _
        // Predicated region
        $region33: #{vit_pallas.1} parent=11 // pred_check
          %p556 = pneg %p186
        $region34: #{vit_pallas.1} parent=11 // pred_check_branch
          %558 = sbr.rel (%p556) target = $region36
        $region35: #{vit_pallas.1} parent=11 // pred_region
          _
        $region36: #{vit_pallas.1} parent=11 // pred_fallthru
          _
        // Predicated region
        $region37: #{vit_pallas.1} parent=11 // pred_check
          %p559 = pneg %p207
        $region38: #{vit_pallas.1} parent=11 // pred_check_branch
          %561 = sbr.rel (%p559) target = $region40
        $region39: #{vit_pallas.1} parent=11 // pred_region
          %s563 = ssub.s32 16384, 16384
          %564 = vsyncadd [#allocation6], %s563
          %s565 = sshll.u32 [#allocation7], 4
          %s566 = int_to_ptr.vmem [resolvable:$true] %s565
          %571 = dma.hbm_to_vmem [thread:$0]  %s7, 16384, %s566, [#allocation6], 512, 512, 32
        $region40: #{vit_pallas.1} parent=11 // pred_fallthru
          _
        // Predicated region
        $region41: #{vit_pallas.1} parent=11 // pred_check
          %p572 = pneg %p228
        $region42: #{vit_pallas.1} parent=11 // pred_check_branch
          %574 = sbr.rel (%p572) target = $region44
        $region43: #{vit_pallas.1} parent=11 // pred_region
          _
        $region44: #{vit_pallas.1} parent=11 // pred_fallthru
          _
        // Predicated region
        $region45: #{vit_pallas.1} parent=11 // pred_check
          %p575 = pneg %p249
        $region46: #{vit_pallas.1} parent=11 // pred_check_branch
          %577 = sbr.rel (%p575) target = $region48
        $region47: #{vit_pallas.1} parent=11 // pred_region
          %s579 = ssub.s32 16384, 16384
          %580 = vsyncadd [#allocation9], %s579
          %s581 = sshll.u32 [#allocation8], 4
          %s582 = int_to_ptr.vmem [resolvable:$true] %s581
          %587 = dma.hbm_to_vmem [thread:$0]  %s9, 16384, %s582, [#allocation9], 512, 512, 32
        $region48: #{vit_pallas.1} parent=11 // pred_fallthru
          _
        // Predicated region
        $region49: #{vit_pallas.1} parent=11 // pred_check
          %p588 = pneg %p270
        $region50: #{vit_pallas.1} parent=11 // pred_check_branch
          %590 = sbr.rel (%p588) target = $region52
        $region51: #{vit_pallas.1} parent=11 // pred_region
          _
        $region52: #{vit_pallas.1} parent=11 // pred_fallthru
          _
        // Predicated region
        $region53: #{vit_pallas.1} parent=11 // pred_check
          %p591 = pneg %p291
        $region54: #{vit_pallas.1} parent=11 // pred_check_branch
          %593 = sbr.rel (%p591) target = $region56
        $region55: #{vit_pallas.1} parent=11 // pred_region
          _
        $region56: #{vit_pallas.1} parent=11 // pred_fallthru
          _
        // Predicated region
        $region57: #{vit_pallas.1} parent=11 // pred_check
          %p594 = pneg %p312
        $region58: #{vit_pallas.1} parent=11 // pred_check_branch
          %596 = sbr.rel (%p594) target = $region60
        $region59: #{vit_pallas.1} parent=11 // pred_region
          _
        $region60: #{vit_pallas.1} parent=11 // pred_fallthru
          _
        // Predicated region
        $region61: #{vit_pallas.1} parent=11 // pred_check
          %p597 = pneg %p333
        $region62: #{vit_pallas.1} parent=11 // pred_check_branch
          %599 = sbr.rel (%p597) target = $region64
        $region63: #{vit_pallas.1} parent=11 // pred_region
          %s601 = ssub.s32 8192, 8192
          %602 = vsyncadd [#allocation9], %s601
          %s603 = sshll.u32 [#allocation10], 4
          %s604 = int_to_ptr.vmem [resolvable:$true] %s603
          %609 = dma.hbm_to_vmem [thread:$0]  %s13, 8192, %s604, [#allocation9], 256, 256, 16
        $region64: #{vit_pallas.1} parent=11 // pred_fallthru
          _
        // Predicated region
        $region65: #{vit_pallas.1} parent=11 // pred_check
          %p610 = pneg %p354
        $region66: #{vit_pallas.1} parent=11 // pred_check_branch
          %612 = sbr.rel (%p610) target = $region68
        $region67: #{vit_pallas.1} parent=11 // pred_region
          _
        $region68: #{vit_pallas.1} parent=11 // pred_fallthru
          _
        // Predicated region
        $region69: #{vit_pallas.1} parent=11 // pred_check
          %p613 = pneg %p375
        $region70: #{vit_pallas.1} parent=11 // pred_check_branch
          %615 = sbr.rel (%p613) target = $region72
        $region71: #{vit_pallas.1} parent=11 // pred_region
          %s617 = ssub.s32 8192, 8192
          %618 = vsyncadd [#allocation12], %s617
          %s619 = sshll.u32 [#allocation11], 4
          %s620 = int_to_ptr.vmem [resolvable:$true] %s619
          %625 = dma.hbm_to_vmem [thread:$0]  %s15, 8192, %s620, [#allocation12], 128, 128, 8
        $region72: #{vit_pallas.1} parent=11 // pred_fallthru
          _
        // Predicated region
        $region73: #{vit_pallas.1} parent=11 // pred_check
          %p626 = pneg %p396
        $region74: #{vit_pallas.1} parent=11 // pred_check_branch
          %628 = sbr.rel (%p626) target = $region76
        $region75: #{vit_pallas.1} parent=11 // pred_region
          _
        $region76: #{vit_pallas.1} parent=11 // pred_fallthru
          _
        // Predicated region
        $region77: #{vit_pallas.1} parent=11 // pred_check
          %p629 = pneg %p417
        $region78: #{vit_pallas.1} parent=11 // pred_check_branch
          %631 = sbr.rel (%p629) target = $region80
        $region79: #{vit_pallas.1} parent=11 // pred_region
          _
        $region80: #{vit_pallas.1} parent=11 // pred_fallthru
          _
        // Predicated region
        $region81: #{vit_pallas.1} parent=11 // pred_check
          %p632 = pneg %p438
        $region82: #{vit_pallas.1} parent=11 // pred_check_branch
          %634 = sbr.rel (%p632) target = $region84
        $region83: #{vit_pallas.1} parent=11 // pred_region
          _
        $region84: #{vit_pallas.1} parent=11 // pred_fallthru
          _
        // Predicated region
        $region85: #{vit_pallas.1} parent=11 // pred_check
          %p635 = pneg %p459
        $region86: #{vit_pallas.1} parent=11 // pred_check_branch
          %637 = sbr.rel (%p635) target = $region88
        $region87: #{vit_pallas.1} parent=11 // pred_region
          _
        $region88: #{vit_pallas.1} parent=11 // pred_fallthru
          _
        // Predicated region
        $region89: #{vit_pallas.1} parent=11 // pred_check
          %p638 = pneg %p480
        $region90: #{vit_pallas.1} parent=11 // pred_check_branch
          %640 = sbr.rel (%p638) target = $region92
        $region91: #{vit_pallas.1} parent=11 // pred_region
          _
        $region92: #{vit_pallas.1} parent=11 // pred_fallthru
          _
      $region12: #{vit_pallas.1} parent=5 // pred_fallthru
        _
      %p641 = scmp.lt.s32.totalorder %s34, 2
      // Predicated region
      $region93: #{vit_pallas.1} parent=5 // pred_check
        %p642 = pneg %p641
      $region94: #{vit_pallas.1} parent=5 // pred_check_branch
        %644 = sbr.rel (%p642) target = $region96
      $region95: #{vit_pallas.1} parent=5 // pred_region
        // Predicated region
        $region97: #{vit_pallas.1} parent=95 // pred_check
          %p645 = pneg %p54
        $region98: #{vit_pallas.1} parent=95 // pred_check_branch
          %647 = sbr.rel (%p645) target = $region100
        $region99: #{vit_pallas.1} parent=95 // pred_region
          %p648 = scmp.lt.s32.totalorder %s34, 1
          %s649 = scalar_select %p648, %s34, 1
          %s650 = smul.addr %s649, 6
          %s651 = smul.addr %s650, 8
          %s652 = scalar_lea.vmem %s0, %s651
        $region100: #{vit_pallas.1} parent=95 // pred_fallthru
          _
      $region96: #{vit_pallas.1} parent=5 // pred_fallthru
        _
      %p653 = scmp.le.s32.totalorder 1, %s34
      %p654 = scmp.lt.s32.totalorder %s34, 3
      %p655 = pnand %p653, %p654
      %p656 = pneg %p655
      // Predicated region
      $region101: #{vit_pallas.1} parent=5 // pred_check
        _
      $region102: #{vit_pallas.1} parent=5 // pred_check_branch
        %658 = sbr.rel (%p655) target = $region104
      $region103: #{vit_pallas.1} parent=5 // pred_region
        %s659 = ssub.s32 %s34, 1
        // Predicated region
        $region105: #{vit_pallas.1} parent=103 // pred_check
          %p660 = pneg %p81
        $region106: #{vit_pallas.1} parent=103 // pred_check_branch
          %662 = sbr.rel (%p660) target = $region108
        $region107: #{vit_pallas.1} parent=103 // pred_region
          %663 = dma.done [#allocation3], 3072
        $region108: #{vit_pallas.1} parent=103 // pred_fallthru
          _
        // Predicated region
        $region109: #{vit_pallas.1} parent=103 // pred_check
          %p664 = pneg %p165
        $region110: #{vit_pallas.1} parent=103 // pred_check_branch
          %666 = sbr.rel (%p664) target = $region112
        $region111: #{vit_pallas.1} parent=103 // pred_region
          %667 = dma.done [#allocation6], 16384
        $region112: #{vit_pallas.1} parent=103 // pred_fallthru
          _
        // Predicated region
        $region113: #{vit_pallas.1} parent=103 // pred_check
          %p668 = pneg %p207
        $region114: #{vit_pallas.1} parent=103 // pred_check_branch
          %670 = sbr.rel (%p668) target = $region116
        $region115: #{vit_pallas.1} parent=103 // pred_region
          %671 = dma.done [#allocation6], 16384
        $region116: #{vit_pallas.1} parent=103 // pred_fallthru
          _
        // Predicated region
        $region117: #{vit_pallas.1} parent=103 // pred_check
          %p672 = pneg %p249
        $region118: #{vit_pallas.1} parent=103 // pred_check_branch
          %674 = sbr.rel (%p672) target = $region120
        $region119: #{vit_pallas.1} parent=103 // pred_region
          %675 = dma.done [#allocation9], 16384
        $region120: #{vit_pallas.1} parent=103 // pred_fallthru
          _
        // Predicated region
        $region121: #{vit_pallas.1} parent=103 // pred_check
          %p676 = pneg %p333
        $region122: #{vit_pallas.1} parent=103 // pred_check_branch
          %678 = sbr.rel (%p676) target = $region124
        $region123: #{vit_pallas.1} parent=103 // pred_region
          %679 = dma.done [#allocation9], 8192
        $region124: #{vit_pallas.1} parent=103 // pred_fallthru
          _
        // Predicated region
        $region125: #{vit_pallas.1} parent=103 // pred_check
          %p680 = pneg %p375
        $region126: #{vit_pallas.1} parent=103 // pred_check_branch
          %682 = sbr.rel (%p680) target = $region128
        $region127: #{vit_pallas.1} parent=103 // pred_region
          %683 = dma.done [#allocation12], 8192
        $region128: #{vit_pallas.1} parent=103 // pred_fallthru
          _
        %p684 = scmp.lt.s32.totalorder %s39, 1
        %s685 = scalar_select %p684, %s39, 1
        %s686 = smul.addr %s685, 6
        %s687 = smul.addr %s686, 8
        %s688 = scalar_lea.vmem %s0, %s687
        %p689 = pneg %p60
        %p690 = pneg %p57
        %p691 = pneg %p81
        %p692 = pneg %p78
        %p693 = pneg %p102
        %p694 = pneg %p99
        %p695 = pneg %p123
        %p696 = pneg %p120
        %p697 = pneg %p144
        %p698 = pneg %p141
        %p699 = pneg %p165
        %p700 = pneg %p162
        %p701 = pneg %p186
        %p702 = pneg %p183
        %p703 = pneg %p207
        %p704 = pneg %p204
        %p705 = pneg %p228
        %p706 = pneg %p225
        %p707 = pneg %p249
        %p708 = pneg %p246
        %p709 = pneg %p270
        %p710 = pneg %p267
        %p711 = pneg %p291
        %p712 = pneg %p288
        %p713 = pneg %p312
        %p714 = pneg %p309
        %p715 = pneg %p333
        %p716 = pneg %p330
        %p717 = pneg %p354
        %p718 = pneg %p351
        %p719 = pneg %p375
        %p720 = pneg %p372
        %p721 = pneg %p396
        %p722 = pneg %p393
        %p723 = pneg %p417
        %p724 = pneg %p414
        %p725 = pneg %p438
        %p726 = pneg %p435
        %p727 = pneg %p459
        %p728 = pneg %p456
        %p729 = pneg %p480
        %p730 = pneg %p477
        %p731 = pneg %p506
        %p732 = pneg %p503
        %s733 = sand.u32 %s493, 1
        %s734 = scalar_lea.sflag [#allocation4], %s733
        %s735 = sand.u32 %s493, 1
        %s736 = scalar_lea.vmem [#allocation13], %s735
        %p737 = scmp.lt.s32.totalorder %s39, 1
        %s738 = scalar_select %p737, %s39, 1
        %s739 = smul.addr %s738, 6
        %s740 = smul.addr %s739, 8
        %s741 = scalar_lea.vmem %s0, %s740
        %v742 = vld [vmem:[%s741] sm:$0xff]
        %v743 = vld [vmem:[%s741 + $0x8] sm:$0xff]
        %v744 = vld [vmem:[%s741 + $0x10] sm:$0xff]
        %v745 = vld [vmem:[%s741 + $0x18] sm:$0xff]
        %v746 = vld [vmem:[%s741 + $0x20] sm:$0x1]
        %v747 = vld [vmem:[%s741 + $0x28] sm:$0x1]
        %v748 = vld [vmem:[#allocation2] sm:$0xff]
        %v749 = vld [vmem:[#allocation2 + $0x8] sm:$0xff]
        %v750 = vld [vmem:[#allocation2 + $0x10] sm:$0xff]
        %v751 = vld [vmem:[#allocation2 + $0x18] sm:$0xff]
        %v752 = vld [vmem:[#allocation2 + $0x20] sm:$0xff]
        %v753 = vld [vmem:[#allocation2 + $0x28] sm:$0xff]
        %v754 = vld [vmem:[#allocation2 + $0x30] sm:$0xff]
        %v755 = vld [vmem:[#allocation2 + $0x38] sm:$0xff]
        %v756 = vld [vmem:[#allocation2 + $0x40] sm:$0xff]
        %v757 = vld [vmem:[#allocation2 + $0x48] sm:$0xff]
        %v758 = vld [vmem:[#allocation2 + $0x50] sm:$0xff]
        %v759 = vld [vmem:[#allocation2 + $0x58] sm:$0xff]
        %v760 = vld [vmem:[#allocation2 + $0x60] sm:$0xff]
        %v761 = vld [vmem:[#allocation2 + $0x68] sm:$0xff]
        %v762 = vld [vmem:[#allocation2 + $0x70] sm:$0xff]
        %v763 = vld [vmem:[#allocation2 + $0x78] sm:$0xff]
        %v764 = vld [vmem:[#allocation2 + $0x80] sm:$0xff]
        %v765 = vld [vmem:[#allocation2 + $0x88] sm:$0xff]
        %v766 = vld [vmem:[#allocation2 + $0x90] sm:$0xff]
        %v767 = vld [vmem:[#allocation2 + $0x98] sm:$0xff]
        %v768 = vld [vmem:[#allocation2 + $0xa0] sm:$0xff]
        %v769 = vld [vmem:[#allocation2 + $0xa8] sm:$0xff]
        %v770 = vld [vmem:[#allocation2 + $0xb0] sm:$0xff]
        %v771 = vld [vmem:[#allocation2 + $0xb8] sm:$0xff]
        %v772 = vld [vmem:[%s2] sm:$0xff]
        %v773 = vld [vmem:[%s2 + $0x8] sm:$0xff]
        %v774 = vld [vmem:[%s2 + $0x10] sm:$0x1]
        %vm775 = vcmask 523264
        %v777 = vsel %vm775, %v743, 0
        %v780 = vsel %vm775, %v745, 0
        %v783 = vsel %vm775, %v747, 0
        %785 = vmatprep.subr.mxu0 0.0
        %786 = vmatpush1.msra.mxu0 %v748
        %787 = vmatprep.subr.mxu0 0.0
        %788 = vmatpush1.msra.mxu0 %v749
        %789 = vmatprep.subr.mxu0 0.0
        %790 = vmatpush1.msra.mxu0 %v750
        %791 = vmatprep.subr.mxu0 0.0
        %792 = vmatpush1.msra.mxu0 %v751
        %793 = vmatprep.subr.mxu0 0.0
        %794 = vmatpush1.msra.mxu0 %v752
        %795 = vmatprep.subr.mxu0 0.0
        %796 = vmatpush1.msra.mxu0 %v753
        %797 = vmatprep.subr.mxu0 0.0
        %798 = vmatpush1.msra.mxu0 %v754
        %799 = vmatprep.subr.mxu0 0.0
        %800 = vmatpush1.msra.mxu0 %v755
        %801 = vmatprep.subr.mxu0 0.0
        %802 = vmatpush1.msra.mxu0 %v756
        %803 = vmatprep.subr.mxu0 0.0
        %804 = vmatpush1.msra.mxu0 %v757
        %805 = vmatprep.subr.mxu0 0.0
        %806 = vmatpush1.msra.mxu0 %v758
        %807 = vmatprep.subr.mxu0 0.0
        %808 = vmatpush1.msra.mxu0 %v759
        %809 = vmatprep.subr.mxu0 0.0
        %810 = vmatpush1.msra.mxu0 %v760
        %811 = vmatprep.subr.mxu0 0.0
        %812 = vmatpush1.msra.mxu0 %v761
        %813 = vmatprep.subr.mxu0 0.0
        %814 = vmatpush1.msra.mxu0 %v762
        %815 = vmatprep.subr.mxu0 0.0
        %816 = vmatpush1.msra.mxu0 %v763
        %817 = vmatprep.subr.mxu0 0.0
        %818 = vmatpush1.msra.mxu0 %v764
        %819 = vmatprep.subr.mxu0 0.0
        %820 = vmatpush1.msra.mxu0 %v765
        %821 = vmatprep.subr.mxu0 0.0
        %822 = vmatpush1.msra.mxu0 %v766
        %823 = vmatprep.subr.mxu0 0.0
        %824 = vmatpush1.msra.mxu0 %v767
        %825 = vmatprep.subr.mxu0 0.0
        %826 = vmatpush1.msra.mxu0 %v768
        %827 = vmatprep.subr.mxu0 0.0
        %828 = vmatpush1.msra.mxu0 %v769
        %829 = vmatprep.subr.mxu0 0.0
        %830 = vmatpush1.msra.mxu0 %v770
        %831 = vmatprep.subr.mxu0 0.0
        %832 = vmatpush1.msra.mxu0 %v771
        %833 = vmatprep.subr.mxu0 0.0
        %834 = vmatpush1.msra.mxu0 0.0
        %835 = vmatprep.subr.mxu0 0.0
        %836 = vmatpush1.msra.mxu0 0.0
        %837 = vmatprep.subr.mxu0 0.0
        %838 = vmatpush1.msra.mxu0 0.0
        %839 = vmatprep.subr.mxu0 0.0
        %840 = vmatpush1.msra.mxu0 0.0
        %841 = vmatprep.subr.mxu0 0.0
        %842 = vmatpush1.msra.mxu0 0.0
        %843 = vmatprep.subr.mxu0 0.0
        %844 = vmatpush1.msra.mxu0 0.0
        %845 = vmatprep.subr.mxu0 0.0
        %846 = vmatpush1.msra.mxu0 0.0
        %847 = vmatprep.subr.mxu0 0.0
        %848 = vmatpush1.msra.mxu0 0.0
        %849 = vmatprep.mubr.f32.mxu0 %v777
        %850 = vmatmul.mubr.f32.gmra.mrb[0].mxu0 %v742
        %v851 = vpop.f32.mrb[0].mxu0
        %v852 = vadd.f32 %v772, %v851
        %v853 = vpop.f32.mrb[0].mxu0
        %854 = vmatprep.mubr.f32.mxu0 %v780
        %855 = vmatmul.mubr.f32.gmra.mrb[0].mxu0 %v744
        %v856 = vpop.f32.mrb[0].mxu0
        %v857 = vadd.f32 %v773, %v856
        %v858 = vpop.f32.mrb[0].mxu0
        %859 = vmatprep.mubr.f32.mxu0 %v783
        %860 = vmatmul.mubr.f32.gmra.mrb[0].mxu0 %v746
        %v861 = vpop.f32.mrb[0].mxu0
        %v862 = vadd.f32 %v774, %v861
        %v863 = vpop.f32.mrb[0].mxu0
        %864 = vdwg.mxu0
        %v865 = vld [vmem:[%s3] sm:$0x1]
        %v866 = vld [vmem:[%s4] sm:$0x1]
        %867 = vadd.xlane.f32.xlu0 %v852
        %v868 = vpop.xlane.xlu0 %867
        %869 = vadd.xlane.f32.xlu0 %v857
        %v870 = vpop.xlane.xlu0 %869
        %vm871 = vcmask 1040384
        %v872 = vsel %vm871, %v862, 0.0
        %873 = vadd.xlane.f32.xlu0 %v872
        %v874 = vpop.xlane.xlu0 %873
        %v875 = vmul.f32 %v852, %v852
        %v876 = vmul.f32 %v857, %v857
        %v877 = vmul.f32 %v862, %v862
        %878 = vadd.xlane.f32.xlu0 %v875
        %v879 = vpop.xlane.xlu0 %878
        %880 = vadd.xlane.f32.xlu0 %v876
        %v881 = vpop.xlane.xlu0 %880
        %v882 = vsel %vm871, %v877, 0.0
        %883 = vadd.xlane.f32.xlu0 %v882
        %v884 = vpop.xlane.xlu0 %883
        %v885 = vmul.f32 %v868, 0.015625
        %v886 = vmul.f32 %v870, 0.015625
        %v887 = vmul.f32 %v874, 0.015625
        %v888 = vmul.f32 %v879, 0.015625
        %v889 = vmul.f32 %v881, 0.015625
        %v890 = vmul.f32 %v884, 0.015625
        %v891 = vmul.f32 %v885, %v885
        %v892 = vmul.f32 %v886, %v886
        %v893 = vmul.f32 %v887, %v887
        %v894 = vsub.f32 %v888, %v891
        %v895 = vsub.f32 %v889, %v892
        %v896 = vsub.f32 %v890, %v893
        %v897 = vsub.f32 %v852, %v885
        %v898 = vsub.f32 %v857, %v886
        %v899 = vsub.f32 %v862, %v887
        %v900 = vadd.f32 %v894, 1e-05
        %v901 = vadd.f32 %v895, 1e-05
        %v902 = vadd.f32 %v896, 1e-05
        %v903 = vrsqrt.pop %v900
        %v904 = vrsqrt.pop %v901
        %v905 = vrsqrt.pop %v902
        %v906 = vmul.f32 %v897, %v903
        %v907 = vmul.f32 %v898, %v904
        %v908 = vmul.f32 %v899, %v905
        %v910 = vlaneseq
        %v911 = vshrl.u32 %v910, 7
        %v912 = vsub.s32 0, %v911
        %v913 = vrot.slane %v865, %v912
        %v915 = vmul.f32 %v906, %v913
        %v916 = vmul.f32 %v907, %v913
        %v917 = vmul.f32 %v908, %v913
        %v919 = vlaneseq
        %v920 = vshrl.u32 %v919, 7
        %v921 = vsub.s32 0, %v920
        %v922 = vrot.slane %v866, %v921
        %v924 = vadd.f32 %v915, %v922
        %v925 = vadd.f32 %v916, %v922
        %v926 = vadd.f32 %v917, %v922
        %v927 = vld [vmem:[#allocation5] sm:$0xff]
        %v928 = vld [vmem:[#allocation5 + $0x8] sm:$0xff]
        %v929 = vld [vmem:[#allocation5 + $0x10] sm:$0xff]
        %v930 = vld [vmem:[#allocation5 + $0x18] sm:$0xff]
        %v931 = vld [vmem:[#allocation5 + $0x20] sm:$0xff]
        %v932 = vld [vmem:[#allocation5 + $0x28] sm:$0xff]
        %v933 = vld [vmem:[#allocation5 + $0x30] sm:$0xff]
        %v934 = vld [vmem:[#allocation5 + $0x38] sm:$0xff]
        %v935 = vld [vmem:[#allocation5 + $0x40] sm:$0xff]
        %v936 = vld [vmem:[#allocation5 + $0x48] sm:$0xff]
        %v937 = vld [vmem:[#allocation5 + $0x50] sm:$0xff]
        %v938 = vld [vmem:[#allocation5 + $0x58] sm:$0xff]
        %v939 = vld [vmem:[#allocation5 + $0x60] sm:$0xff]
        %v940 = vld [vmem:[#allocation5 + $0x68] sm:$0xff]
        %v941 = vld [vmem:[#allocation5 + $0x70] sm:$0xff]
        %v942 = vld [vmem:[#allocation5 + $0x78] sm:$0xff]
        %v943 = vld [vmem:[#allocation5 + $0x80] sm:$0xff]
        %v944 = vld [vmem:[#allocation5 + $0x88] sm:$0xff]
        %v945 = vld [vmem:[#allocation5 + $0x90] sm:$0xff]
        %v946 = vld [vmem:[#allocation5 + $0x98] sm:$0xff]
        %v947 = vld [vmem:[#allocation5 + $0xa0] sm:$0xff]
        %v948 = vld [vmem:[#allocation5 + $0xa8] sm:$0xff]
        %v949 = vld [vmem:[#allocation5 + $0xb0] sm:$0xff]
        %v950 = vld [vmem:[#allocation5 + $0xb8] sm:$0xff]
        %v951 = vld [vmem:[#allocation5 + $0xc0] sm:$0xff]
        %v952 = vld [vmem:[#allocation5 + $0xc8] sm:$0xff]
        %v953 = vld [vmem:[#allocation5 + $0xd0] sm:$0xff]
        %v954 = vld [vmem:[#allocation5 + $0xd8] sm:$0xff]
        %v955 = vld [vmem:[#allocation5 + $0xe0] sm:$0xff]
        %v956 = vld [vmem:[#allocation5 + $0xe8] sm:$0xff]
        %v957 = vld [vmem:[#allocation5 + $0xf0] sm:$0xff]
        %v958 = vld [vmem:[#allocation5 + $0xf8] sm:$0xff]
        %v959 = vld [vmem:[#allocation5 + $0x100] sm:$0xff]
        %v960 = vld [vmem:[#allocation5 + $0x108] sm:$0xff]
        %v961 = vld [vmem:[#allocation5 + $0x110] sm:$0xff]
        %v962 = vld [vmem:[#allocation5 + $0x118] sm:$0xff]
        %v963 = vld [vmem:[#allocation5 + $0x120] sm:$0xff]
        %v964 = vld [vmem:[#allocation5 + $0x128] sm:$0xff]
        %v965 = vld [vmem:[#allocation5 + $0x130] sm:$0xff]
        %v966 = vld [vmem:[#allocation5 + $0x138] sm:$0xff]
        %v967 = vld [vmem:[#allocation5 + $0x140] sm:$0xff]
        %v968 = vld [vmem:[#allocation5 + $0x148] sm:$0xff]
        %v969 = vld [vmem:[#allocation5 + $0x150] sm:$0xff]
        %v970 = vld [vmem:[#allocation5 + $0x158] sm:$0xff]
        %v971 = vld [vmem:[#allocation5 + $0x160] sm:$0xff]
        %v972 = vld [vmem:[#allocation5 + $0x168] sm:$0xff]
        %v973 = vld [vmem:[#allocation5 + $0x170] sm:$0xff]
        %v974 = vld [vmem:[#allocation5 + $0x178] sm:$0xff]
        %v975 = vld [vmem:[#allocation5 + $0x180] sm:$0xff]
        %v976 = vld [vmem:[#allocation5 + $0x188] sm:$0xff]
        %v977 = vld [vmem:[#allocation5 + $0x190] sm:$0xff]
        %v978 = vld [vmem:[#allocation5 + $0x198] sm:$0xff]
        %v979 = vld [vmem:[#allocation5 + $0x1a0] sm:$0xff]
        %v980 = vld [vmem:[#allocation5 + $0x1a8] sm:$0xff]
        %v981 = vld [vmem:[#allocation5 + $0x1b0] sm:$0xff]
        %v982 = vld [vmem:[#allocation5 + $0x1b8] sm:$0xff]
        %v983 = vld [vmem:[#allocation5 + $0x1c0] sm:$0xff]
        %v984 = vld [vmem:[#allocation5 + $0x1c8] sm:$0xff]
        %v985 = vld [vmem:[#allocation5 + $0x1d0] sm:$0xff]
        %v986 = vld [vmem:[#allocation5 + $0x1d8] sm:$0xff]
        %v987 = vld [vmem:[#allocation5 + $0x1e0] sm:$0xff]
        %v988 = vld [vmem:[#allocation5 + $0x1e8] sm:$0xff]
        %v989 = vld [vmem:[#allocation5 + $0x1f0] sm:$0xff]
        %v990 = vld [vmem:[#allocation5 + $0x1f8] sm:$0xff]
        %v991 = vld [vmem:[%s6] sm:$0xf]
        %v993 = vlaneseq
        %v994 = vshrl.u32 %v993, 7
        %v995 = vsub.s32 0, %v994
        %v996 = vrot.slane %v991, %v995
        %v997 = vlaneseq
        %v998 = vshrl.u32 %v997, 7
        %v999 = vsub.s32 1, %v998
        %v1000 = vrot.slane %v991, %v999
        %v1001 = vlaneseq
        %v1002 = vshrl.u32 %v1001, 7
        %v1003 = vsub.s32 2, %v1002
        %v1004 = vrot.slane %v991, %v1003
        %v1005 = vlaneseq
        %v1006 = vshrl.u32 %v1005, 7
        %v1007 = vsub.s32 3, %v1006
        %v1008 = vrot.slane %v991, %v1007
        %1013 = vmatprep.subr.mxu0 %v928
        %1014 = vmatpush1.msra.mxu0 %v927
        %1015 = vmatprep.subr.mxu0 %v932
        %1016 = vmatpush1.msra.mxu0 %v931
        %1017 = vmatprep.subr.mxu0 %v936
        %1018 = vmatpush1.msra.mxu0 %v935
        %1019 = vmatprep.subr.mxu0 %v940
        %1020 = vmatpush1.msra.mxu0 %v939
        %1021 = vmatprep.subr.mxu0 %v944
        %1022 = vmatpush1.msra.mxu0 %v943
        %1023 = vmatprep.subr.mxu0 %v948
        %1024 = vmatpush1.msra.mxu0 %v947
        %1025 = vmatprep.subr.mxu0 %v952
        %1026 = vmatpush1.msra.mxu0 %v951
        %1027 = vmatprep.subr.mxu0 %v956
        %1028 = vmatpush1.msra.mxu0 %v955
        %1029 = vmatprep.subr.mxu0 %v960
        %1030 = vmatpush1.msra.mxu0 %v959
        %1031 = vmatprep.subr.mxu0 %v964
        %1032 = vmatpush1.msra.mxu0 %v963
        %1033 = vmatprep.subr.mxu0 %v968
        %1034 = vmatpush1.msra.mxu0 %v967
        %1035 = vmatprep.subr.mxu0 %v972
        %1036 = vmatpush1.msra.mxu0 %v971
        %1037 = vmatprep.subr.mxu0 %v976
        %1038 = vmatpush1.msra.mxu0 %v975
        %1039 = vmatprep.subr.mxu0 %v980
        %1040 = vmatpush1.msra.mxu0 %v979
        %1041 = vmatprep.subr.mxu0 %v984
        %1042 = vmatpush1.msra.mxu0 %v983
        %1043 = vmatprep.subr.mxu0 %v988
        %1044 = vmatpush1.msra.mxu0 %v987
        %1045 = vmatprep.subr.mxu0 0.0
        %1046 = vmatpush1.msra.mxu0 0.0
        %1047 = vmatprep.subr.mxu0 0.0
        %1048 = vmatpush1.msra.mxu0 0.0
        %1049 = vmatprep.subr.mxu0 0.0
        %1050 = vmatpush1.msra.mxu0 0.0
        %1051 = vmatprep.subr.mxu0 0.0
        %1052 = vmatpush1.msra.mxu0 0.0
        %1053 = vmatprep.subr.mxu0 0.0
        %1054 = vmatpush1.msra.mxu0 0.0
        %1055 = vmatprep.subr.mxu0 0.0
        %1056 = vmatpush1.msra.mxu0 0.0
        %1057 = vmatprep.subr.mxu0 0.0
        %1058 = vmatpush1.msra.mxu0 0.0
        %1059 = vmatprep.subr.mxu0 0.0
        %1060 = vmatpush1.msra.mxu0 0.0
        %1061 = vmatprep.subr.mxu0 0.0
        %1062 = vmatpush1.msra.mxu0 0.0
        %1063 = vmatprep.subr.mxu0 0.0
        %1064 = vmatpush1.msra.mxu0 0.0
        %1065 = vmatprep.subr.mxu0 0.0
        %1066 = vmatpush1.msra.mxu0 0.0
        %1067 = vmatprep.subr.mxu0 0.0
        %1068 = vmatpush1.msra.mxu0 0.0
        %1069 = vmatprep.subr.mxu0 0.0
        %1070 = vmatpush1.msra.mxu0 0.0
        %1071 = vmatprep.subr.mxu0 0.0
        %1072 = vmatpush1.msra.mxu0 0.0
        %1073 = vmatprep.subr.mxu0 0.0
        %1074 = vmatpush1.msra.mxu0 0.0
        %1075 = vmatprep.subr.mxu0 0.0
        %1076 = vmatpush1.msra.mxu0 0.0
        %1077 = vmatprep.mubr.f32.mxu0 0.0
        %1078 = vmatmul.mubr.f32.gmra.mrb[0].mxu0 %v924
        %v1079 = vpop.f32.mrb[0].mxu0
        %v1080 = vadd.f32 %v996, %v1079
        %v1081 = vpop.f32.mrb[0].mxu0
        %v1082 = vadd.f32 %v1000, %v1081
        %1083 = vmatprep.mubr.f32.mxu0 0.0
        %1084 = vmatmul.mubr.f32.gmra.mrb[0].mxu0 %v925
        %v1085 = vpop.f32.mrb[0].mxu0
        %v1086 = vadd.f32 %v996, %v1085
        %v1087 = vpop.f32.mrb[0].mxu0
        %v1088 = vadd.f32 %v1000, %v1087
        %1089 = vmatprep.mubr.f32.mxu0 0.0
        %1090 = vmatmul.mubr.f32.gmra.mrb[0].mxu0 %v926
        %v1091 = vpop.f32.mrb[0].mxu0
        %v1092 = vadd.f32 %v996, %v1091
        %v1093 = vpop.f32.mrb[0].mxu0
        %v1094 = vadd.f32 %v1000, %v1093
        %1095 = vdwg.mxu0
        %1096 = vmatprep.subr.mxu0 %v930
        %1097 = vmatpush1.msra.mxu0 %v929
        %1098 = vmatprep.subr.mxu0 %v934
        %1099 = vmatpush1.msra.mxu0 %v933
        %1100 = vmatprep.subr.mxu0 %v938
        %1101 = vmatpush1.msra.mxu0 %v937
        %1102 = vmatprep.subr.mxu0 %v942
        %1103 = vmatpush1.msra.mxu0 %v941
        %1104 = vmatprep.subr.mxu0 %v946
        %1105 = vmatpush1.msra.mxu0 %v945
        %1106 = vmatprep.subr.mxu0 %v950
        %1107 = vmatpush1.msra.mxu0 %v949
        %1108 = vmatprep.subr.mxu0 %v954
        %1109 = vmatpush1.msra.mxu0 %v953
        %1110 = vmatprep.subr.mxu0 %v958
        %1111 = vmatpush1.msra.mxu0 %v957
        %1112 = vmatprep.subr.mxu0 %v962
        %1113 = vmatpush1.msra.mxu0 %v961
        %1114 = vmatprep.subr.mxu0 %v966
        %1115 = vmatpush1.msra.mxu0 %v965
        %1116 = vmatprep.subr.mxu0 %v970
        %1117 = vmatpush1.msra.mxu0 %v969
        %1118 = vmatprep.subr.mxu0 %v974
        %1119 = vmatpush1.msra.mxu0 %v973
        %1120 = vmatprep.subr.mxu0 %v978
        %1121 = vmatpush1.msra.mxu0 %v977
        %1122 = vmatprep.subr.mxu0 %v982
        %1123 = vmatpush1.msra.mxu0 %v981
        %1124 = vmatprep.subr.mxu0 %v986
        %1125 = vmatpush1.msra.mxu0 %v985
        %1126 = vmatprep.subr.mxu0 %v990
        %1127 = vmatpush1.msra.mxu0 %v989
        %1128 = vmatprep.subr.mxu0 0.0
        %1129 = vmatpush1.msra.mxu0 0.0
        %1130 = vmatprep.subr.mxu0 0.0
        %1131 = vmatpush1.msra.mxu0 0.0
        %1132 = vmatprep.subr.mxu0 0.0
        %1133 = vmatpush1.msra.mxu0 0.0
        %1134 = vmatprep.subr.mxu0 0.0
        %1135 = vmatpush1.msra.mxu0 0.0
        %1136 = vmatprep.subr.mxu0 0.0
        %1137 = vmatpush1.msra.mxu0 0.0
        %1138 = vmatprep.subr.mxu0 0.0
        %1139 = vmatpush1.msra.mxu0 0.0
        %1140 = vmatprep.subr.mxu0 0.0
        %1141 = vmatpush1.msra.mxu0 0.0
        %1142 = vmatprep.subr.mxu0 0.0
        %1143 = vmatpush1.msra.mxu0 0.0
        %1144 = vmatprep.subr.mxu0 0.0
        %1145 = vmatpush1.msra.mxu0 0.0
        %1146 = vmatprep.subr.mxu0 0.0
        %1147 = vmatpush1.msra.mxu0 0.0
        %1148 = vmatprep.subr.mxu0 0.0
        %1149 = vmatpush1.msra.mxu0 0.0
        %1150 = vmatprep.subr.mxu0 0.0
        %1151 = vmatpush1.msra.mxu0 0.0
        %1152 = vmatprep.subr.mxu0 0.0
        %1153 = vmatpush1.msra.mxu0 0.0
        %1154 = vmatprep.subr.mxu0 0.0
        %1155 = vmatpush1.msra.mxu0 0.0
        %1156 = vmatprep.subr.mxu0 0.0
        %1157 = vmatpush1.msra.mxu0 0.0
        %1158 = vmatprep.subr.mxu0 0.0
        %1159 = vmatpush1.msra.mxu0 0.0
        %1160 = vmatprep.mubr.f32.mxu0 0.0
        %1161 = vmatmul.mubr.f32.gmra.mrb[0].mxu0 %v924
        %v1162 = vpop.f32.mrb[0].mxu0
        %v1163 = vadd.f32 %v1004, %v1162
        %v1164 = vpop.f32.mrb[0].mxu0
        %v1165 = vadd.f32 %v1008, %v1164
        %1166 = vmatprep.mubr.f32.mxu0 0.0
        %1167 = vmatmul.mubr.f32.gmra.mrb[0].mxu0 %v925
        %v1168 = vpop.f32.mrb[0].mxu0
        %v1169 = vadd.f32 %v1004, %v1168
        %v1170 = vpop.f32.mrb[0].mxu0
        %v1171 = vadd.f32 %v1008, %v1170
        %1172 = vmatprep.mubr.f32.mxu0 0.0
        %1173 = vmatmul.mubr.f32.gmra.mrb[0].mxu0 %v926
        %v1174 = vpop.f32.mrb[0].mxu0
        %v1175 = vadd.f32 %v1004, %v1174
        %v1176 = vpop.f32.mrb[0].mxu0
        %v1177 = vadd.f32 %v1008, %v1176
        %1178 = vdwg.mxu0
        %v1179 = vld [vmem:[#allocation7] sm:$0xff]
        %v1180 = vld [vmem:[#allocation7 + $0x8] sm:$0xff]
        %v1181 = vld [vmem:[#allocation7 + $0x10] sm:$0xff]
        %v1182 = vld [vmem:[#allocation7 + $0x18] sm:$0xff]
        %v1183 = vld [vmem:[#allocation7 + $0x20] sm:$0xff]
        %v1184 = vld [vmem:[#allocation7 + $0x28] sm:$0xff]
        %v1185 = vld [vmem:[#allocation7 + $0x30] sm:$0xff]
        %v1186 = vld [vmem:[#allocation7 + $0x38] sm:$0xff]
        %v1187 = vld [vmem:[#allocation7 + $0x40] sm:$0xff]
        %v1188 = vld [vmem:[#allocation7 + $0x48] sm:$0xff]
        %v1189 = vld [vmem:[#allocation7 + $0x50] sm:$0xff]
        %v1190 = vld [vmem:[#allocation7 + $0x58] sm:$0xff]
        %v1191 = vld [vmem:[#allocation7 + $0x60] sm:$0xff]
        %v1192 = vld [vmem:[#allocation7 + $0x68] sm:$0xff]
        %v1193 = vld [vmem:[#allocation7 + $0x70] sm:$0xff]
        %v1194 = vld [vmem:[#allocation7 + $0x78] sm:$0xff]
        %v1195 = vld [vmem:[#allocation7 + $0x80] sm:$0xff]
        %v1196 = vld [vmem:[#allocation7 + $0x88] sm:$0xff]
        %v1197 = vld [vmem:[#allocation7 + $0x90] sm:$0xff]
        %v1198 = vld [vmem:[#allocation7 + $0x98] sm:$0xff]
        %v1199 = vld [vmem:[#allocation7 + $0xa0] sm:$0xff]
        %v1200 = vld [vmem:[#allocation7 + $0xa8] sm:$0xff]
        %v1201 = vld [vmem:[#allocation7 + $0xb0] sm:$0xff]
        %v1202 = vld [vmem:[#allocation7 + $0xb8] sm:$0xff]
        %v1203 = vld [vmem:[#allocation7 + $0xc0] sm:$0xff]
        %v1204 = vld [vmem:[#allocation7 + $0xc8] sm:$0xff]
        %v1205 = vld [vmem:[#allocation7 + $0xd0] sm:$0xff]
        %v1206 = vld [vmem:[#allocation7 + $0xd8] sm:$0xff]
        %v1207 = vld [vmem:[#allocation7 + $0xe0] sm:$0xff]
        %v1208 = vld [vmem:[#allocation7 + $0xe8] sm:$0xff]
        %v1209 = vld [vmem:[#allocation7 + $0xf0] sm:$0xff]
        %v1210 = vld [vmem:[#allocation7 + $0xf8] sm:$0xff]
        %v1211 = vld [vmem:[#allocation7 + $0x100] sm:$0xff]
        %v1212 = vld [vmem:[#allocation7 + $0x108] sm:$0xff]
        %v1213 = vld [vmem:[#allocation7 + $0x110] sm:$0xff]
        %v1214 = vld [vmem:[#allocation7 + $0x118] sm:$0xff]
        %v1215 = vld [vmem:[#allocation7 + $0x120] sm:$0xff]
        %v1216 = vld [vmem:[#allocation7 + $0x128] sm:$0xff]
        %v1217 = vld [vmem:[#allocation7 + $0x130] sm:$0xff]
        %v1218 = vld [vmem:[#allocation7 + $0x138] sm:$0xff]
        %v1219 = vld [vmem:[#allocation7 + $0x140] sm:$0xff]
        %v1220 = vld [vmem:[#allocation7 + $0x148] sm:$0xff]
        %v1221 = vld [vmem:[#allocation7 + $0x150] sm:$0xff]
        %v1222 = vld [vmem:[#allocation7 + $0x158] sm:$0xff]
        %v1223 = vld [vmem:[#allocation7 + $0x160] sm:$0xff]
        %v1224 = vld [vmem:[#allocation7 + $0x168] sm:$0xff]
        %v1225 = vld [vmem:[#allocation7 + $0x170] sm:$0xff]
        %v1226 = vld [vmem:[#allocation7 + $0x178] sm:$0xff]
        %v1227 = vld [vmem:[#allocation7 + $0x180] sm:$0xff]
        %v1228 = vld [vmem:[#allocation7 + $0x188] sm:$0xff]
        %v1229 = vld [vmem:[#allocation7 + $0x190] sm:$0xff]
        %v1230 = vld [vmem:[#allocation7 + $0x198] sm:$0xff]
        %v1231 = vld [vmem:[#allocation7 + $0x1a0] sm:$0xff]
        %v1232 = vld [vmem:[#allocation7 + $0x1a8] sm:$0xff]
        %v1233 = vld [vmem:[#allocation7 + $0x1b0] sm:$0xff]
        %v1234 = vld [vmem:[#allocation7 + $0x1b8] sm:$0xff]
        %v1235 = vld [vmem:[#allocation7 + $0x1c0] sm:$0xff]
        %v1236 = vld [vmem:[#allocation7 + $0x1c8] sm:$0xff]
        %v1237 = vld [vmem:[#allocation7 + $0x1d0] sm:$0xff]
        %v1238 = vld [vmem:[#allocation7 + $0x1d8] sm:$0xff]
        %v1239 = vld [vmem:[#allocation7 + $0x1e0] sm:$0xff]
        %v1240 = vld [vmem:[#allocation7 + $0x1e8] sm:$0xff]
        %v1241 = vld [vmem:[#allocation7 + $0x1f0] sm:$0xff]
        %v1242 = vld [vmem:[#allocation7 + $0x1f8] sm:$0xff]
        %v1243 = vld [vmem:[%s8] sm:$0xf]
        %v1245 = vlaneseq
        %v1246 = vshrl.u32 %v1245, 7
        %v1247 = vsub.s32 0, %v1246
        %v1248 = vrot.slane %v1243, %v1247
        %v1249 = vlaneseq
        %v1250 = vshrl.u32 %v1249, 7
        %v1251 = vsub.s32 1, %v1250
        %v1252 = vrot.slane %v1243, %v1251
        %v1253 = vlaneseq
        %v1254 = vshrl.u32 %v1253, 7
        %v1255 = vsub.s32 2, %v1254
        %v1256 = vrot.slane %v1243, %v1255
        %v1257 = vlaneseq
        %v1258 = vshrl.u32 %v1257, 7
        %v1259 = vsub.s32 3, %v1258
        %v1260 = vrot.slane %v1243, %v1259
        %1265 = vmatprep.subr.mxu0 %v1180
        %1266 = vmatpush1.msra.mxu0 %v1179
        %1267 = vmatprep.subr.mxu0 %v1184
        %1268 = vmatpush1.msra.mxu0 %v1183
        %1269 = vmatprep.subr.mxu0 %v1188
        %1270 = vmatpush1.msra.mxu0 %v1187
        %1271 = vmatprep.subr.mxu0 %v1192
        %1272 = vmatpush1.msra.mxu0 %v1191
        %1273 = vmatprep.subr.mxu0 %v1196
        %1274 = vmatpush1.msra.mxu0 %v1195
        %1275 = vmatprep.subr.mxu0 %v1200
        %1276 = vmatpush1.msra.mxu0 %v1199
        %1277 = vmatprep.subr.mxu0 %v1204
        %1278 = vmatpush1.msra.mxu0 %v1203
        %1279 = vmatprep.subr.mxu0 %v1208
        %1280 = vmatpush1.msra.mxu0 %v1207
        %1281 = vmatprep.subr.mxu0 %v1212
        %1282 = vmatpush1.msra.mxu0 %v1211
        %1283 = vmatprep.subr.mxu0 %v1216
        %1284 = vmatpush1.msra.mxu0 %v1215
        %1285 = vmatprep.subr.mxu0 %v1220
        %1286 = vmatpush1.msra.mxu0 %v1219
        %1287 = vmatprep.subr.mxu0 %v1224
        %1288 = vmatpush1.msra.mxu0 %v1223
        %1289 = vmatprep.subr.mxu0 %v1228
        %1290 = vmatpush1.msra.mxu0 %v1227
        %1291 = vmatprep.subr.mxu0 %v1232
        %1292 = vmatpush1.msra.mxu0 %v1231
        %1293 = vmatprep.subr.mxu0 %v1236
        %1294 = vmatpush1.msra.mxu0 %v1235
        %1295 = vmatprep.subr.mxu0 %v1240
        %1296 = vmatpush1.msra.mxu0 %v1239
        %1297 = vmatprep.subr.mxu0 0.0
        %1298 = vmatpush1.msra.mxu0 0.0
        %1299 = vmatprep.subr.mxu0 0.0
        %1300 = vmatpush1.msra.mxu0 0.0
        %1301 = vmatprep.subr.mxu0 0.0
        %1302 = vmatpush1.msra.mxu0 0.0
        %1303 = vmatprep.subr.mxu0 0.0
        %1304 = vmatpush1.msra.mxu0 0.0
        %1305 = vmatprep.subr.mxu0 0.0
        %1306 = vmatpush1.msra.mxu0 0.0
        %1307 = vmatprep.subr.mxu0 0.0
        %1308 = vmatpush1.msra.mxu0 0.0
        %1309 = vmatprep.subr.mxu0 0.0
        %1310 = vmatpush1.msra.mxu0 0.0
        %1311 = vmatprep.subr.mxu0 0.0
        %1312 = vmatpush1.msra.mxu0 0.0
        %1313 = vmatprep.subr.mxu0 0.0
        %1314 = vmatpush1.msra.mxu0 0.0
        %1315 = vmatprep.subr.mxu0 0.0
        %1316 = vmatpush1.msra.mxu0 0.0
        %1317 = vmatprep.subr.mxu0 0.0
        %1318 = vmatpush1.msra.mxu0 0.0
        %1319 = vmatprep.subr.mxu0 0.0
        %1320 = vmatpush1.msra.mxu0 0.0
        %1321 = vmatprep.subr.mxu0 0.0
        %1322 = vmatpush1.msra.mxu0 0.0
        %1323 = vmatprep.subr.mxu0 0.0
        %1324 = vmatpush1.msra.mxu0 0.0
        %1325 = vmatprep.subr.mxu0 0.0
        %1326 = vmatpush1.msra.mxu0 0.0
        %1327 = vmatprep.subr.mxu0 0.0
        %1328 = vmatpush1.msra.mxu0 0.0
        %1329 = vmatprep.mubr.f32.mxu0 0.0
        %1330 = vmatmul.mubr.f32.gmra.mrb[0].mxu0 %v924
        %v1331 = vpop.f32.mrb[0].mxu0
        %v1332 = vadd.f32 %v1248, %v1331
        %v1333 = vpop.f32.mrb[0].mxu0
        %v1334 = vadd.f32 %v1252, %v1333
        %1335 = vmatprep.mubr.f32.mxu0 0.0
        %1336 = vmatmul.mubr.f32.gmra.mrb[0].mxu0 %v925
        %v1337 = vpop.f32.mrb[0].mxu0
        %v1338 = vadd.f32 %v1248, %v1337
        %v1339 = vpop.f32.mrb[0].mxu0
        %v1340 = vadd.f32 %v1252, %v1339
        %1341 = vmatprep.mubr.f32.mxu0 0.0
        %1342 = vmatmul.mubr.f32.gmra.mrb[0].mxu0 %v926
        %v1343 = vpop.f32.mrb[0].mxu0
        %v1344 = vadd.f32 %v1248, %v1343
        %v1345 = vpop.f32.mrb[0].mxu0
        %v1346 = vadd.f32 %v1252, %v1345
        %1347 = vdwg.mxu0
        %1348 = vmatprep.subr.mxu0 %v1182
        %1349 = vmatpush1.msra.mxu0 %v1181
        %1350 = vmatprep.subr.mxu0 %v1186
        %1351 = vmatpush1.msra.mxu0 %v1185
        %1352 = vmatprep.subr.mxu0 %v1190
        %1353 = vmatpush1.msra.mxu0 %v1189
        %1354 = vmatprep.subr.mxu0 %v1194
        %1355 = vmatpush1.msra.mxu0 %v1193
        %1356 = vmatprep.subr.mxu0 %v1198
        %1357 = vmatpush1.msra.mxu0 %v1197
        %1358 = vmatprep.subr.mxu0 %v1202
        %1359 = vmatpush1.msra.mxu0 %v1201
        %1360 = vmatprep.subr.mxu0 %v1206
        %1361 = vmatpush1.msra.mxu0 %v1205
        %1362 = vmatprep.subr.mxu0 %v1210
        %1363 = vmatpush1.msra.mxu0 %v1209
        %1364 = vmatprep.subr.mxu0 %v1214
        %1365 = vmatpush1.msra.mxu0 %v1213
        %1366 = vmatprep.subr.mxu0 %v1218
        %1367 = vmatpush1.msra.mxu0 %v1217
        %1368 = vmatprep.subr.mxu0 %v1222
        %1369 = vmatpush1.msra.mxu0 %v1221
        %1370 = vmatprep.subr.mxu0 %v1226
        %1371 = vmatpush1.msra.mxu0 %v1225
        %1372 = vmatprep.subr.mxu0 %v1230
        %1373 = vmatpush1.msra.mxu0 %v1229
        %1374 = vmatprep.subr.mxu0 %v1234
        %1375 = vmatpush1.msra.mxu0 %v1233
        %1376 = vmatprep.subr.mxu0 %v1238
        %1377 = vmatpush1.msra.mxu0 %v1237
        %1378 = vmatprep.subr.mxu0 %v1242
        %1379 = vmatpush1.msra.mxu0 %v1241
        %1380 = vmatprep.subr.mxu0 0.0
        %1381 = vmatpush1.msra.mxu0 0.0
        %1382 = vmatprep.subr.mxu0 0.0
        %1383 = vmatpush1.msra.mxu0 0.0
        %1384 = vmatprep.subr.mxu0 0.0
        %1385 = vmatpush1.msra.mxu0 0.0
        %1386 = vmatprep.subr.mxu0 0.0
        %1387 = vmatpush1.msra.mxu0 0.0
        %1388 = vmatprep.subr.mxu0 0.0
        %1389 = vmatpush1.msra.mxu0 0.0
        %1390 = vmatprep.subr.mxu0 0.0
        %1391 = vmatpush1.msra.mxu0 0.0
        %1392 = vmatprep.subr.mxu0 0.0
        %1393 = vmatpush1.msra.mxu0 0.0
        %1394 = vmatprep.subr.mxu0 0.0
        %1395 = vmatpush1.msra.mxu0 0.0
        %1396 = vmatprep.subr.mxu0 0.0
        %1397 = vmatpush1.msra.mxu0 0.0
        %1398 = vmatprep.subr.mxu0 0.0
        %1399 = vmatpush1.msra.mxu0 0.0
        %1400 = vmatprep.subr.mxu0 0.0
        %1401 = vmatpush1.msra.mxu0 0.0
        %1402 = vmatprep.subr.mxu0 0.0
        %1403 = vmatpush1.msra.mxu0 0.0
        %1404 = vmatprep.subr.mxu0 0.0
        %1405 = vmatpush1.msra.mxu0 0.0
        %1406 = vmatprep.subr.mxu0 0.0
        %1407 = vmatpush1.msra.mxu0 0.0
        %1408 = vmatprep.subr.mxu0 0.0
        %1409 = vmatpush1.msra.mxu0 0.0
        %1410 = vmatprep.subr.mxu0 0.0
        %1411 = vmatpush1.msra.mxu0 0.0
        %1412 = vmatprep.mubr.f32.mxu0 0.0
        %1413 = vmatmul.mubr.f32.gmra.mrb[0].mxu0 %v924
        %v1414 = vpop.f32.mrb[0].mxu0
        %v1415 = vadd.f32 %v1256, %v1414
        %v1416 = vpop.f32.mrb[0].mxu0
        %v1417 = vadd.f32 %v1260, %v1416
        %1418 = vmatprep.mubr.f32.mxu0 0.0
        %1419 = vmatmul.mubr.f32.gmra.mrb[0].mxu0 %v925
        %v1420 = vpop.f32.mrb[0].mxu0
        %v1421 = vadd.f32 %v1256, %v1420
        %v1422 = vpop.f32.mrb[0].mxu0
        %v1423 = vadd.f32 %v1260, %v1422
        %1424 = vmatprep.mubr.f32.mxu0 0.0
        %1425 = vmatmul.mubr.f32.gmra.mrb[0].mxu0 %v926
        %v1426 = vpop.f32.mrb[0].mxu0
        %v1427 = vadd.f32 %v1256, %v1426
        %v1428 = vpop.f32.mrb[0].mxu0
        %v1429 = vadd.f32 %v1260, %v1428
        %1430 = vdwg.mxu0
        %v1431 = vld [vmem:[#allocation8] sm:$0xff]
        %v1432 = vld [vmem:[#allocation8 + $0x8] sm:$0xff]
        %v1433 = vld [vmem:[#allocation8 + $0x10] sm:$0xff]
        %v1434 = vld [vmem:[#allocation8 + $0x18] sm:$0xff]
        %v1435 = vld [vmem:[#allocation8 + $0x20] sm:$0xff]
        %v1436 = vld [vmem:[#allocation8 + $0x28] sm:$0xff]
        %v1437 = vld [vmem:[#allocation8 + $0x30] sm:$0xff]
        %v1438 = vld [vmem:[#allocation8 + $0x38] sm:$0xff]
        %v1439 = vld [vmem:[#allocation8 + $0x40] sm:$0xff]
        %v1440 = vld [vmem:[#allocation8 + $0x48] sm:$0xff]
        %v1441 = vld [vmem:[#allocation8 + $0x50] sm:$0xff]
        %v1442 = vld [vmem:[#allocation8 + $0x58] sm:$0xff]
        %v1443 = vld [vmem:[#allocation8 + $0x60] sm:$0xff]
        %v1444 = vld [vmem:[#allocation8 + $0x68] sm:$0xff]
        %v1445 = vld [vmem:[#allocation8 + $0x70] sm:$0xff]
        %v1446 = vld [vmem:[#allocation8 + $0x78] sm:$0xff]
        %v1447 = vld [vmem:[#allocation8 + $0x80] sm:$0xff]
        %v1448 = vld [vmem:[#allocation8 + $0x88] sm:$0xff]
        %v1449 = vld [vmem:[#allocation8 + $0x90] sm:$0xff]
        %v1450 = vld [vmem:[#allocation8 + $0x98] sm:$0xff]
        %v1451 = vld [vmem:[#allocation8 + $0xa0] sm:$0xff]
        %v1452 = vld [vmem:[#allocation8 + $0xa8] sm:$0xff]
        %v1453 = vld [vmem:[#allocation8 + $0xb0] sm:$0xff]
        %v1454 = vld [vmem:[#allocation8 + $0xb8] sm:$0xff]
        %v1455 = vld [vmem:[#allocation8 + $0xc0] sm:$0xff]
        %v1456 = vld [vmem:[#allocation8 + $0xc8] sm:$0xff]
        %v1457 = vld [vmem:[#allocation8 + $0xd0] sm:$0xff]
        %v1458 = vld [vmem:[#allocation8 + $0xd8] sm:$0xff]
        %v1459 = vld [vmem:[#allocation8 + $0xe0] sm:$0xff]
        %v1460 = vld [vmem:[#allocation8 + $0xe8] sm:$0xff]
        %v1461 = vld [vmem:[#allocation8 + $0xf0] sm:$0xff]
        %v1462 = vld [vmem:[#allocation8 + $0xf8] sm:$0xff]
        %v1463 = vld [vmem:[#allocation8 + $0x100] sm:$0xff]
        %v1464 = vld [vmem:[#allocation8 + $0x108] sm:$0xff]
        %v1465 = vld [vmem:[#allocation8 + $0x110] sm:$0xff]
        %v1466 = vld [vmem:[#allocation8 + $0x118] sm:$0xff]
        %v1467 = vld [vmem:[#allocation8 + $0x120] sm:$0xff]
        %v1468 = vld [vmem:[#allocation8 + $0x128] sm:$0xff]
        %v1469 = vld [vmem:[#allocation8 + $0x130] sm:$0xff]
        %v1470 = vld [vmem:[#allocation8 + $0x138] sm:$0xff]
        %v1471 = vld [vmem:[#allocation8 + $0x140] sm:$0xff]
        %v1472 = vld [vmem:[#allocation8 + $0x148] sm:$0xff]
        %v1473 = vld [vmem:[#allocation8 + $0x150] sm:$0xff]
        %v1474 = vld [vmem:[#allocation8 + $0x158] sm:$0xff]
        %v1475 = vld [vmem:[#allocation8 + $0x160] sm:$0xff]
        %v1476 = vld [vmem:[#allocation8 + $0x168] sm:$0xff]
        %v1477 = vld [vmem:[#allocation8 + $0x170] sm:$0xff]
        %v1478 = vld [vmem:[#allocation8 + $0x178] sm:$0xff]
        %v1479 = vld [vmem:[#allocation8 + $0x180] sm:$0xff]
        %v1480 = vld [vmem:[#allocation8 + $0x188] sm:$0xff]
        %v1481 = vld [vmem:[#allocation8 + $0x190] sm:$0xff]
        %v1482 = vld [vmem:[#allocation8 + $0x198] sm:$0xff]
        %v1483 = vld [vmem:[#allocation8 + $0x1a0] sm:$0xff]
        %v1484 = vld [vmem:[#allocation8 + $0x1a8] sm:$0xff]
        %v1485 = vld [vmem:[#allocation8 + $0x1b0] sm:$0xff]
        %v1486 = vld [vmem:[#allocation8 + $0x1b8] sm:$0xff]
        %v1487 = vld [vmem:[#allocation8 + $0x1c0] sm:$0xff]
        %v1488 = vld [vmem:[#allocation8 + $0x1c8] sm:$0xff]
        %v1489 = vld [vmem:[#allocation8 + $0x1d0] sm:$0xff]
        %v1490 = vld [vmem:[#allocation8 + $0x1d8] sm:$0xff]
        %v1491 = vld [vmem:[#allocation8 + $0x1e0] sm:$0xff]
        %v1492 = vld [vmem:[#allocation8 + $0x1e8] sm:$0xff]
        %v1493 = vld [vmem:[#allocation8 + $0x1f0] sm:$0xff]
        %v1494 = vld [vmem:[#allocation8 + $0x1f8] sm:$0xff]
        %1495 = vmatprep.subr.mxu0 %v1432
        %1496 = vmatpush1.msra.mxu0 %v1431
        %1497 = vmatprep.subr.mxu0 %v1436
        %1498 = vmatpush1.msra.mxu0 %v1435
        %1499 = vmatprep.subr.mxu0 %v1440
        %1500 = vmatpush1.msra.mxu0 %v1439
        %1501 = vmatprep.subr.mxu0 %v1444
        %1502 = vmatpush1.msra.mxu0 %v1443
        %1503 = vmatprep.subr.mxu0 %v1448
        %1504 = vmatpush1.msra.mxu0 %v1447
        %1505 = vmatprep.subr.mxu0 %v1452
        %1506 = vmatpush1.msra.mxu0 %v1451
        %1507 = vmatprep.subr.mxu0 %v1456
        %1508 = vmatpush1.msra.mxu0 %v1455
        %1509 = vmatprep.subr.mxu0 %v1460
        %1510 = vmatpush1.msra.mxu0 %v1459
        %1511 = vmatprep.subr.mxu0 %v1464
        %1512 = vmatpush1.msra.mxu0 %v1463
        %1513 = vmatprep.subr.mxu0 %v1468
        %1514 = vmatpush1.msra.mxu0 %v1467
        %1515 = vmatprep.subr.mxu0 %v1472
        %1516 = vmatpush1.msra.mxu0 %v1471
        %1517 = vmatprep.subr.mxu0 %v1476
        %1518 = vmatpush1.msra.mxu0 %v1475
        %1519 = vmatprep.subr.mxu0 %v1480
        %1520 = vmatpush1.msra.mxu0 %v1479
        %1521 = vmatprep.subr.mxu0 %v1484
        %1522 = vmatpush1.msra.mxu0 %v1483
        %1523 = vmatprep.subr.mxu0 %v1488
        %1524 = vmatpush1.msra.mxu0 %v1487
        %1525 = vmatprep.subr.mxu0 %v1492
        %1526 = vmatpush1.msra.mxu0 %v1491
        %1527 = vmatprep.subr.mxu0 0.0
        %1528 = vmatpush1.msra.mxu0 0.0
        %1529 = vmatprep.subr.mxu0 0.0
        %1530 = vmatpush1.msra.mxu0 0.0
        %1531 = vmatprep.subr.mxu0 0.0
        %1532 = vmatpush1.msra.mxu0 0.0
        %1533 = vmatprep.subr.mxu0 0.0
        %1534 = vmatpush1.msra.mxu0 0.0
        %1535 = vmatprep.subr.mxu0 0.0
        %1536 = vmatpush1.msra.mxu0 0.0
        %1537 = vmatprep.subr.mxu0 0.0
        %1538 = vmatpush1.msra.mxu0 0.0
        %1539 = vmatprep.subr.mxu0 0.0
        %1540 = vmatpush1.msra.mxu0 0.0
        %1541 = vmatprep.subr.mxu0 0.0
        %1542 = vmatpush1.msra.mxu0 0.0
        %1543 = vmatprep.subr.mxu0 0.0
        %1544 = vmatpush1.msra.mxu0 0.0
        %1545 = vmatprep.subr.mxu0 0.0
        %1546 = vmatpush1.msra.mxu0 0.0
        %1547 = vmatprep.subr.mxu0 0.0
        %1548 = vmatpush1.msra.mxu0 0.0
        %1549 = vmatprep.subr.mxu0 0.0
        %1550 = vmatpush1.msra.mxu0 0.0
        %1551 = vmatprep.subr.mxu0 0.0
        %1552 = vmatpush1.msra.mxu0 0.0
        %1553 = vmatprep.subr.mxu0 0.0
        %1554 = vmatpush1.msra.mxu0 0.0
        %1555 = vmatprep.subr.mxu0 0.0
        %1556 = vmatpush1.msra.mxu0 0.0
        %1557 = vmatprep.subr.mxu0 0.0
        %1558 = vmatpush1.msra.mxu0 0.0
        %1559 = vmatprep.mubr.f32.mxu0 0.0
        %1560 = vmatmul.mubr.f32.gmra.mrb[0].mxu0 %v924
        %v1561 = vpop.f32.mrb[0].mxu0
        %v1562 = vadd.f32 0.0, %v1561
        %v1563 = vpop.f32.mrb[0].mxu0
        %v1564 = vadd.f32 0.0, %v1563
        %1565 = vmatprep.mubr.f32.mxu0 0.0
        %1566 = vmatmul.mubr.f32.gmra.mrb[0].mxu0 %v925
        %v1567 = vpop.f32.mrb[0].mxu0
        %v1568 = vadd.f32 0.0, %v1567
        %v1569 = vpop.f32.mrb[0].mxu0
        %v1570 = vadd.f32 0.0, %v1569
        %1571 = vmatprep.mubr.f32.mxu0 0.0
        %1572 = vmatmul.mubr.f32.gmra.mrb[0].mxu0 %v926
        %v1573 = vpop.f32.mrb[0].mxu0
        %v1574 = vadd.f32 0.0, %v1573
        %v1575 = vpop.f32.mrb[0].mxu0
        %v1576 = vadd.f32 0.0, %v1575
        %1577 = vdwg.mxu0
        %1578 = vmatprep.subr.mxu0 %v1434
        %1579 = vmatpush1.msra.mxu0 %v1433
        %1580 = vmatprep.subr.mxu0 %v1438
        %1581 = vmatpush1.msra.mxu0 %v1437
        %1582 = vmatprep.subr.mxu0 %v1442
        %1583 = vmatpush1.msra.mxu0 %v1441
        %1584 = vmatprep.subr.mxu0 %v1446
        %1585 = vmatpush1.msra.mxu0 %v1445
        %1586 = vmatprep.subr.mxu0 %v1450
        %1587 = vmatpush1.msra.mxu0 %v1449
        %1588 = vmatprep.subr.mxu0 %v1454
        %1589 = vmatpush1.msra.mxu0 %v1453
        %1590 = vmatprep.subr.mxu0 %v1458
        %1591 = vmatpush1.msra.mxu0 %v1457
        %1592 = vmatprep.subr.mxu0 %v1462
        %1593 = vmatpush1.msra.mxu0 %v1461
        %1594 = vmatprep.subr.mxu0 %v1466
        %1595 = vmatpush1.msra.mxu0 %v1465
        %1596 = vmatprep.subr.mxu0 %v1470
        %1597 = vmatpush1.msra.mxu0 %v1469
        %1598 = vmatprep.subr.mxu0 %v1474
        %1599 = vmatpush1.msra.mxu0 %v1473
        %1600 = vmatprep.subr.mxu0 %v1478
        %1601 = vmatpush1.msra.mxu0 %v1477
        %1602 = vmatprep.subr.mxu0 %v1482
        %1603 = vmatpush1.msra.mxu0 %v1481
        %1604 = vmatprep.subr.mxu0 %v1486
        %1605 = vmatpush1.msra.mxu0 %v1485
        %1606 = vmatprep.subr.mxu0 %v1490
        %1607 = vmatpush1.msra.mxu0 %v1489
        %1608 = vmatprep.subr.mxu0 %v1494
        %1609 = vmatpush1.msra.mxu0 %v1493
        %1610 = vmatprep.subr.mxu0 0.0
        %1611 = vmatpush1.msra.mxu0 0.0
        %1612 = vmatprep.subr.mxu0 0.0
        %1613 = vmatpush1.msra.mxu0 0.0
        %1614 = vmatprep.subr.mxu0 0.0
        %1615 = vmatpush1.msra.mxu0 0.0
        %1616 = vmatprep.subr.mxu0 0.0
        %1617 = vmatpush1.msra.mxu0 0.0
        %1618 = vmatprep.subr.mxu0 0.0
        %1619 = vmatpush1.msra.mxu0 0.0
        %1620 = vmatprep.subr.mxu0 0.0
        %1621 = vmatpush1.msra.mxu0 0.0
        %1622 = vmatprep.subr.mxu0 0.0
        %1623 = vmatpush1.msra.mxu0 0.0
        %1624 = vmatprep.subr.mxu0 0.0
        %1625 = vmatpush1.msra.mxu0 0.0
        %1626 = vmatprep.subr.mxu0 0.0
        %1627 = vmatpush1.msra.mxu0 0.0
        %1628 = vmatprep.subr.mxu0 0.0
        %1629 = vmatpush1.msra.mxu0 0.0
        %1630 = vmatprep.subr.mxu0 0.0
        %1631 = vmatpush1.msra.mxu0 0.0
        %1632 = vmatprep.subr.mxu0 0.0
        %1633 = vmatpush1.msra.mxu0 0.0
        %1634 = vmatprep.subr.mxu0 0.0
        %1635 = vmatpush1.msra.mxu0 0.0
        %1636 = vmatprep.subr.mxu0 0.0
        %1637 = vmatpush1.msra.mxu0 0.0
        %1638 = vmatprep.subr.mxu0 0.0
        %1639 = vmatpush1.msra.mxu0 0.0
        %1640 = vmatprep.subr.mxu0 0.0
        %1641 = vmatpush1.msra.mxu0 0.0
        %1642 = vmatprep.mubr.f32.mxu0 0.0
        %1643 = vmatmul.mubr.f32.gmra.mrb[0].mxu0 %v924
        %v1644 = vpop.f32.mrb[0].mxu0
        %v1645 = vadd.f32 0.0, %v1644
        %v1646 = vpop.f32.mrb[0].mxu0
        %v1647 = vadd.f32 0.0, %v1646
        %1648 = vmatprep.mubr.f32.mxu0 0.0
        %1649 = vmatmul.mubr.f32.gmra.mrb[0].mxu0 %v925
        %v1650 = vpop.f32.mrb[0].mxu0
        %v1651 = vadd.f32 0.0, %v1650
        %v1652 = vpop.f32.mrb[0].mxu0
        %v1653 = vadd.f32 0.0, %v1652
        %1654 = vmatprep.mubr.f32.mxu0 0.0
        %1655 = vmatmul.mubr.f32.gmra.mrb[0].mxu0 %v926
        %v1656 = vpop.f32.mrb[0].mxu0
        %v1657 = vadd.f32 0.0, %v1656
        %v1658 = vpop.f32.mrb[0].mxu0
        %v1659 = vadd.f32 0.0, %v1658
        %1660 = vdwg.mxu0
        %1661 = vmatprep.subr.mxu0 0.0
        %1662 = vmatpush1.xpose.msra.mxu0 %v1332
        %1663 = vmatprep.subr.mxu0 0.0
        %1664 = vmatpush1.xpose.msra.mxu0 %v1338
        %1665 = vmatprep.subr.mxu0 0.0
        %1666 = vmatpush1.xpose.msra.mxu0 %v1344
        %1667 = vmatprep.subr.mxu0 0.0
        %1668 = vmatpush1.xpose.msra.mxu0 0.0
        %1669 = vmatprep.subr.mxu0 0.0
        %1670 = vmatpush1.xpose.msra.mxu0 0.0
        %1671 = vmatprep.subr.mxu0 0.0
        %1672 = vmatpush1.xpose.msra.mxu0 0.0
        %1673 = vmatprep.subr.mxu0 0.0
        %1674 = vmatpush1.xpose.msra.mxu0 0.0
        %1675 = vmatprep.subr.mxu0 0.0
        %1676 = vmatpush1.xpose.msra.mxu0 0.0
        %1677 = vmatprep.subr.mxu0 0.0
        %1678 = vmatpush1.xpose.msra.mxu0 0.0
        %1679 = vmatprep.subr.mxu0 0.0
        %1680 = vmatpush1.xpose.msra.mxu0 0.0
        %1681 = vmatprep.subr.mxu0 0.0
        %1682 = vmatpush1.xpose.msra.mxu0 0.0
        %1683 = vmatprep.subr.mxu0 0.0
        %1684 = vmatpush1.xpose.msra.mxu0 0.0
        %1685 = vmatprep.subr.mxu0 0.0
        %1686 = vmatpush1.xpose.msra.mxu0 0.0
        %1687 = vmatprep.subr.mxu0 0.0
        %1688 = vmatpush1.xpose.msra.mxu0 0.0
        %1689 = vmatprep.subr.mxu0 0.0
        %1690 = vmatpush1.xpose.msra.mxu0 0.0
        %1691 = vmatprep.subr.mxu0 0.0
        %1692 = vmatpush1.xpose.msra.mxu0 0.0
        %1693 = vmatprep.subr.mxu0 0.0
        %1694 = vmatpush1.xpose.msra.mxu0 0.0
        %1695 = vmatprep.subr.mxu0 0.0
        %1696 = vmatpush1.xpose.msra.mxu0 0.0
        %1697 = vmatprep.subr.mxu0 0.0
        %1698 = vmatpush1.xpose.msra.mxu0 0.0
        %1699 = vmatprep.subr.mxu0 0.0
        %1700 = vmatpush1.xpose.msra.mxu0 0.0
        %1701 = vmatprep.subr.mxu0 0.0
        %1702 = vmatpush1.xpose.msra.mxu0 0.0
        %1703 = vmatprep.subr.mxu0 0.0
        %1704 = vmatpush1.xpose.msra.mxu0 0.0
        %1705 = vmatprep.subr.mxu0 0.0
        %1706 = vmatpush1.xpose.msra.mxu0 0.0
        %1707 = vmatprep.subr.mxu0 0.0
        %1708 = vmatpush1.xpose.msra.mxu0 0.0
        %1709 = vmatprep.subr.mxu0 0.0
        %1710 = vmatpush1.xpose.msra.mxu0 0.0
        %1711 = vmatprep.subr.mxu0 0.0
        %1712 = vmatpush1.xpose.msra.mxu0 0.0
        %1713 = vmatprep.subr.mxu0 0.0
        %1714 = vmatpush1.xpose.msra.mxu0 0.0
        %1715 = vmatprep.subr.mxu0 0.0
        %1716 = vmatpush1.xpose.msra.mxu0 0.0
        %1717 = vmatprep.subr.mxu0 0.0
        %1718 = vmatpush1.xpose.msra.mxu0 0.0
        %1719 = vmatprep.subr.mxu0 0.0
        %1720 = vmatpush1.xpose.msra.mxu0 0.0
        %1721 = vmatprep.subr.mxu0 0.0
        %1722 = vmatpush1.xpose.msra.mxu0 0.0
        %1723 = vmatprep.subr.mxu0 0.0
        %1724 = vmatpush1.xpose.msra.mxu0 0.0
        %1725 = vmatprep.mubr.f32.mxu0 0.0
        %1726 = vmatmul.mubr.f32.gmra.mrb[0].mxu0 %v1080
        %v1727 = vpop.f32.mrb[0].mxu0
        %v1728 = vadd.f32 0.0, %v1727
        %v1729 = vpop.f32.mrb[0].mxu0
        %1730 = vmatprep.mubr.f32.mxu0 0.0
        %1731 = vmatmul.mubr.f32.gmra.mrb[0].mxu0 %v1086
        %v1732 = vpop.f32.mrb[0].mxu0
        %v1733 = vadd.f32 0.0, %v1732
        %v1734 = vpop.f32.mrb[0].mxu0
        %1735 = vmatprep.mubr.f32.mxu0 0.0
        %1736 = vmatmul.mubr.f32.gmra.mrb[0].mxu0 %v1092
        %v1737 = vpop.f32.mrb[0].mxu0
        %v1738 = vadd.f32 0.0, %v1737
        %v1739 = vpop.f32.mrb[0].mxu0
        %1740 = vdwg.mxu0
        %vm1741 = vcmask 138240
        %v1742 = vsel %vm1741, %v1728, -inf
        %1743 = vmax.xlane.f32.xlu0 %v1742
        %v1744 = vpop.xlane.xlu0 %1743
        %v1745 = vsel %vm1741, %v1733, -inf
        %1746 = vmax.xlane.f32.xlu0 %v1745
        %v1747 = vpop.xlane.xlu0 %1746
        %vm1748 = vcmask 131072
        %v1749 = vsel %vm1748, %v1738, -inf
        %1750 = vmax.xlane.f32.xlu0 %v1749
        %v1751 = vpop.xlane.xlu0 %1750
        %v1752 = vsub.f32 %v1728, %v1744
        %v1753 = vsub.f32 %v1733, %v1747
        %v1754 = vsub.f32 %v1738, %v1751
        %v1755 = vmul.f32 %v1752, 1.442695
        %v1756 = vpow.pop %v1755
        %v1757 = vmul.f32 %v1753, 1.442695
        %v1758 = vpow.pop %v1757
        %v1759 = vmul.f32 %v1754, 1.442695
        %v1760 = vpow.pop %v1759
        %v1761 = vsel %vm1741, %v1756, 0.0
        %1762 = vadd.xlane.f32.xlu0 %v1761
        %v1763 = vpop.xlane.xlu0 %1762
        %v1764 = vsel %vm1741, %v1758, 0.0
        %1765 = vadd.xlane.f32.xlu0 %v1764
        %v1766 = vpop.xlane.xlu0 %1765
        %v1767 = vsel %vm1748, %v1760, 0.0
        %1768 = vadd.xlane.f32.xlu0 %v1767
        %v1769 = vpop.xlane.xlu0 %1768
        %v1770 = vrcp.pop %v1763
        %v1771 = vrcp.pop %v1766
        %v1772 = vrcp.pop %v1769
        %v1773 = vmul.f32 %v1756, %v1770
        %v1774 = vmul.f32 %v1758, %v1771
        %v1775 = vmul.f32 %v1760, %v1772
        %1776 = vmatprep.subr.mxu0 0.0
        %1777 = vmatpush1.xpose.msra.mxu0 %v1334
        %1778 = vmatprep.subr.mxu0 0.0
        %1779 = vmatpush1.xpose.msra.mxu0 %v1340
        %1780 = vmatprep.subr.mxu0 0.0
        %1781 = vmatpush1.xpose.msra.mxu0 %v1346
        %1782 = vmatprep.subr.mxu0 0.0
        %1783 = vmatpush1.xpose.msra.mxu0 0.0
        %1784 = vmatprep.subr.mxu0 0.0
        %1785 = vmatpush1.xpose.msra.mxu0 0.0
        %1786 = vmatprep.subr.mxu0 0.0
        %1787 = vmatpush1.xpose.msra.mxu0 0.0
        %1788 = vmatprep.subr.mxu0 0.0
        %1789 = vmatpush1.xpose.msra.mxu0 0.0
        %1790 = vmatprep.subr.mxu0 0.0
        %1791 = vmatpush1.xpose.msra.mxu0 0.0
        %1792 = vmatprep.subr.mxu0 0.0
        %1793 = vmatpush1.xpose.msra.mxu0 0.0
        %1794 = vmatprep.subr.mxu0 0.0
        %1795 = vmatpush1.xpose.msra.mxu0 0.0
        %1796 = vmatprep.subr.mxu0 0.0
        %1797 = vmatpush1.xpose.msra.mxu0 0.0
        %1798 = vmatprep.subr.mxu0 0.0
        %1799 = vmatpush1.xpose.msra.mxu0 0.0
        %1800 = vmatprep.subr.mxu0 0.0
        %1801 = vmatpush1.xpose.msra.mxu0 0.0
        %1802 = vmatprep.subr.mxu0 0.0
        %1803 = vmatpush1.xpose.msra.mxu0 0.0
        %1804 = vmatprep.subr.mxu0 0.0
        %1805 = vmatpush1.xpose.msra.mxu0 0.0
        %1806 = vmatprep.subr.mxu0 0.0
        %1807 = vmatpush1.xpose.msra.mxu0 0.0
        %1808 = vmatprep.subr.mxu0 0.0
        %1809 = vmatpush1.xpose.msra.mxu0 0.0
        %1810 = vmatprep.subr.mxu0 0.0
        %1811 = vmatpush1.xpose.msra.mxu0 0.0
        %1812 = vmatprep.subr.mxu0 0.0
        %1813 = vmatpush1.xpose.msra.mxu0 0.0
        %1814 = vmatprep.subr.mxu0 0.0
        %1815 = vmatpush1.xpose.msra.mxu0 0.0
        %1816 = vmatprep.subr.mxu0 0.0
        %1817 = vmatpush1.xpose.msra.mxu0 0.0
        %1818 = vmatprep.subr.mxu0 0.0
        %1819 = vmatpush1.xpose.msra.mxu0 0.0
        %1820 = vmatprep.subr.mxu0 0.0
        %1821 = vmatpush1.xpose.msra.mxu0 0.0
        %1822 = vmatprep.subr.mxu0 0.0
        %1823 = vmatpush1.xpose.msra.mxu0 0.0
        %1824 = vmatprep.subr.mxu0 0.0
        %1825 = vmatpush1.xpose.msra.mxu0 0.0
        %1826 = vmatprep.subr.mxu0 0.0
        %1827 = vmatpush1.xpose.msra.mxu0 0.0
        %1828 = vmatprep.subr.mxu0 0.0
        %1829 = vmatpush1.xpose.msra.mxu0 0.0
        %1830 = vmatprep.subr.mxu0 0.0
        %1831 = vmatpush1.xpose.msra.mxu0 0.0
        %1832 = vmatprep.subr.mxu0 0.0
        %1833 = vmatpush1.xpose.msra.mxu0 0.0
        %1834 = vmatprep.subr.mxu0 0.0
        %1835 = vmatpush1.xpose.msra.mxu0 0.0
        %1836 = vmatprep.subr.mxu0 0.0
        %1837 = vmatpush1.xpose.msra.mxu0 0.0
        %1838 = vmatprep.subr.mxu0 0.0
        %1839 = vmatpush1.xpose.msra.mxu0 0.0
        %1840 = vmatprep.mubr.f32.mxu0 0.0
        %1841 = vmatmul.mubr.f32.gmra.mrb[0].mxu0 %v1082
        %v1842 = vpop.f32.mrb[0].mxu0
        %v1843 = vadd.f32 0.0, %v1842
        %v1844 = vpop.f32.mrb[0].mxu0
        %1845 = vmatprep.mubr.f32.mxu0 0.0
        %1846 = vmatmul.mubr.f32.gmra.mrb[0].mxu0 %v1088
        %v1847 = vpop.f32.mrb[0].mxu0
        %v1848 = vadd.f32 0.0, %v1847
        %v1849 = vpop.f32.mrb[0].mxu0
        %1850 = vmatprep.mubr.f32.mxu0 0.0
        %1851 = vmatmul.mubr.f32.gmra.mrb[0].mxu0 %v1094
        %v1852 = vpop.f32.mrb[0].mxu0
        %v1853 = vadd.f32 0.0, %v1852
        %v1854 = vpop.f32.mrb[0].mxu0
        %1855 = vdwg.mxu0
        %v1856 = vsel %vm1741, %v1843, -inf
        %1857 = vmax.xlane.f32.xlu0 %v1856
        %v1858 = vpop.xlane.xlu0 %1857
        %v1859 = vsel %vm1741, %v1848, -inf
        %1860 = vmax.xlane.f32.xlu0 %v1859
        %v1861 = vpop.xlane.xlu0 %1860
        %v1862 = vsel %vm1748, %v1853, -inf
        %1863 = vmax.xlane.f32.xlu0 %v1862
        %v1864 = vpop.xlane.xlu0 %1863
        %v1865 = vsub.f32 %v1843, %v1858
        %v1866 = vsub.f32 %v1848, %v1861
        %v1867 = vsub.f32 %v1853, %v1864
        %v1868 = vmul.f32 %v1865, 1.442695
        %v1869 = vpow.pop %v1868
        %v1870 = vmul.f32 %v1866, 1.442695
        %v1871 = vpow.pop %v1870
        %v1872 = vmul.f32 %v1867, 1.442695
        %v1873 = vpow.pop %v1872
        %v1874 = vsel %vm1741, %v1869, 0.0
        %1875 = vadd.xlane.f32.xlu0 %v1874
        %v1876 = vpop.xlane.xlu0 %1875
        %v1877 = vsel %vm1741, %v1871, 0.0
        %1878 = vadd.xlane.f32.xlu0 %v1877
        %v1879 = vpop.xlane.xlu0 %1878
        %v1880 = vsel %vm1748, %v1873, 0.0
        %1881 = vadd.xlane.f32.xlu0 %v1880
        %v1882 = vpop.xlane.xlu0 %1881
        %v1883 = vrcp.pop %v1876
        %v1884 = vrcp.pop %v1879
        %v1885 = vrcp.pop %v1882
        %v1886 = vmul.f32 %v1869, %v1883
        %v1887 = vmul.f32 %v1871, %v1884
        %v1888 = vmul.f32 %v1873, %v1885
        %v1890 = vsel %vm1741, %v1886, 0
        %v1893 = vsel %vm1741, %v1887, 0
        %v1896 = vsel %vm1741, %v1888, 0
        %v1899 = vsel %vm871, %v1576, 0
        %1901 = vmatprep.subr.mxu0 0.0
        %1902 = vmatpush1.msra.mxu0 %v1564
        %1903 = vmatprep.subr.mxu0 0.0
        %1904 = vmatpush1.msra.mxu0 %v1570
        %1905 = vmatprep.subr.mxu0 0.0
        %1906 = vmatpush1.msra.mxu0 %v1899
        %1907 = vmatprep.subr.mxu0 0.0
        %1908 = vmatpush1.msra.mxu0 0.0
        %1909 = vmatprep.subr.mxu0 0.0
        %1910 = vmatpush1.msra.mxu0 0.0
        %1911 = vmatprep.subr.mxu0 0.0
        %1912 = vmatpush1.msra.mxu0 0.0
        %1913 = vmatprep.subr.mxu0 0.0
        %1914 = vmatpush1.msra.mxu0 0.0
        %1915 = vmatprep.subr.mxu0 0.0
        %1916 = vmatpush1.msra.mxu0 0.0
        %1917 = vmatprep.subr.mxu0 0.0
        %1918 = vmatpush1.msra.mxu0 0.0
        %1919 = vmatprep.subr.mxu0 0.0
        %1920 = vmatpush1.msra.mxu0 0.0
        %1921 = vmatprep.subr.mxu0 0.0
        %1922 = vmatpush1.msra.mxu0 0.0
        %1923 = vmatprep.subr.mxu0 0.0
        %1924 = vmatpush1.msra.mxu0 0.0
        %1925 = vmatprep.subr.mxu0 0.0
        %1926 = vmatpush1.msra.mxu0 0.0
        %1927 = vmatprep.subr.mxu0 0.0
        %1928 = vmatpush1.msra.mxu0 0.0
        %1929 = vmatprep.subr.mxu0 0.0
        %1930 = vmatpush1.msra.mxu0 0.0
        %1931 = vmatprep.subr.mxu0 0.0
        %1932 = vmatpush1.msra.mxu0 0.0
        %1933 = vmatprep.subr.mxu0 0.0
        %1934 = vmatpush1.msra.mxu0 0.0
        %1935 = vmatprep.subr.mxu0 0.0
        %1936 = vmatpush1.msra.mxu0 0.0
        %1937 = vmatprep.subr.mxu0 0.0
        %1938 = vmatpush1.msra.mxu0 0.0
        %1939 = vmatprep.subr.mxu0 0.0
        %1940 = vmatpush1.msra.mxu0 0.0
        %1941 = vmatprep.subr.mxu0 0.0
        %1942 = vmatpush1.msra.mxu0 0.0
        %1943 = vmatprep.subr.mxu0 0.0
        %1944 = vmatpush1.msra.mxu0 0.0
        %1945 = vmatprep.subr.mxu0 0.0
        %1946 = vmatpush1.msra.mxu0 0.0
        %1947 = vmatprep.subr.mxu0 0.0
        %1948 = vmatpush1.msra.mxu0 0.0
        %1949 = vmatprep.subr.mxu0 0.0
        %1950 = vmatpush1.msra.mxu0 0.0
        %1951 = vmatprep.subr.mxu0 0.0
        %1952 = vmatpush1.msra.mxu0 0.0
        %1953 = vmatprep.subr.mxu0 0.0
        %1954 = vmatpush1.msra.mxu0 0.0
        %1955 = vmatprep.subr.mxu0 0.0
        %1956 = vmatpush1.msra.mxu0 0.0
        %1957 = vmatprep.subr.mxu0 0.0
        %1958 = vmatpush1.msra.mxu0 0.0
        %1959 = vmatprep.subr.mxu0 0.0
        %1960 = vmatpush1.msra.mxu0 0.0
        %1961 = vmatprep.subr.mxu0 0.0
        %1962 = vmatpush1.msra.mxu0 0.0
        %1963 = vmatprep.subr.mxu0 0.0
        %1964 = vmatpush1.msra.mxu0 0.0
        %1965 = vmatprep.mubr.f32.mxu0 0.0
        %1966 = vmatmul.mubr.f32.gmra.mrb[0].mxu0 %v1890
        %v1967 = vpop.f32.mrb[0].mxu0
        %v1968 = vadd.f32 0.0, %v1967
        %v1969 = vpop.f32.mrb[0].mxu0
        %1970 = vmatprep.mubr.f32.mxu0 0.0
        %1971 = vmatmul.mubr.f32.gmra.mrb[0].mxu0 %v1893
        %v1972 = vpop.f32.mrb[0].mxu0
        %v1973 = vadd.f32 0.0, %v1972
        %v1974 = vpop.f32.mrb[0].mxu0
        %1975 = vmatprep.mubr.f32.mxu0 0.0
        %1976 = vmatmul.mubr.f32.gmra.mrb[0].mxu0 %v1896
        %v1977 = vpop.f32.mrb[0].mxu0
        %v1978 = vadd.f32 0.0, %v1977
        %v1979 = vpop.f32.mrb[0].mxu0
        %1980 = vdwg.mxu0
        %v1982 = vsel %vm1741, %v1773, 0
        %v1985 = vsel %vm1741, %v1774, 0
        %v1988 = vsel %vm1741, %v1775, 0
        %v1991 = vsel %vm871, %v1574, 0
        %1993 = vmatprep.subr.mxu0 0.0
        %1994 = vmatpush1.msra.mxu0 %v1562
        %1995 = vmatprep.subr.mxu0 0.0
        %1996 = vmatpush1.msra.mxu0 %v1568
        %1997 = vmatprep.subr.mxu0 0.0
        %1998 = vmatpush1.msra.mxu0 %v1991
        %1999 = vmatprep.subr.mxu0 0.0
        %2000 = vmatpush1.msra.mxu0 0.0
        %2001 = vmatprep.subr.mxu0 0.0
        %2002 = vmatpush1.msra.mxu0 0.0
        %2003 = vmatprep.subr.mxu0 0.0
        %2004 = vmatpush1.msra.mxu0 0.0
        %2005 = vmatprep.subr.mxu0 0.0
        %2006 = vmatpush1.msra.mxu0 0.0
        %2007 = vmatprep.subr.mxu0 0.0
        %2008 = vmatpush1.msra.mxu0 0.0
        %2009 = vmatprep.subr.mxu0 0.0
        %2010 = vmatpush1.msra.mxu0 0.0
        %2011 = vmatprep.subr.mxu0 0.0
        %2012 = vmatpush1.msra.mxu0 0.0
        %2013 = vmatprep.subr.mxu0 0.0
        %2014 = vmatpush1.msra.mxu0 0.0
        %2015 = vmatprep.subr.mxu0 0.0
        %2016 = vmatpush1.msra.mxu0 0.0
        %2017 = vmatprep.subr.mxu0 0.0
        %2018 = vmatpush1.msra.mxu0 0.0
        %2019 = vmatprep.subr.mxu0 0.0
        %2020 = vmatpush1.msra.mxu0 0.0
        %2021 = vmatprep.subr.mxu0 0.0
        %2022 = vmatpush1.msra.mxu0 0.0
        %2023 = vmatprep.subr.mxu0 0.0
        %2024 = vmatpush1.msra.mxu0 0.0
        %2025 = vmatprep.subr.mxu0 0.0
        %2026 = vmatpush1.msra.mxu0 0.0
        %2027 = vmatprep.subr.mxu0 0.0
        %2028 = vmatpush1.msra.mxu0 0.0
        %2029 = vmatprep.subr.mxu0 0.0
        %2030 = vmatpush1.msra.mxu0 0.0
        %2031 = vmatprep.subr.mxu0 0.0
        %2032 = vmatpush1.msra.mxu0 0.0
        %2033 = vmatprep.subr.mxu0 0.0
        %2034 = vmatpush1.msra.mxu0 0.0
        %2035 = vmatprep.subr.mxu0 0.0
        %2036 = vmatpush1.msra.mxu0 0.0
        %2037 = vmatprep.subr.mxu0 0.0
        %2038 = vmatpush1.msra.mxu0 0.0
        %2039 = vmatprep.subr.mxu0 0.0
        %2040 = vmatpush1.msra.mxu0 0.0
        %2041 = vmatprep.subr.mxu0 0.0
        %2042 = vmatpush1.msra.mxu0 0.0
        %2043 = vmatprep.subr.mxu0 0.0
        %2044 = vmatpush1.msra.mxu0 0.0
        %2045 = vmatprep.subr.mxu0 0.0
        %2046 = vmatpush1.msra.mxu0 0.0
        %2047 = vmatprep.subr.mxu0 0.0
        %2048 = vmatpush1.msra.mxu0 0.0
        %2049 = vmatprep.subr.mxu0 0.0
        %2050 = vmatpush1.msra.mxu0 0.0
        %2051 = vmatprep.subr.mxu0 0.0
        %2052 = vmatpush1.msra.mxu0 0.0
        %2053 = vmatprep.subr.mxu0 0.0
        %2054 = vmatpush1.msra.mxu0 0.0
        %2055 = vmatprep.subr.mxu0 0.0
        %2056 = vmatpush1.msra.mxu0 0.0
        %2057 = vmatprep.mubr.f32.mxu0 0.0
        %2058 = vmatmul.mubr.f32.gmra.mrb[0].mxu0 %v1982
        %v2059 = vpop.f32.mrb[0].mxu0
        %v2060 = vadd.f32 %v1968, %v2059
        %v2061 = vpop.f32.mrb[0].mxu0
        %2062 = vmatprep.mubr.f32.mxu0 0.0
        %2063 = vmatmul.mubr.f32.gmra.mrb[0].mxu0 %v1985
        %v2064 = vpop.f32.mrb[0].mxu0
        %v2065 = vadd.f32 %v1973, %v2064
        %v2066 = vpop.f32.mrb[0].mxu0
        %2067 = vmatprep.mubr.f32.mxu0 0.0
        %2068 = vmatmul.mubr.f32.gmra.mrb[0].mxu0 %v1988
        %v2069 = vpop.f32.mrb[0].mxu0
        %v2070 = vadd.f32 %v1978, %v2069
        %v2071 = vpop.f32.mrb[0].mxu0
        %2072 = vdwg.mxu0
        %2073 = vmatprep.subr.mxu0 0.0
        %2074 = vmatpush1.xpose.msra.mxu0 %v1415
        %2075 = vmatprep.subr.mxu0 0.0
        %2076 = vmatpush1.xpose.msra.mxu0 %v1421
        %2077 = vmatprep.subr.mxu0 0.0
        %2078 = vmatpush1.xpose.msra.mxu0 %v1427
        %2079 = vmatprep.subr.mxu0 0.0
        %2080 = vmatpush1.xpose.msra.mxu0 0.0
        %2081 = vmatprep.subr.mxu0 0.0
        %2082 = vmatpush1.xpose.msra.mxu0 0.0
        %2083 = vmatprep.subr.mxu0 0.0
        %2084 = vmatpush1.xpose.msra.mxu0 0.0
        %2085 = vmatprep.subr.mxu0 0.0
        %2086 = vmatpush1.xpose.msra.mxu0 0.0
        %2087 = vmatprep.subr.mxu0 0.0
        %2088 = vmatpush1.xpose.msra.mxu0 0.0
        %2089 = vmatprep.subr.mxu0 0.0
        %2090 = vmatpush1.xpose.msra.mxu0 0.0
        %2091 = vmatprep.subr.mxu0 0.0
        %2092 = vmatpush1.xpose.msra.mxu0 0.0
        %2093 = vmatprep.subr.mxu0 0.0
        %2094 = vmatpush1.xpose.msra.mxu0 0.0
        %2095 = vmatprep.subr.mxu0 0.0
        %2096 = vmatpush1.xpose.msra.mxu0 0.0
        %2097 = vmatprep.subr.mxu0 0.0
        %2098 = vmatpush1.xpose.msra.mxu0 0.0
        %2099 = vmatprep.subr.mxu0 0.0
        %2100 = vmatpush1.xpose.msra.mxu0 0.0
        %2101 = vmatprep.subr.mxu0 0.0
        %2102 = vmatpush1.xpose.msra.mxu0 0.0
        %2103 = vmatprep.subr.mxu0 0.0
        %2104 = vmatpush1.xpose.msra.mxu0 0.0
        %2105 = vmatprep.subr.mxu0 0.0
        %2106 = vmatpush1.xpose.msra.mxu0 0.0
        %2107 = vmatprep.subr.mxu0 0.0
        %2108 = vmatpush1.xpose.msra.mxu0 0.0
        %2109 = vmatprep.subr.mxu0 0.0
        %2110 = vmatpush1.xpose.msra.mxu0 0.0
        %2111 = vmatprep.subr.mxu0 0.0
        %2112 = vmatpush1.xpose.msra.mxu0 0.0
        %2113 = vmatprep.subr.mxu0 0.0
        %2114 = vmatpush1.xpose.msra.mxu0 0.0
        %2115 = vmatprep.subr.mxu0 0.0
        %2116 = vmatpush1.xpose.msra.mxu0 0.0
        %2117 = vmatprep.subr.mxu0 0.0
        %2118 = vmatpush1.xpose.msra.mxu0 0.0
        %2119 = vmatprep.subr.mxu0 0.0
        %2120 = vmatpush1.xpose.msra.mxu0 0.0
        %2121 = vmatprep.subr.mxu0 0.0
        %2122 = vmatpush1.xpose.msra.mxu0 0.0
        %2123 = vmatprep.subr.mxu0 0.0
        %2124 = vmatpush1.xpose.msra.mxu0 0.0
        %2125 = vmatprep.subr.mxu0 0.0
        %2126 = vmatpush1.xpose.msra.mxu0 0.0
        %2127 = vmatprep.subr.mxu0 0.0
        %2128 = vmatpush1.xpose.msra.mxu0 0.0
        %2129 = vmatprep.subr.mxu0 0.0
        %2130 = vmatpush1.xpose.msra.mxu0 0.0
        %2131 = vmatprep.subr.mxu0 0.0
        %2132 = vmatpush1.xpose.msra.mxu0 0.0
        %2133 = vmatprep.subr.mxu0 0.0
        %2134 = vmatpush1.xpose.msra.mxu0 0.0
        %2135 = vmatprep.subr.mxu0 0.0
        %2136 = vmatpush1.xpose.msra.mxu0 0.0
        %2137 = vmatprep.mubr.f32.mxu0 0.0
        %2138 = vmatmul.mubr.f32.gmra.mrb[0].mxu0 %v1163
        %v2139 = vpop.f32.mrb[0].mxu0
        %v2140 = vadd.f32 0.0, %v2139
        %v2141 = vpop.f32.mrb[0].mxu0
        %2142 = vmatprep.mubr.f32.mxu0 0.0
        %2143 = vmatmul.mubr.f32.gmra.mrb[0].mxu0 %v1169
        %v2144 = vpop.f32.mrb[0].mxu0
        %v2145 = vadd.f32 0.0, %v2144
        %v2146 = vpop.f32.mrb[0].mxu0
        %2147 = vmatprep.mubr.f32.mxu0 0.0
        %2148 = vmatmul.mubr.f32.gmra.mrb[0].mxu0 %v1175
        %v2149 = vpop.f32.mrb[0].mxu0
        %v2150 = vadd.f32 0.0, %v2149
        %v2151 = vpop.f32.mrb[0].mxu0
        %2152 = vdwg.mxu0
        %v2153 = vsel %vm1741, %v2140, -inf
        %2154 = vmax.xlane.f32.xlu0 %v2153
        %v2155 = vpop.xlane.xlu0 %2154
        %v2156 = vsel %vm1741, %v2145, -inf
        %2157 = vmax.xlane.f32.xlu0 %v2156
        %v2158 = vpop.xlane.xlu0 %2157
        %v2159 = vsel %vm1748, %v2150, -inf
        %2160 = vmax.xlane.f32.xlu0 %v2159
        %v2161 = vpop.xlane.xlu0 %2160
        %v2162 = vsub.f32 %v2140, %v2155
        %v2163 = vsub.f32 %v2145, %v2158
        %v2164 = vsub.f32 %v2150, %v2161
        %v2165 = vmul.f32 %v2162, 1.442695
        %v2166 = vpow.pop %v2165
        %v2167 = vmul.f32 %v2163, 1.442695
        %v2168 = vpow.pop %v2167
        %v2169 = vmul.f32 %v2164, 1.442695
        %v2170 = vpow.pop %v2169
        %v2171 = vsel %vm1741, %v2166, 0.0
        %2172 = vadd.xlane.f32.xlu0 %v2171
        %v2173 = vpop.xlane.xlu0 %2172
        %v2174 = vsel %vm1741, %v2168, 0.0
        %2175 = vadd.xlane.f32.xlu0 %v2174
        %v2176 = vpop.xlane.xlu0 %2175
        %v2177 = vsel %vm1748, %v2170, 0.0
        %2178 = vadd.xlane.f32.xlu0 %v2177
        %v2179 = vpop.xlane.xlu0 %2178
        %v2180 = vrcp.pop %v2173
        %v2181 = vrcp.pop %v2176
        %v2182 = vrcp.pop %v2179
        %v2183 = vmul.f32 %v2166, %v2180
        %v2184 = vmul.f32 %v2168, %v2181
        %v2185 = vmul.f32 %v2170, %v2182
        %v2187 = vsel %vm1741, %v2183, 0
        %v2190 = vsel %vm1741, %v2184, 0
        %v2193 = vsel %vm1741, %v2185, 0
        %v2196 = vsel %vm871, %v1657, 0
        %2198 = vmatprep.subr.mxu0 0.0
        %2199 = vmatpush1.msra.mxu0 %v1645
        %2200 = vmatprep.subr.mxu0 0.0
        %2201 = vmatpush1.msra.mxu0 %v1651
        %2202 = vmatprep.subr.mxu0 0.0
        %2203 = vmatpush1.msra.mxu0 %v2196
        %2204 = vmatprep.subr.mxu0 0.0
        %2205 = vmatpush1.msra.mxu0 0.0
        %2206 = vmatprep.subr.mxu0 0.0
        %2207 = vmatpush1.msra.mxu0 0.0
        %2208 = vmatprep.subr.mxu0 0.0
        %2209 = vmatpush1.msra.mxu0 0.0
        %2210 = vmatprep.subr.mxu0 0.0
        %2211 = vmatpush1.msra.mxu0 0.0
        %2212 = vmatprep.subr.mxu0 0.0
        %2213 = vmatpush1.msra.mxu0 0.0
        %2214 = vmatprep.subr.mxu0 0.0
        %2215 = vmatpush1.msra.mxu0 0.0
        %2216 = vmatprep.subr.mxu0 0.0
        %2217 = vmatpush1.msra.mxu0 0.0
        %2218 = vmatprep.subr.mxu0 0.0
        %2219 = vmatpush1.msra.mxu0 0.0
        %2220 = vmatprep.subr.mxu0 0.0
        %2221 = vmatpush1.msra.mxu0 0.0
        %2222 = vmatprep.subr.mxu0 0.0
        %2223 = vmatpush1.msra.mxu0 0.0
        %2224 = vmatprep.subr.mxu0 0.0
        %2225 = vmatpush1.msra.mxu0 0.0
        %2226 = vmatprep.subr.mxu0 0.0
        %2227 = vmatpush1.msra.mxu0 0.0
        %2228 = vmatprep.subr.mxu0 0.0
        %2229 = vmatpush1.msra.mxu0 0.0
        %2230 = vmatprep.subr.mxu0 0.0
        %2231 = vmatpush1.msra.mxu0 0.0
        %2232 = vmatprep.subr.mxu0 0.0
        %2233 = vmatpush1.msra.mxu0 0.0
        %2234 = vmatprep.subr.mxu0 0.0
        %2235 = vmatpush1.msra.mxu0 0.0
        %2236 = vmatprep.subr.mxu0 0.0
        %2237 = vmatpush1.msra.mxu0 0.0
        %2238 = vmatprep.subr.mxu0 0.0
        %2239 = vmatpush1.msra.mxu0 0.0
        %2240 = vmatprep.subr.mxu0 0.0
        %2241 = vmatpush1.msra.mxu0 0.0
        %2242 = vmatprep.subr.mxu0 0.0
        %2243 = vmatpush1.msra.mxu0 0.0
        %2244 = vmatprep.subr.mxu0 0.0
        %2245 = vmatpush1.msra.mxu0 0.0
        %2246 = vmatprep.subr.mxu0 0.0
        %2247 = vmatpush1.msra.mxu0 0.0
        %2248 = vmatprep.subr.mxu0 0.0
        %2249 = vmatpush1.msra.mxu0 0.0
        %2250 = vmatprep.subr.mxu0 0.0
        %2251 = vmatpush1.msra.mxu0 0.0
        %2252 = vmatprep.subr.mxu0 0.0
        %2253 = vmatpush1.msra.mxu0 0.0
        %2254 = vmatprep.subr.mxu0 0.0
        %2255 = vmatpush1.msra.mxu0 0.0
        %2256 = vmatprep.subr.mxu0 0.0
        %2257 = vmatpush1.msra.mxu0 0.0
        %2258 = vmatprep.subr.mxu0 0.0
        %2259 = vmatpush1.msra.mxu0 0.0
        %2260 = vmatprep.subr.mxu0 0.0
        %2261 = vmatpush1.msra.mxu0 0.0
        %2262 = vmatprep.mubr.f32.mxu0 0.0
        %2263 = vmatmul.mubr.f32.gmra.mrb[0].mxu0 %v2187
        %v2264 = vpop.f32.mrb[0].mxu0
        %v2265 = vadd.f32 0.0, %v2264
        %v2266 = vpop.f32.mrb[0].mxu0
        %2267 = vmatprep.mubr.f32.mxu0 0.0
        %2268 = vmatmul.mubr.f32.gmra.mrb[0].mxu0 %v2190
        %v2269 = vpop.f32.mrb[0].mxu0
        %v2270 = vadd.f32 0.0, %v2269
        %v2271 = vpop.f32.mrb[0].mxu0
        %2272 = vmatprep.mubr.f32.mxu0 0.0
        %2273 = vmatmul.mubr.f32.gmra.mrb[0].mxu0 %v2193
        %v2274 = vpop.f32.mrb[0].mxu0
        %v2275 = vadd.f32 0.0, %v2274
        %v2276 = vpop.f32.mrb[0].mxu0
        %2277 = vdwg.mxu0
        %v2278 = vadd.f32 %v2060, %v2265
        %v2279 = vadd.f32 %v2065, %v2270
        %v2280 = vadd.f32 %v2070, %v2275
        %2281 = vmatprep.subr.mxu0 0.0
        %2282 = vmatpush1.xpose.msra.mxu0 %v1417
        %2283 = vmatprep.subr.mxu0 0.0
        %2284 = vmatpush1.xpose.msra.mxu0 %v1423
        %2285 = vmatprep.subr.mxu0 0.0
        %2286 = vmatpush1.xpose.msra.mxu0 %v1429
        %2287 = vmatprep.subr.mxu0 0.0
        %2288 = vmatpush1.xpose.msra.mxu0 0.0
        %2289 = vmatprep.subr.mxu0 0.0
        %2290 = vmatpush1.xpose.msra.mxu0 0.0
        %2291 = vmatprep.subr.mxu0 0.0
        %2292 = vmatpush1.xpose.msra.mxu0 0.0
        %2293 = vmatprep.subr.mxu0 0.0
        %2294 = vmatpush1.xpose.msra.mxu0 0.0
        %2295 = vmatprep.subr.mxu0 0.0
        %2296 = vmatpush1.xpose.msra.mxu0 0.0
        %2297 = vmatprep.subr.mxu0 0.0
        %2298 = vmatpush1.xpose.msra.mxu0 0.0
        %2299 = vmatprep.subr.mxu0 0.0
        %2300 = vmatpush1.xpose.msra.mxu0 0.0
        %2301 = vmatprep.subr.mxu0 0.0
        %2302 = vmatpush1.xpose.msra.mxu0 0.0
        %2303 = vmatprep.subr.mxu0 0.0
        %2304 = vmatpush1.xpose.msra.mxu0 0.0
        %2305 = vmatprep.subr.mxu0 0.0
        %2306 = vmatpush1.xpose.msra.mxu0 0.0
        %2307 = vmatprep.subr.mxu0 0.0
        %2308 = vmatpush1.xpose.msra.mxu0 0.0
        %2309 = vmatprep.subr.mxu0 0.0
        %2310 = vmatpush1.xpose.msra.mxu0 0.0
        %2311 = vmatprep.subr.mxu0 0.0
        %2312 = vmatpush1.xpose.msra.mxu0 0.0
        %2313 = vmatprep.subr.mxu0 0.0
        %2314 = vmatpush1.xpose.msra.mxu0 0.0
        %2315 = vmatprep.subr.mxu0 0.0
        %2316 = vmatpush1.xpose.msra.mxu0 0.0
        %2317 = vmatprep.subr.mxu0 0.0
        %2318 = vmatpush1.xpose.msra.mxu0 0.0
        %2319 = vmatprep.subr.mxu0 0.0
        %2320 = vmatpush1.xpose.msra.mxu0 0.0
        %2321 = vmatprep.subr.mxu0 0.0
        %2322 = vmatpush1.xpose.msra.mxu0 0.0
        %2323 = vmatprep.subr.mxu0 0.0
        %2324 = vmatpush1.xpose.msra.mxu0 0.0
        %2325 = vmatprep.subr.mxu0 0.0
        %2326 = vmatpush1.xpose.msra.mxu0 0.0
        %2327 = vmatprep.subr.mxu0 0.0
        %2328 = vmatpush1.xpose.msra.mxu0 0.0
        %2329 = vmatprep.subr.mxu0 0.0
        %2330 = vmatpush1.xpose.msra.mxu0 0.0
        %2331 = vmatprep.subr.mxu0 0.0
        %2332 = vmatpush1.xpose.msra.mxu0 0.0
        %2333 = vmatprep.subr.mxu0 0.0
        %2334 = vmatpush1.xpose.msra.mxu0 0.0
        %2335 = vmatprep.subr.mxu0 0.0
        %2336 = vmatpush1.xpose.msra.mxu0 0.0
        %2337 = vmatprep.subr.mxu0 0.0
        %2338 = vmatpush1.xpose.msra.mxu0 0.0
        %2339 = vmatprep.subr.mxu0 0.0
        %2340 = vmatpush1.xpose.msra.mxu0 0.0
        %2341 = vmatprep.subr.mxu0 0.0
        %2342 = vmatpush1.xpose.msra.mxu0 0.0
        %2343 = vmatprep.subr.mxu0 0.0
        %2344 = vmatpush1.xpose.msra.mxu0 0.0
        %2345 = vmatprep.mubr.f32.mxu0 0.0
        %2346 = vmatmul.mubr.f32.gmra.mrb[0].mxu0 %v1165
        %v2347 = vpop.f32.mrb[0].mxu0
        %v2348 = vadd.f32 0.0, %v2347
        %v2349 = vpop.f32.mrb[0].mxu0
        %2350 = vmatprep.mubr.f32.mxu0 0.0
        %2351 = vmatmul.mubr.f32.gmra.mrb[0].mxu0 %v1171
        %v2352 = vpop.f32.mrb[0].mxu0
        %v2353 = vadd.f32 0.0, %v2352
        %v2354 = vpop.f32.mrb[0].mxu0
        %2355 = vmatprep.mubr.f32.mxu0 0.0
        %2356 = vmatmul.mubr.f32.gmra.mrb[0].mxu0 %v1177
        %v2357 = vpop.f32.mrb[0].mxu0
        %v2358 = vadd.f32 0.0, %v2357
        %v2359 = vpop.f32.mrb[0].mxu0
        %2360 = vdwg.mxu0
        %v2361 = vsel %vm1741, %v2348, -inf
        %2362 = vmax.xlane.f32.xlu0 %v2361
        %v2363 = vpop.xlane.xlu0 %2362
        %v2364 = vsel %vm1741, %v2353, -inf
        %2365 = vmax.xlane.f32.xlu0 %v2364
        %v2366 = vpop.xlane.xlu0 %2365
        %v2367 = vsel %vm1748, %v2358, -inf
        %2368 = vmax.xlane.f32.xlu0 %v2367
        %v2369 = vpop.xlane.xlu0 %2368
        %v2370 = vsub.f32 %v2348, %v2363
        %v2371 = vsub.f32 %v2353, %v2366
        %v2372 = vsub.f32 %v2358, %v2369
        %v2373 = vmul.f32 %v2370, 1.442695
        %v2374 = vpow.pop %v2373
        %v2375 = vmul.f32 %v2371, 1.442695
        %v2376 = vpow.pop %v2375
        %v2377 = vmul.f32 %v2372, 1.442695
        %v2378 = vpow.pop %v2377
        %v2379 = vsel %vm1741, %v2374, 0.0
        %2380 = vadd.xlane.f32.xlu0 %v2379
        %v2381 = vpop.xlane.xlu0 %2380
        %v2382 = vsel %vm1741, %v2376, 0.0
        %2383 = vadd.xlane.f32.xlu0 %v2382
        %v2384 = vpop.xlane.xlu0 %2383
        %v2385 = vsel %vm1748, %v2378, 0.0
        %2386 = vadd.xlane.f32.xlu0 %v2385
        %v2387 = vpop.xlane.xlu0 %2386
        %v2388 = vrcp.pop %v2381
        %v2389 = vrcp.pop %v2384
        %v2390 = vrcp.pop %v2387
        %v2391 = vmul.f32 %v2374, %v2388
        %v2392 = vmul.f32 %v2376, %v2389
        %v2393 = vmul.f32 %v2378, %v2390
        %v2395 = vsel %vm1741, %v2391, 0
        %v2398 = vsel %vm1741, %v2392, 0
        %v2401 = vsel %vm1741, %v2393, 0
        %v2404 = vsel %vm871, %v1659, 0
        %2406 = vmatprep.subr.mxu0 0.0
        %2407 = vmatpush1.msra.mxu0 %v1647
        %2408 = vmatprep.subr.mxu0 0.0
        %2409 = vmatpush1.msra.mxu0 %v1653
        %2410 = vmatprep.subr.mxu0 0.0
        %2411 = vmatpush1.msra.mxu0 %v2404
        %2412 = vmatprep.subr.mxu0 0.0
        %2413 = vmatpush1.msra.mxu0 0.0
        %2414 = vmatprep.subr.mxu0 0.0
        %2415 = vmatpush1.msra.mxu0 0.0
        %2416 = vmatprep.subr.mxu0 0.0
        %2417 = vmatpush1.msra.mxu0 0.0
        %2418 = vmatprep.subr.mxu0 0.0
        %2419 = vmatpush1.msra.mxu0 0.0
        %2420 = vmatprep.subr.mxu0 0.0
        %2421 = vmatpush1.msra.mxu0 0.0
        %2422 = vmatprep.subr.mxu0 0.0
        %2423 = vmatpush1.msra.mxu0 0.0
        %2424 = vmatprep.subr.mxu0 0.0
        %2425 = vmatpush1.msra.mxu0 0.0
        %2426 = vmatprep.subr.mxu0 0.0
        %2427 = vmatpush1.msra.mxu0 0.0
        %2428 = vmatprep.subr.mxu0 0.0
        %2429 = vmatpush1.msra.mxu0 0.0
        %2430 = vmatprep.subr.mxu0 0.0
        %2431 = vmatpush1.msra.mxu0 0.0
        %2432 = vmatprep.subr.mxu0 0.0
        %2433 = vmatpush1.msra.mxu0 0.0
        %2434 = vmatprep.subr.mxu0 0.0
        %2435 = vmatpush1.msra.mxu0 0.0
        %2436 = vmatprep.subr.mxu0 0.0
        %2437 = vmatpush1.msra.mxu0 0.0
        %2438 = vmatprep.subr.mxu0 0.0
        %2439 = vmatpush1.msra.mxu0 0.0
        %2440 = vmatprep.subr.mxu0 0.0
        %2441 = vmatpush1.msra.mxu0 0.0
        %2442 = vmatprep.subr.mxu0 0.0
        %2443 = vmatpush1.msra.mxu0 0.0
        %2444 = vmatprep.subr.mxu0 0.0
        %2445 = vmatpush1.msra.mxu0 0.0
        %2446 = vmatprep.subr.mxu0 0.0
        %2447 = vmatpush1.msra.mxu0 0.0
        %2448 = vmatprep.subr.mxu0 0.0
        %2449 = vmatpush1.msra.mxu0 0.0
        %2450 = vmatprep.subr.mxu0 0.0
        %2451 = vmatpush1.msra.mxu0 0.0
        %2452 = vmatprep.subr.mxu0 0.0
        %2453 = vmatpush1.msra.mxu0 0.0
        %2454 = vmatprep.subr.mxu0 0.0
        %2455 = vmatpush1.msra.mxu0 0.0
        %2456 = vmatprep.subr.mxu0 0.0
        %2457 = vmatpush1.msra.mxu0 0.0
        %2458 = vmatprep.subr.mxu0 0.0
        %2459 = vmatpush1.msra.mxu0 0.0
        %2460 = vmatprep.subr.mxu0 0.0
        %2461 = vmatpush1.msra.mxu0 0.0
        %2462 = vmatprep.subr.mxu0 0.0
        %2463 = vmatpush1.msra.mxu0 0.0
        %2464 = vmatprep.subr.mxu0 0.0
        %2465 = vmatpush1.msra.mxu0 0.0
        %2466 = vmatprep.subr.mxu0 0.0
        %2467 = vmatpush1.msra.mxu0 0.0
        %2468 = vmatprep.subr.mxu0 0.0
        %2469 = vmatpush1.msra.mxu0 0.0
        %2470 = vmatprep.mubr.f32.mxu0 0.0
        %2471 = vmatmul.mubr.f32.gmra.mrb[0].mxu0 %v2395
        %v2472 = vpop.f32.mrb[0].mxu0
        %v2473 = vadd.f32 0.0, %v2472
        %v2474 = vpop.f32.mrb[0].mxu0
        %2475 = vmatprep.mubr.f32.mxu0 0.0
        %2476 = vmatmul.mubr.f32.gmra.mrb[0].mxu0 %v2398
        %v2477 = vpop.f32.mrb[0].mxu0
        %v2478 = vadd.f32 0.0, %v2477
        %v2479 = vpop.f32.mrb[0].mxu0
        %2480 = vmatprep.mubr.f32.mxu0 0.0
        %2481 = vmatmul.mubr.f32.gmra.mrb[0].mxu0 %v2401
        %v2482 = vpop.f32.mrb[0].mxu0
        %v2483 = vadd.f32 0.0, %v2482
        %v2484 = vpop.f32.mrb[0].mxu0
        %2485 = vdwg.mxu0
        %v2486 = vadd.f32 %v2278, %v2473
        %v2487 = vadd.f32 %v2279, %v2478
        %v2488 = vadd.f32 %v2280, %v2483
        %v2489 = vadd.f32 %v924, %v2486
        %v2490 = vadd.f32 %v925, %v2487
        %v2491 = vadd.f32 %v926, %v2488
        %v2492 = vld [vmem:[%s10] sm:$0x1]
        %v2494 = vlaneseq
        %v2495 = vshrl.u32 %v2494, 7
        %v2496 = vsub.s32 0, %v2495
        %v2497 = vrot.slane %v2492, %v2496
        %v2499 = vadd.f32 %v2489, %v2497
        %v2500 = vadd.f32 %v2490, %v2497
        %v2501 = vadd.f32 %v2491, %v2497
        %v2502 = vld [vmem:[%s11] sm:$0x1]
        %v2503 = vld [vmem:[%s12] sm:$0x1]
        %2504 = vadd.xlane.f32.xlu0 %v2499
        %v2505 = vpop.xlane.xlu0 %2504
        %2506 = vadd.xlane.f32.xlu0 %v2500
        %v2507 = vpop.xlane.xlu0 %2506
        %v2508 = vsel %vm871, %v2501, 0.0
        %2509 = vadd.xlane.f32.xlu0 %v2508
        %v2510 = vpop.xlane.xlu0 %2509
        %v2511 = vmul.f32 %v2499, %v2499
        %v2512 = vmul.f32 %v2500, %v2500
        %v2513 = vmul.f32 %v2501, %v2501
        %2514 = vadd.xlane.f32.xlu0 %v2511
        %v2515 = vpop.xlane.xlu0 %2514
        %2516 = vadd.xlane.f32.xlu0 %v2512
        %v2517 = vpop.xlane.xlu0 %2516
        %v2518 = vsel %vm871, %v2513, 0.0
        %2519 = vadd.xlane.f32.xlu0 %v2518
        %v2520 = vpop.xlane.xlu0 %2519
        %v2521 = vmul.f32 %v2505, 0.015625
        %v2522 = vmul.f32 %v2507, 0.015625
        %v2523 = vmul.f32 %v2510, 0.015625
        %v2524 = vmul.f32 %v2515, 0.015625
        %v2525 = vmul.f32 %v2517, 0.015625
        %v2526 = vmul.f32 %v2520, 0.015625
        %v2527 = vmul.f32 %v2521, %v2521
        %v2528 = vmul.f32 %v2522, %v2522
        %v2529 = vmul.f32 %v2523, %v2523
        %v2530 = vsub.f32 %v2524, %v2527
        %v2531 = vsub.f32 %v2525, %v2528
        %v2532 = vsub.f32 %v2526, %v2529
        %v2533 = vsub.f32 %v2499, %v2521
        %v2534 = vsub.f32 %v2500, %v2522
        %v2535 = vsub.f32 %v2501, %v2523
        %v2536 = vadd.f32 %v2530, 1e-05
        %v2537 = vadd.f32 %v2531, 1e-05
        %v2538 = vadd.f32 %v2532, 1e-05
        %v2539 = vrsqrt.pop %v2536
        %v2540 = vrsqrt.pop %v2537
        %v2541 = vrsqrt.pop %v2538
        %v2542 = vmul.f32 %v2533, %v2539
        %v2543 = vmul.f32 %v2534, %v2540
        %v2544 = vmul.f32 %v2535, %v2541
        %v2546 = vlaneseq
        %v2547 = vshrl.u32 %v2546, 7
        %v2548 = vsub.s32 0, %v2547
        %v2549 = vrot.slane %v2502, %v2548
        %v2551 = vmul.f32 %v2542, %v2549
        %v2552 = vmul.f32 %v2543, %v2549
        %v2553 = vmul.f32 %v2544, %v2549
        %v2555 = vlaneseq
        %v2556 = vshrl.u32 %v2555, 7
        %v2557 = vsub.s32 0, %v2556
        %v2558 = vrot.slane %v2503, %v2557
        %v2560 = vadd.f32 %v2551, %v2558
        %v2561 = vadd.f32 %v2552, %v2558
        %v2562 = vadd.f32 %v2553, %v2558
        %v2563 = vld [vmem:[#allocation10] sm:$0xff]
        %v2564 = vld [vmem:[#allocation10 + $0x8] sm:$0xff]
        %v2565 = vld [vmem:[#allocation10 + $0x10] sm:$0xff]
        %v2566 = vld [vmem:[#allocation10 + $0x18] sm:$0xff]
        %v2567 = vld [vmem:[#allocation10 + $0x20] sm:$0xff]
        %v2568 = vld [vmem:[#allocation10 + $0x28] sm:$0xff]
        %v2569 = vld [vmem:[#allocation10 + $0x30] sm:$0xff]
        %v2570 = vld [vmem:[#allocation10 + $0x38] sm:$0xff]
        %v2571 = vld [vmem:[#allocation10 + $0x40] sm:$0xff]
        %v2572 = vld [vmem:[#allocation10 + $0x48] sm:$0xff]
        %v2573 = vld [vmem:[#allocation10 + $0x50] sm:$0xff]
        %v2574 = vld [vmem:[#allocation10 + $0x58] sm:$0xff]
        %v2575 = vld [vmem:[#allocation10 + $0x60] sm:$0xff]
        %v2576 = vld [vmem:[#allocation10 + $0x68] sm:$0xff]
        %v2577 = vld [vmem:[#allocation10 + $0x70] sm:$0xff]
        %v2578 = vld [vmem:[#allocation10 + $0x78] sm:$0xff]
        %v2579 = vld [vmem:[#allocation10 + $0x80] sm:$0xff]
        %v2580 = vld [vmem:[#allocation10 + $0x88] sm:$0xff]
        %v2581 = vld [vmem:[#allocation10 + $0x90] sm:$0xff]
        %v2582 = vld [vmem:[#allocation10 + $0x98] sm:$0xff]
        %v2583 = vld [vmem:[#allocation10 + $0xa0] sm:$0xff]
        %v2584 = vld [vmem:[#allocation10 + $0xa8] sm:$0xff]
        %v2585 = vld [vmem:[#allocation10 + $0xb0] sm:$0xff]
        %v2586 = vld [vmem:[#allocation10 + $0xb8] sm:$0xff]
        %v2587 = vld [vmem:[#allocation10 + $0xc0] sm:$0xff]
        %v2588 = vld [vmem:[#allocation10 + $0xc8] sm:$0xff]
        %v2589 = vld [vmem:[#allocation10 + $0xd0] sm:$0xff]
        %v2590 = vld [vmem:[#allocation10 + $0xd8] sm:$0xff]
        %v2591 = vld [vmem:[#allocation10 + $0xe0] sm:$0xff]
        %v2592 = vld [vmem:[#allocation10 + $0xe8] sm:$0xff]
        %v2593 = vld [vmem:[#allocation10 + $0xf0] sm:$0xff]
        %v2594 = vld [vmem:[#allocation10 + $0xf8] sm:$0xff]
        %v2595 = vld [vmem:[%s14] sm:$0x3]
        %v2597 = vlaneseq
        %v2598 = vshrl.u32 %v2597, 7
        %v2599 = vsub.s32 0, %v2598
        %v2600 = vrot.slane %v2595, %v2599
        %v2601 = vlaneseq
        %v2602 = vshrl.u32 %v2601, 7
        %v2603 = vsub.s32 1, %v2602
        %v2604 = vrot.slane %v2595, %v2603
        %2607 = vmatprep.subr.mxu0 %v2564
        %2608 = vmatpush1.msra.mxu0 %v2563
        %2609 = vmatprep.subr.mxu0 %v2566
        %2610 = vmatpush1.msra.mxu0 %v2565
        %2611 = vmatprep.subr.mxu0 %v2568
        %2612 = vmatpush1.msra.mxu0 %v2567
        %2613 = vmatprep.subr.mxu0 %v2570
        %2614 = vmatpush1.msra.mxu0 %v2569
        %2615 = vmatprep.subr.mxu0 %v2572
        %2616 = vmatpush1.msra.mxu0 %v2571
        %2617 = vmatprep.subr.mxu0 %v2574
        %2618 = vmatpush1.msra.mxu0 %v2573
        %2619 = vmatprep.subr.mxu0 %v2576
        %2620 = vmatpush1.msra.mxu0 %v2575
        %2621 = vmatprep.subr.mxu0 %v2578
        %2622 = vmatpush1.msra.mxu0 %v2577
        %2623 = vmatprep.subr.mxu0 %v2580
        %2624 = vmatpush1.msra.mxu0 %v2579
        %2625 = vmatprep.subr.mxu0 %v2582
        %2626 = vmatpush1.msra.mxu0 %v2581
        %2627 = vmatprep.subr.mxu0 %v2584
        %2628 = vmatpush1.msra.mxu0 %v2583
        %2629 = vmatprep.subr.mxu0 %v2586
        %2630 = vmatpush1.msra.mxu0 %v2585
        %2631 = vmatprep.subr.mxu0 %v2588
        %2632 = vmatpush1.msra.mxu0 %v2587
        %2633 = vmatprep.subr.mxu0 %v2590
        %2634 = vmatpush1.msra.mxu0 %v2589
        %2635 = vmatprep.subr.mxu0 %v2592
        %2636 = vmatpush1.msra.mxu0 %v2591
        %2637 = vmatprep.subr.mxu0 %v2594
        %2638 = vmatpush1.msra.mxu0 %v2593
        %2639 = vmatprep.subr.mxu0 0.0
        %2640 = vmatpush1.msra.mxu0 0.0
        %2641 = vmatprep.subr.mxu0 0.0
        %2642 = vmatpush1.msra.mxu0 0.0
        %2643 = vmatprep.subr.mxu0 0.0
        %2644 = vmatpush1.msra.mxu0 0.0
        %2645 = vmatprep.subr.mxu0 0.0
        %2646 = vmatpush1.msra.mxu0 0.0
        %2647 = vmatprep.subr.mxu0 0.0
        %2648 = vmatpush1.msra.mxu0 0.0
        %2649 = vmatprep.subr.mxu0 0.0
        %2650 = vmatpush1.msra.mxu0 0.0
        %2651 = vmatprep.subr.mxu0 0.0
        %2652 = vmatpush1.msra.mxu0 0.0
        %2653 = vmatprep.subr.mxu0 0.0
        %2654 = vmatpush1.msra.mxu0 0.0
        %2655 = vmatprep.subr.mxu0 0.0
        %2656 = vmatpush1.msra.mxu0 0.0
        %2657 = vmatprep.subr.mxu0 0.0
        %2658 = vmatpush1.msra.mxu0 0.0
        %2659 = vmatprep.subr.mxu0 0.0
        %2660 = vmatpush1.msra.mxu0 0.0
        %2661 = vmatprep.subr.mxu0 0.0
        %2662 = vmatpush1.msra.mxu0 0.0
        %2663 = vmatprep.subr.mxu0 0.0
        %2664 = vmatpush1.msra.mxu0 0.0
        %2665 = vmatprep.subr.mxu0 0.0
        %2666 = vmatpush1.msra.mxu0 0.0
        %2667 = vmatprep.subr.mxu0 0.0
        %2668 = vmatpush1.msra.mxu0 0.0
        %2669 = vmatprep.subr.mxu0 0.0
        %2670 = vmatpush1.msra.mxu0 0.0
        %2671 = vmatprep.mubr.f32.mxu0 0.0
        %2672 = vmatmul.mubr.f32.gmra.mrb[0].mxu0 %v2560
        %v2673 = vpop.f32.mrb[0].mxu0
        %v2674 = vadd.f32 %v2600, %v2673
        %v2675 = vpop.f32.mrb[0].mxu0
        %v2676 = vadd.f32 %v2604, %v2675
        %2677 = vmatprep.mubr.f32.mxu0 0.0
        %2678 = vmatmul.mubr.f32.gmra.mrb[0].mxu0 %v2561
        %v2679 = vpop.f32.mrb[0].mxu0
        %v2680 = vadd.f32 %v2600, %v2679
        %v2681 = vpop.f32.mrb[0].mxu0
        %v2682 = vadd.f32 %v2604, %v2681
        %2683 = vmatprep.mubr.f32.mxu0 0.0
        %2684 = vmatmul.mubr.f32.gmra.mrb[0].mxu0 %v2562
        %v2685 = vpop.f32.mrb[0].mxu0
        %v2686 = vadd.f32 %v2600, %v2685
        %v2687 = vpop.f32.mrb[0].mxu0
        %v2688 = vadd.f32 %v2604, %v2687
        %2689 = vdwg.mxu0
        %v2690 = vmul.f32 %v2674, 0.5
        %v2691 = vmul.f32 %v2676, 0.5
        %v2692 = vmul.f32 %v2680, 0.5
        %v2693 = vmul.f32 %v2682, 0.5
        %v2694 = vmul.f32 %v2686, 0.5
        %v2695 = vmul.f32 %v2688, 0.5
        %v2696 = vmul.f32 %v2674, %v2674
        %v2697 = vmul.f32 %v2676, %v2676
        %v2698 = vmul.f32 %v2680, %v2680
        %v2699 = vmul.f32 %v2682, %v2682
        %v2700 = vmul.f32 %v2686, %v2686
        %v2701 = vmul.f32 %v2688, %v2688
        %v2702 = vmul.f32 %v2696, %v2674
        %v2703 = vmul.f32 %v2697, %v2676
        %v2704 = vmul.f32 %v2698, %v2680
        %v2705 = vmul.f32 %v2699, %v2682
        %v2706 = vmul.f32 %v2700, %v2686
        %v2707 = vmul.f32 %v2701, %v2688
        %v2708 = vmul.f32 %v2702, 0.044715
        %v2709 = vmul.f32 %v2703, 0.044715
        %v2710 = vmul.f32 %v2704, 0.044715
        %v2711 = vmul.f32 %v2705, 0.044715
        %v2712 = vmul.f32 %v2706, 0.044715
        %v2713 = vmul.f32 %v2707, 0.044715
        %v2714 = vadd.f32 %v2674, %v2708
        %v2715 = vadd.f32 %v2676, %v2709
        %v2716 = vadd.f32 %v2680, %v2710
        %v2717 = vadd.f32 %v2682, %v2711
        %v2718 = vadd.f32 %v2686, %v2712
        %v2719 = vadd.f32 %v2688, %v2713
        %v2720 = vmul.f32 %v2714, 0.7978846
        %v2721 = vmul.f32 %v2715, 0.7978846
        %v2722 = vmul.f32 %v2716, 0.7978846
        %v2723 = vmul.f32 %v2717, 0.7978846
        %v2724 = vmul.f32 %v2718, 0.7978846
        %v2725 = vmul.f32 %v2719, 0.7978846
        %v2726 = vtanh.pop %v2720
        %v2727 = vtanh.pop %v2721
        %v2728 = vtanh.pop %v2722
        %v2729 = vtanh.pop %v2723
        %v2730 = vtanh.pop %v2724
        %v2731 = vtanh.pop %v2725
        %v2732 = vadd.f32 %v2726, 1.0
        %v2733 = vadd.f32 %v2727, 1.0
        %v2734 = vadd.f32 %v2728, 1.0
        %v2735 = vadd.f32 %v2729, 1.0
        %v2736 = vadd.f32 %v2730, 1.0
        %v2737 = vadd.f32 %v2731, 1.0
        %v2738 = vmul.f32 %v2690, %v2732
        %v2739 = vmul.f32 %v2691, %v2733
        %v2740 = vmul.f32 %v2692, %v2734
        %v2741 = vmul.f32 %v2693, %v2735
        %v2742 = vmul.f32 %v2694, %v2736
        %v2743 = vmul.f32 %v2695, %v2737
        %v2744 = vld [vmem:[#allocation11] sm:$0xff]
        %v2745 = vld [vmem:[#allocation11 + $0x8] sm:$0xff]
        %v2746 = vld [vmem:[#allocation11 + $0x10] sm:$0xff]
        %v2747 = vld [vmem:[#allocation11 + $0x18] sm:$0xff]
        %v2748 = vld [vmem:[#allocation11 + $0x20] sm:$0xff]
        %v2749 = vld [vmem:[#allocation11 + $0x28] sm:$0xff]
        %v2750 = vld [vmem:[#allocation11 + $0x30] sm:$0xff]
        %v2751 = vld [vmem:[#allocation11 + $0x38] sm:$0xff]
        %v2752 = vld [vmem:[#allocation11 + $0x40] sm:$0xff]
        %v2753 = vld [vmem:[#allocation11 + $0x48] sm:$0xff]
        %v2754 = vld [vmem:[#allocation11 + $0x50] sm:$0xff]
        %v2755 = vld [vmem:[#allocation11 + $0x58] sm:$0xff]
        %v2756 = vld [vmem:[#allocation11 + $0x60] sm:$0xff]
        %v2757 = vld [vmem:[#allocation11 + $0x68] sm:$0xff]
        %v2758 = vld [vmem:[#allocation11 + $0x70] sm:$0xff]
        %v2759 = vld [vmem:[#allocation11 + $0x78] sm:$0xff]
        %v2760 = vld [vmem:[#allocation11 + $0x80] sm:$0xff]
        %v2761 = vld [vmem:[#allocation11 + $0x88] sm:$0xff]
        %v2762 = vld [vmem:[#allocation11 + $0x90] sm:$0xff]
        %v2763 = vld [vmem:[#allocation11 + $0x98] sm:$0xff]
        %v2764 = vld [vmem:[#allocation11 + $0xa0] sm:$0xff]
        %v2765 = vld [vmem:[#allocation11 + $0xa8] sm:$0xff]
        %v2766 = vld [vmem:[#allocation11 + $0xb0] sm:$0xff]
        %v2767 = vld [vmem:[#allocation11 + $0xb8] sm:$0xff]
        %v2768 = vld [vmem:[#allocation11 + $0xc0] sm:$0xff]
        %v2769 = vld [vmem:[#allocation11 + $0xc8] sm:$0xff]
        %v2770 = vld [vmem:[#allocation11 + $0xd0] sm:$0xff]
        %v2771 = vld [vmem:[#allocation11 + $0xd8] sm:$0xff]
        %v2772 = vld [vmem:[#allocation11 + $0xe0] sm:$0xff]
        %v2773 = vld [vmem:[#allocation11 + $0xe8] sm:$0xff]
        %v2774 = vld [vmem:[#allocation11 + $0xf0] sm:$0xff]
        %v2775 = vld [vmem:[#allocation11 + $0xf8] sm:$0xff]
        %2776 = vmatprep.subr.mxu0 0.0
        %2777 = vmatpush1.msra.mxu0 %v2744
        %2778 = vmatprep.subr.mxu0 0.0
        %2779 = vmatpush1.msra.mxu0 %v2745
        %2780 = vmatprep.subr.mxu0 0.0
        %2781 = vmatpush1.msra.mxu0 %v2746
        %2782 = vmatprep.subr.mxu0 0.0
        %2783 = vmatpush1.msra.mxu0 %v2747
        %2784 = vmatprep.subr.mxu0 0.0
        %2785 = vmatpush1.msra.mxu0 %v2748
        %2786 = vmatprep.subr.mxu0 0.0
        %2787 = vmatpush1.msra.mxu0 %v2749
        %2788 = vmatprep.subr.mxu0 0.0
        %2789 = vmatpush1.msra.mxu0 %v2750
        %2790 = vmatprep.subr.mxu0 0.0
        %2791 = vmatpush1.msra.mxu0 %v2751
        %2792 = vmatprep.subr.mxu0 0.0
        %2793 = vmatpush1.msra.mxu0 %v2752
        %2794 = vmatprep.subr.mxu0 0.0
        %2795 = vmatpush1.msra.mxu0 %v2753
        %2796 = vmatprep.subr.mxu0 0.0
        %2797 = vmatpush1.msra.mxu0 %v2754
        %2798 = vmatprep.subr.mxu0 0.0
        %2799 = vmatpush1.msra.mxu0 %v2755
        %2800 = vmatprep.subr.mxu0 0.0
        %2801 = vmatpush1.msra.mxu0 %v2756
        %2802 = vmatprep.subr.mxu0 0.0
        %2803 = vmatpush1.msra.mxu0 %v2757
        %2804 = vmatprep.subr.mxu0 0.0
        %2805 = vmatpush1.msra.mxu0 %v2758
        %2806 = vmatprep.subr.mxu0 0.0
        %2807 = vmatpush1.msra.mxu0 %v2759
        %2808 = vmatprep.subr.mxu0 0.0
        %2809 = vmatpush1.msra.mxu0 %v2760
        %2810 = vmatprep.subr.mxu0 0.0
        %2811 = vmatpush1.msra.mxu0 %v2761
        %2812 = vmatprep.subr.mxu0 0.0
        %2813 = vmatpush1.msra.mxu0 %v2762
        %2814 = vmatprep.subr.mxu0 0.0
        %2815 = vmatpush1.msra.mxu0 %v2763
        %2816 = vmatprep.subr.mxu0 0.0
        %2817 = vmatpush1.msra.mxu0 %v2764
        %2818 = vmatprep.subr.mxu0 0.0
        %2819 = vmatpush1.msra.mxu0 %v2765
        %2820 = vmatprep.subr.mxu0 0.0
        %2821 = vmatpush1.msra.mxu0 %v2766
        %2822 = vmatprep.subr.mxu0 0.0
        %2823 = vmatpush1.msra.mxu0 %v2767
        %2824 = vmatprep.subr.mxu0 0.0
        %2825 = vmatpush1.msra.mxu0 %v2768
        %2826 = vmatprep.subr.mxu0 0.0
        %2827 = vmatpush1.msra.mxu0 %v2769
        %2828 = vmatprep.subr.mxu0 0.0
        %2829 = vmatpush1.msra.mxu0 %v2770
        %2830 = vmatprep.subr.mxu0 0.0
        %2831 = vmatpush1.msra.mxu0 %v2771
        %2832 = vmatprep.subr.mxu0 0.0
        %2833 = vmatpush1.msra.mxu0 %v2772
        %2834 = vmatprep.subr.mxu0 0.0
        %2835 = vmatpush1.msra.mxu0 %v2773
        %2836 = vmatprep.subr.mxu0 0.0
        %2837 = vmatpush1.msra.mxu0 %v2774
        %2838 = vmatprep.subr.mxu0 0.0
        %2839 = vmatpush1.msra.mxu0 %v2775
        %2840 = vmatprep.mubr.f32.mxu0 %v2739
        %2841 = vmatmul.mubr.f32.gmra.mrb[0].mxu0 %v2738
        %v2842 = vpop.f32.mrb[0].mxu0
        %v2843 = vadd.f32 0.0, %v2842
        %v2844 = vpop.f32.mrb[0].mxu0
        %2845 = vmatprep.mubr.f32.mxu0 %v2741
        %2846 = vmatmul.mubr.f32.gmra.mrb[0].mxu0 %v2740
        %v2847 = vpop.f32.mrb[0].mxu0
        %v2848 = vadd.f32 0.0, %v2847
        %v2849 = vpop.f32.mrb[0].mxu0
        %2850 = vmatprep.mubr.f32.mxu0 %v2743
        %2851 = vmatmul.mubr.f32.gmra.mrb[0].mxu0 %v2742
        %v2852 = vpop.f32.mrb[0].mxu0
        %v2853 = vadd.f32 0.0, %v2852
        %v2854 = vpop.f32.mrb[0].mxu0
        %2855 = vdwg.mxu0
        %v2856 = vadd.f32 %v2499, %v2843
        %v2857 = vadd.f32 %v2500, %v2848
        %v2858 = vadd.f32 %v2501, %v2853
        %v2859 = vld [vmem:[%s16] sm:$0x1]
        %v2861 = vlaneseq
        %v2862 = vshrl.u32 %v2861, 7
        %v2863 = vsub.s32 0, %v2862
        %v2864 = vrot.slane %v2859, %v2863
        %v2866 = vadd.f32 %v2856, %v2864
        %v2867 = vadd.f32 %v2857, %v2864
        %v2868 = vadd.f32 %v2858, %v2864
        %s2869 = scalar_lea.vmem %s3, 1
        %v2870 = vld [vmem:[%s2869] sm:$0x1]
        %s2871 = scalar_lea.vmem %s4, 1
        %v2872 = vld [vmem:[%s2871] sm:$0x1]
        %2873 = vadd.xlane.f32.xlu0 %v2866
        %v2874 = vpop.xlane.xlu0 %2873
        %2875 = vadd.xlane.f32.xlu0 %v2867
        %v2876 = vpop.xlane.xlu0 %2875
        %v2877 = vsel %vm871, %v2868, 0.0
        %2878 = vadd.xlane.f32.xlu0 %v2877
        %v2879 = vpop.xlane.xlu0 %2878
        %v2880 = vmul.f32 %v2866, %v2866
        %v2881 = vmul.f32 %v2867, %v2867
        %v2882 = vmul.f32 %v2868, %v2868
        %2883 = vadd.xlane.f32.xlu0 %v2880
        %v2884 = vpop.xlane.xlu0 %2883
        %2885 = vadd.xlane.f32.xlu0 %v2881
        %v2886 = vpop.xlane.xlu0 %2885
        %v2887 = vsel %vm871, %v2882, 0.0
        %2888 = vadd.xlane.f32.xlu0 %v2887
        %v2889 = vpop.xlane.xlu0 %2888
        %v2890 = vmul.f32 %v2874, 0.015625
        %v2891 = vmul.f32 %v2876, 0.015625
        %v2892 = vmul.f32 %v2879, 0.015625
        %v2893 = vmul.f32 %v2884, 0.015625
        %v2894 = vmul.f32 %v2886, 0.015625
        %v2895 = vmul.f32 %v2889, 0.015625
        %v2896 = vmul.f32 %v2890, %v2890
        %v2897 = vmul.f32 %v2891, %v2891
        %v2898 = vmul.f32 %v2892, %v2892
        %v2899 = vsub.f32 %v2893, %v2896
        %v2900 = vsub.f32 %v2894, %v2897
        %v2901 = vsub.f32 %v2895, %v2898
        %v2902 = vsub.f32 %v2866, %v2890
        %v2903 = vsub.f32 %v2867, %v2891
        %v2904 = vsub.f32 %v2868, %v2892
        %v2905 = vadd.f32 %v2899, 1e-05
        %v2906 = vadd.f32 %v2900, 1e-05
        %v2907 = vadd.f32 %v2901, 1e-05
        %v2908 = vrsqrt.pop %v2905
        %v2909 = vrsqrt.pop %v2906
        %v2910 = vrsqrt.pop %v2907
        %v2911 = vmul.f32 %v2902, %v2908
        %v2912 = vmul.f32 %v2903, %v2909
        %v2913 = vmul.f32 %v2904, %v2910
        %v2915 = vlaneseq
        %v2916 = vshrl.u32 %v2915, 7
        %v2917 = vsub.s32 0, %v2916
        %v2918 = vrot.slane %v2870, %v2917
        %v2920 = vmul.f32 %v2911, %v2918
        %v2921 = vmul.f32 %v2912, %v2918
        %v2922 = vmul.f32 %v2913, %v2918
        %v2924 = vlaneseq
        %v2925 = vshrl.u32 %v2924, 7
        %v2926 = vsub.s32 0, %v2925
        %v2927 = vrot.slane %v2872, %v2926
        %v2929 = vadd.f32 %v2920, %v2927
        %v2930 = vadd.f32 %v2921, %v2927
        %v2931 = vadd.f32 %v2922, %v2927
        %s2932 = scalar_lea.vmem [#allocation5], 512
        %v2933 = vld [vmem:[%s2932] sm:$0xff]
        %v2934 = vld [vmem:[%s2932 + $0x8] sm:$0xff]
        %v2935 = vld [vmem:[%s2932 + $0x10] sm:$0xff]
        %v2936 = vld [vmem:[%s2932 + $0x18] sm:$0xff]
        %v2937 = vld [vmem:[%s2932 + $0x20] sm:$0xff]
        %v2938 = vld [vmem:[%s2932 + $0x28] sm:$0xff]
        %v2939 = vld [vmem:[%s2932 + $0x30] sm:$0xff]
        %v2940 = vld [vmem:[%s2932 + $0x38] sm:$0xff]
        %v2941 = vld [vmem:[%s2932 + $0x40] sm:$0xff]
        %v2942 = vld [vmem:[%s2932 + $0x48] sm:$0xff]
        %v2943 = vld [vmem:[%s2932 + $0x50] sm:$0xff]
        %v2944 = vld [vmem:[%s2932 + $0x58] sm:$0xff]
        %v2945 = vld [vmem:[%s2932 + $0x60] sm:$0xff]
        %v2946 = vld [vmem:[%s2932 + $0x68] sm:$0xff]
        %v2947 = vld [vmem:[%s2932 + $0x70] sm:$0xff]
        %v2948 = vld [vmem:[%s2932 + $0x78] sm:$0xff]
        %v2949 = vld [vmem:[%s2932 + $0x80] sm:$0xff]
        %v2950 = vld [vmem:[%s2932 + $0x88] sm:$0xff]
        %v2951 = vld [vmem:[%s2932 + $0x90] sm:$0xff]
        %v2952 = vld [vmem:[%s2932 + $0x98] sm:$0xff]
        %v2953 = vld [vmem:[%s2932 + $0xa0] sm:$0xff]
        %v2954 = vld [vmem:[%s2932 + $0xa8] sm:$0xff]
        %v2955 = vld [vmem:[%s2932 + $0xb0] sm:$0xff]
        %v2956 = vld [vmem:[%s2932 + $0xb8] sm:$0xff]
        %v2957 = vld [vmem:[%s2932 + $0xc0] sm:$0xff]
        %v2958 = vld [vmem:[%s2932 + $0xc8] sm:$0xff]
        %v2959 = vld [vmem:[%s2932 + $0xd0] sm:$0xff]
        %v2960 = vld [vmem:[%s2932 + $0xd8] sm:$0xff]
        %v2961 = vld [vmem:[%s2932 + $0xe0] sm:$0xff]
        %v2962 = vld [vmem:[%s2932 + $0xe8] sm:$0xff]
        %v2963 = vld [vmem:[%s2932 + $0xf0] sm:$0xff]
        %v2964 = vld [vmem:[%s2932 + $0xf8] sm:$0xff]
        %v2965 = vld [vmem:[%s2932 + $0x100] sm:$0xff]
        %v2966 = vld [vmem:[%s2932 + $0x108] sm:$0xff]
        %v2967 = vld [vmem:[%s2932 + $0x110] sm:$0xff]
        %v2968 = vld [vmem:[%s2932 + $0x118] sm:$0xff]
        %v2969 = vld [vmem:[%s2932 + $0x120] sm:$0xff]
        %v2970 = vld [vmem:[%s2932 + $0x128] sm:$0xff]
        %v2971 = vld [vmem:[%s2932 + $0x130] sm:$0xff]
        %v2972 = vld [vmem:[%s2932 + $0x138] sm:$0xff]
        %v2973 = vld [vmem:[%s2932 + $0x140] sm:$0xff]
        %v2974 = vld [vmem:[%s2932 + $0x148] sm:$0xff]
        %v2975 = vld [vmem:[%s2932 + $0x150] sm:$0xff]
        %v2976 = vld [vmem:[%s2932 + $0x158] sm:$0xff]
        %v2977 = vld [vmem:[%s2932 + $0x160] sm:$0xff]
        %v2978 = vld [vmem:[%s2932 + $0x168] sm:$0xff]
        %v2979 = vld [vmem:[%s2932 + $0x170] sm:$0xff]
        %v2980 = vld [vmem:[%s2932 + $0x178] sm:$0xff]
        %v2981 = vld [vmem:[%s2932 + $0x180] sm:$0xff]
        %v2982 = vld [vmem:[%s2932 + $0x188] sm:$0xff]
        %v2983 = vld [vmem:[%s2932 + $0x190] sm:$0xff]
        %v2984 = vld [vmem:[%s2932 + $0x198] sm:$0xff]
        %v2985 = vld [vmem:[%s2932 + $0x1a0] sm:$0xff]
        %v2986 = vld [vmem:[%s2932 + $0x1a8] sm:$0xff]
        %v2987 = vld [vmem:[%s2932 + $0x1b0] sm:$0xff]
        %v2988 = vld [vmem:[%s2932 + $0x1b8] sm:$0xff]
        %v2989 = vld [vmem:[%s2932 + $0x1c0] sm:$0xff]
        %v2990 = vld [vmem:[%s2932 + $0x1c8] sm:$0xff]
        %v2991 = vld [vmem:[%s2932 + $0x1d0] sm:$0xff]
        %v2992 = vld [vmem:[%s2932 + $0x1d8] sm:$0xff]
        %v2993 = vld [vmem:[%s2932 + $0x1e0] sm:$0xff]
        %v2994 = vld [vmem:[%s2932 + $0x1e8] sm:$0xff]
        %v2995 = vld [vmem:[%s2932 + $0x1f0] sm:$0xff]
        %v2996 = vld [vmem:[%s2932 + $0x1f8] sm:$0xff]
        %s2997 = scalar_lea.vmem %s6, 4
        %v2998 = vld [vmem:[%s2997] sm:$0xf]
        %v3000 = vlaneseq
        %v3001 = vshrl.u32 %v3000, 7
        %v3002 = vsub.s32 0, %v3001
        %v3003 = vrot.slane %v2998, %v3002
        %v3004 = vlaneseq
        %v3005 = vshrl.u32 %v3004, 7
        %v3006 = vsub.s32 1, %v3005
        %v3007 = vrot.slane %v2998, %v3006
        %v3008 = vlaneseq
        %v3009 = vshrl.u32 %v3008, 7
        %v3010 = vsub.s32 2, %v3009
        %v3011 = vrot.slane %v2998, %v3010
        %v3012 = vlaneseq
        %v3013 = vshrl.u32 %v3012, 7
        %v3014 = vsub.s32 3, %v3013
        %v3015 = vrot.slane %v2998, %v3014
        %3020 = vmatprep.subr.mxu0 %v2934
        %3021 = vmatpush1.msra.mxu0 %v2933
        %3022 = vmatprep.subr.mxu0 %v2938
        %3023 = vmatpush1.msra.mxu0 %v2937
        %3024 = vmatprep.subr.mxu0 %v2942
        %3025 = vmatpush1.msra.mxu0 %v2941
        %3026 = vmatprep.subr.mxu0 %v2946
        %3027 = vmatpush1.msra.mxu0 %v2945
        %3028 = vmatprep.subr.mxu0 %v2950
        %3029 = vmatpush1.msra.mxu0 %v2949
        %3030 = vmatprep.subr.mxu0 %v2954
        %3031 = vmatpush1.msra.mxu0 %v2953
        %3032 = vmatprep.subr.mxu0 %v2958
        %3033 = vmatpush1.msra.mxu0 %v2957
        %3034 = vmatprep.subr.mxu0 %v2962
        %3035 = vmatpush1.msra.mxu0 %v2961
        %3036 = vmatprep.subr.mxu0 %v2966
        %3037 = vmatpush1.msra.mxu0 %v2965
        %3038 = vmatprep.subr.mxu0 %v2970
        %3039 = vmatpush1.msra.mxu0 %v2969
        %3040 = vmatprep.subr.mxu0 %v2974
        %3041 = vmatpush1.msra.mxu0 %v2973
        %3042 = vmatprep.subr.mxu0 %v2978
        %3043 = vmatpush1.msra.mxu0 %v2977
        %3044 = vmatprep.subr.mxu0 %v2982
        %3045 = vmatpush1.msra.mxu0 %v2981
        %3046 = vmatprep.subr.mxu0 %v2986
        %3047 = vmatpush1.msra.mxu0 %v2985
        %3048 = vmatprep.subr.mxu0 %v2990
        %3049 = vmatpush1.msra.mxu0 %v2989
        %3050 = vmatprep.subr.mxu0 %v2994
        %3051 = vmatpush1.msra.mxu0 %v2993
        %3052 = vmatprep.subr.mxu0 0.0
        %3053 = vmatpush1.msra.mxu0 0.0
        %3054 = vmatprep.subr.mxu0 0.0
        %3055 = vmatpush1.msra.mxu0 0.0
        %3056 = vmatprep.subr.mxu0 0.0
        %3057 = vmatpush1.msra.mxu0 0.0
        %3058 = vmatprep.subr.mxu0 0.0
        %3059 = vmatpush1.msra.mxu0 0.0
        %3060 = vmatprep.subr.mxu0 0.0
        %3061 = vmatpush1.msra.mxu0 0.0
        %3062 = vmatprep.subr.mxu0 0.0
        %3063 = vmatpush1.msra.mxu0 0.0
        %3064 = vmatprep.subr.mxu0 0.0
        %3065 = vmatpush1.msra.mxu0 0.0
        %3066 = vmatprep.subr.mxu0 0.0
        %3067 = vmatpush1.msra.mxu0 0.0
        %3068 = vmatprep.subr.mxu0 0.0
        %3069 = vmatpush1.msra.mxu0 0.0
        %3070 = vmatprep.subr.mxu0 0.0
        %3071 = vmatpush1.msra.mxu0 0.0
        %3072 = vmatprep.subr.mxu0 0.0
        %3073 = vmatpush1.msra.mxu0 0.0
        %3074 = vmatprep.subr.mxu0 0.0
        %3075 = vmatpush1.msra.mxu0 0.0
        %3076 = vmatprep.subr.mxu0 0.0
        %3077 = vmatpush1.msra.mxu0 0.0
        %3078 = vmatprep.subr.mxu0 0.0
        %3079 = vmatpush1.msra.mxu0 0.0
        %3080 = vmatprep.subr.mxu0 0.0
        %3081 = vmatpush1.msra.mxu0 0.0
        %3082 = vmatprep.subr.mxu0 0.0
        %3083 = vmatpush1.msra.mxu0 0.0
        %3084 = vmatprep.mubr.f32.mxu0 0.0
        %3085 = vmatmul.mubr.f32.gmra.mrb[0].mxu0 %v2929
        %v3086 = vpop.f32.mrb[0].mxu0
        %v3087 = vadd.f32 %v3003, %v3086
        %v3088 = vpop.f32.mrb[0].mxu0
        %v3089 = vadd.f32 %v3007, %v3088
        %3090 = vmatprep.mubr.f32.mxu0 0.0
        %3091 = vmatmul.mubr.f32.gmra.mrb[0].mxu0 %v2930
        %v3092 = vpop.f32.mrb[0].mxu0
        %v3093 = vadd.f32 %v3003, %v3092
        %v3094 = vpop.f32.mrb[0].mxu0
        %v3095 = vadd.f32 %v3007, %v3094
        %3096 = vmatprep.mubr.f32.mxu0 0.0
        %3097 = vmatmul.mubr.f32.gmra.mrb[0].mxu0 %v2931
        %v3098 = vpop.f32.mrb[0].mxu0
        %v3099 = vadd.f32 %v3003, %v3098
        %v3100 = vpop.f32.mrb[0].mxu0
        %v3101 = vadd.f32 %v3007, %v3100
        %3102 = vdwg.mxu0
        %3103 = vmatprep.subr.mxu0 %v2936
        %3104 = vmatpush1.msra.mxu0 %v2935
        %3105 = vmatprep.subr.mxu0 %v2940
        %3106 = vmatpush1.msra.mxu0 %v2939
        %3107 = vmatprep.subr.mxu0 %v2944
        %3108 = vmatpush1.msra.mxu0 %v2943
        %3109 = vmatprep.subr.mxu0 %v2948
        %3110 = vmatpush1.msra.mxu0 %v2947
        %3111 = vmatprep.subr.mxu0 %v2952
        %3112 = vmatpush1.msra.mxu0 %v2951
        %3113 = vmatprep.subr.mxu0 %v2956
        %3114 = vmatpush1.msra.mxu0 %v2955
        %3115 = vmatprep.subr.mxu0 %v2960
        %3116 = vmatpush1.msra.mxu0 %v2959
        %3117 = vmatprep.subr.mxu0 %v2964
        %3118 = vmatpush1.msra.mxu0 %v2963
        %3119 = vmatprep.subr.mxu0 %v2968
        %3120 = vmatpush1.msra.mxu0 %v2967
        %3121 = vmatprep.subr.mxu0 %v2972
        %3122 = vmatpush1.msra.mxu0 %v2971
        %3123 = vmatprep.subr.mxu0 %v2976
        %3124 = vmatpush1.msra.mxu0 %v2975
        %3125 = vmatprep.subr.mxu0 %v2980
        %3126 = vmatpush1.msra.mxu0 %v2979
        %3127 = vmatprep.subr.mxu0 %v2984
        %3128 = vmatpush1.msra.mxu0 %v2983
        %3129 = vmatprep.subr.mxu0 %v2988
        %3130 = vmatpush1.msra.mxu0 %v2987
        %3131 = vmatprep.subr.mxu0 %v2992
        %3132 = vmatpush1.msra.mxu0 %v2991
        %3133 = vmatprep.subr.mxu0 %v2996
        %3134 = vmatpush1.msra.mxu0 %v2995
        %3135 = vmatprep.subr.mxu0 0.0
        %3136 = vmatpush1.msra.mxu0 0.0
        %3137 = vmatprep.subr.mxu0 0.0
        %3138 = vmatpush1.msra.mxu0 0.0
        %3139 = vmatprep.subr.mxu0 0.0
        %3140 = vmatpush1.msra.mxu0 0.0
        %3141 = vmatprep.subr.mxu0 0.0
        %3142 = vmatpush1.msra.mxu0 0.0
        %3143 = vmatprep.subr.mxu0 0.0
        %3144 = vmatpush1.msra.mxu0 0.0
        %3145 = vmatprep.subr.mxu0 0.0
        %3146 = vmatpush1.msra.mxu0 0.0
        %3147 = vmatprep.subr.mxu0 0.0
        %3148 = vmatpush1.msra.mxu0 0.0
        %3149 = vmatprep.subr.mxu0 0.0
        %3150 = vmatpush1.msra.mxu0 0.0
        %3151 = vmatprep.subr.mxu0 0.0
        %3152 = vmatpush1.msra.mxu0 0.0
        %3153 = vmatprep.subr.mxu0 0.0
        %3154 = vmatpush1.msra.mxu0 0.0
        %3155 = vmatprep.subr.mxu0 0.0
        %3156 = vmatpush1.msra.mxu0 0.0
        %3157 = vmatprep.subr.mxu0 0.0
        %3158 = vmatpush1.msra.mxu0 0.0
        %3159 = vmatprep.subr.mxu0 0.0
        %3160 = vmatpush1.msra.mxu0 0.0
        %3161 = vmatprep.subr.mxu0 0.0
        %3162 = vmatpush1.msra.mxu0 0.0
        %3163 = vmatprep.subr.mxu0 0.0
        %3164 = vmatpush1.msra.mxu0 0.0
        %3165 = vmatprep.subr.mxu0 0.0
        %3166 = vmatpush1.msra.mxu0 0.0
        %3167 = vmatprep.mubr.f32.mxu0 0.0
        %3168 = vmatmul.mubr.f32.gmra.mrb[0].mxu0 %v2929
        %v3169 = vpop.f32.mrb[0].mxu0
        %v3170 = vadd.f32 %v3011, %v3169
        %v3171 = vpop.f32.mrb[0].mxu0
        %v3172 = vadd.f32 %v3015, %v3171
        %3173 = vmatprep.mubr.f32.mxu0 0.0
        %3174 = vmatmul.mubr.f32.gmra.mrb[0].mxu0 %v2930
        %v3175 = vpop.f32.mrb[0].mxu0
        %v3176 = vadd.f32 %v3011, %v3175
        %v3177 = vpop.f32.mrb[0].mxu0
        %v3178 = vadd.f32 %v3015, %v3177
        %3179 = vmatprep.mubr.f32.mxu0 0.0
        %3180 = vmatmul.mubr.f32.gmra.mrb[0].mxu0 %v2931
        %v3181 = vpop.f32.mrb[0].mxu0
        %v3182 = vadd.f32 %v3011, %v3181
        %v3183 = vpop.f32.mrb[0].mxu0
        %v3184 = vadd.f32 %v3015, %v3183
        %3185 = vdwg.mxu0
        %s3186 = scalar_lea.vmem [#allocation7], 512
        %v3187 = vld [vmem:[%s3186] sm:$0xff]
        %v3188 = vld [vmem:[%s3186 + $0x8] sm:$0xff]
        %v3189 = vld [vmem:[%s3186 + $0x10] sm:$0xff]
        %v3190 = vld [vmem:[%s3186 + $0x18] sm:$0xff]
        %v3191 = vld [vmem:[%s3186 + $0x20] sm:$0xff]
        %v3192 = vld [vmem:[%s3186 + $0x28] sm:$0xff]
        %v3193 = vld [vmem:[%s3186 + $0x30] sm:$0xff]
        %v3194 = vld [vmem:[%s3186 + $0x38] sm:$0xff]
        %v3195 = vld [vmem:[%s3186 + $0x40] sm:$0xff]
        %v3196 = vld [vmem:[%s3186 + $0x48] sm:$0xff]
        %v3197 = vld [vmem:[%s3186 + $0x50] sm:$0xff]
        %v3198 = vld [vmem:[%s3186 + $0x58] sm:$0xff]
        %v3199 = vld [vmem:[%s3186 + $0x60] sm:$0xff]
        %v3200 = vld [vmem:[%s3186 + $0x68] sm:$0xff]
        %v3201 = vld [vmem:[%s3186 + $0x70] sm:$0xff]
        %v3202 = vld [vmem:[%s3186 + $0x78] sm:$0xff]
        %v3203 = vld [vmem:[%s3186 + $0x80] sm:$0xff]
        %v3204 = vld [vmem:[%s3186 + $0x88] sm:$0xff]
        %v3205 = vld [vmem:[%s3186 + $0x90] sm:$0xff]
        %v3206 = vld [vmem:[%s3186 + $0x98] sm:$0xff]
        %v3207 = vld [vmem:[%s3186 + $0xa0] sm:$0xff]
        %v3208 = vld [vmem:[%s3186 + $0xa8] sm:$0xff]
        %v3209 = vld [vmem:[%s3186 + $0xb0] sm:$0xff]
        %v3210 = vld [vmem:[%s3186 + $0xb8] sm:$0xff]
        %v3211 = vld [vmem:[%s3186 + $0xc0] sm:$0xff]
        %v3212 = vld [vmem:[%s3186 + $0xc8] sm:$0xff]
        %v3213 = vld [vmem:[%s3186 + $0xd0] sm:$0xff]
        %v3214 = vld [vmem:[%s3186 + $0xd8] sm:$0xff]
        %v3215 = vld [vmem:[%s3186 + $0xe0] sm:$0xff]
        %v3216 = vld [vmem:[%s3186 + $0xe8] sm:$0xff]
        %v3217 = vld [vmem:[%s3186 + $0xf0] sm:$0xff]
        %v3218 = vld [vmem:[%s3186 + $0xf8] sm:$0xff]
        %v3219 = vld [vmem:[%s3186 + $0x100] sm:$0xff]
        %v3220 = vld [vmem:[%s3186 + $0x108] sm:$0xff]
        %v3221 = vld [vmem:[%s3186 + $0x110] sm:$0xff]
        %v3222 = vld [vmem:[%s3186 + $0x118] sm:$0xff]
        %v3223 = vld [vmem:[%s3186 + $0x120] sm:$0xff]
        %v3224 = vld [vmem:[%s3186 + $0x128] sm:$0xff]
        %v3225 = vld [vmem:[%s3186 + $0x130] sm:$0xff]
        %v3226 = vld [vmem:[%s3186 + $0x138] sm:$0xff]
        %v3227 = vld [vmem:[%s3186 + $0x140] sm:$0xff]
        %v3228 = vld [vmem:[%s3186 + $0x148] sm:$0xff]
        %v3229 = vld [vmem:[%s3186 + $0x150] sm:$0xff]
        %v3230 = vld [vmem:[%s3186 + $0x158] sm:$0xff]
        %v3231 = vld [vmem:[%s3186 + $0x160] sm:$0xff]
        %v3232 = vld [vmem:[%s3186 + $0x168] sm:$0xff]
        %v3233 = vld [vmem:[%s3186 + $0x170] sm:$0xff]
        %v3234 = vld [vmem:[%s3186 + $0x178] sm:$0xff]
        %v3235 = vld [vmem:[%s3186 + $0x180] sm:$0xff]
        %v3236 = vld [vmem:[%s3186 + $0x188] sm:$0xff]
        %v3237 = vld [vmem:[%s3186 + $0x190] sm:$0xff]
        %v3238 = vld [vmem:[%s3186 + $0x198] sm:$0xff]
        %v3239 = vld [vmem:[%s3186 + $0x1a0] sm:$0xff]
        %v3240 = vld [vmem:[%s3186 + $0x1a8] sm:$0xff]
        %v3241 = vld [vmem:[%s3186 + $0x1b0] sm:$0xff]
        %v3242 = vld [vmem:[%s3186 + $0x1b8] sm:$0xff]
        %v3243 = vld [vmem:[%s3186 + $0x1c0] sm:$0xff]
        %v3244 = vld [vmem:[%s3186 + $0x1c8] sm:$0xff]
        %v3245 = vld [vmem:[%s3186 + $0x1d0] sm:$0xff]
        %v3246 = vld [vmem:[%s3186 + $0x1d8] sm:$0xff]
        %v3247 = vld [vmem:[%s3186 + $0x1e0] sm:$0xff]
        %v3248 = vld [vmem:[%s3186 + $0x1e8] sm:$0xff]
        %v3249 = vld [vmem:[%s3186 + $0x1f0] sm:$0xff]
        %v3250 = vld [vmem:[%s3186 + $0x1f8] sm:$0xff]
        %s3251 = scalar_lea.vmem %s8, 4
        %v3252 = vld [vmem:[%s3251] sm:$0xf]
        %v3254 = vlaneseq
        %v3255 = vshrl.u32 %v3254, 7
        %v3256 = vsub.s32 0, %v3255
        %v3257 = vrot.slane %v3252, %v3256
        %v3258 = vlaneseq
        %v3259 = vshrl.u32 %v3258, 7
        %v3260 = vsub.s32 1, %v3259
        %v3261 = vrot.slane %v3252, %v3260
        %v3262 = vlaneseq
        %v3263 = vshrl.u32 %v3262, 7
        %v3264 = vsub.s32 2, %v3263
        %v3265 = vrot.slane %v3252, %v3264
        %v3266 = vlaneseq
        %v3267 = vshrl.u32 %v3266, 7
        %v3268 = vsub.s32 3, %v3267
        %v3269 = vrot.slane %v3252, %v3268
        %3274 = vmatprep.subr.mxu0 %v3188
        %3275 = vmatpush1.msra.mxu0 %v3187
        %3276 = vmatprep.subr.mxu0 %v3192
        %3277 = vmatpush1.msra.mxu0 %v3191
        %3278 = vmatprep.subr.mxu0 %v3196
        %3279 = vmatpush1.msra.mxu0 %v3195
        %3280 = vmatprep.subr.mxu0 %v3200
        %3281 = vmatpush1.msra.mxu0 %v3199
        %3282 = vmatprep.subr.mxu0 %v3204
        %3283 = vmatpush1.msra.mxu0 %v3203
        %3284 = vmatprep.subr.mxu0 %v3208
        %3285 = vmatpush1.msra.mxu0 %v3207
        %3286 = vmatprep.subr.mxu0 %v3212
        %3287 = vmatpush1.msra.mxu0 %v3211
        %3288 = vmatprep.subr.mxu0 %v3216
        %3289 = vmatpush1.msra.mxu0 %v3215
        %3290 = vmatprep.subr.mxu0 %v3220
        %3291 = vmatpush1.msra.mxu0 %v3219
        %3292 = vmatprep.subr.mxu0 %v3224
        %3293 = vmatpush1.msra.mxu0 %v3223
        %3294 = vmatprep.subr.mxu0 %v3228
        %3295 = vmatpush1.msra.mxu0 %v3227
        %3296 = vmatprep.subr.mxu0 %v3232
        %3297 = vmatpush1.msra.mxu0 %v3231
        %3298 = vmatprep.subr.mxu0 %v3236
        %3299 = vmatpush1.msra.mxu0 %v3235
        %3300 = vmatprep.subr.mxu0 %v3240
        %3301 = vmatpush1.msra.mxu0 %v3239
        %3302 = vmatprep.subr.mxu0 %v3244
        %3303 = vmatpush1.msra.mxu0 %v3243
        %3304 = vmatprep.subr.mxu0 %v3248
        %3305 = vmatpush1.msra.mxu0 %v3247
        %3306 = vmatprep.subr.mxu0 0.0
        %3307 = vmatpush1.msra.mxu0 0.0
        %3308 = vmatprep.subr.mxu0 0.0
        %3309 = vmatpush1.msra.mxu0 0.0
        %3310 = vmatprep.subr.mxu0 0.0
        %3311 = vmatpush1.msra.mxu0 0.0
        %3312 = vmatprep.subr.mxu0 0.0
        %3313 = vmatpush1.msra.mxu0 0.0
        %3314 = vmatprep.subr.mxu0 0.0
        %3315 = vmatpush1.msra.mxu0 0.0
        %3316 = vmatprep.subr.mxu0 0.0
        %3317 = vmatpush1.msra.mxu0 0.0
        %3318 = vmatprep.subr.mxu0 0.0
        %3319 = vmatpush1.msra.mxu0 0.0
        %3320 = vmatprep.subr.mxu0 0.0
        %3321 = vmatpush1.msra.mxu0 0.0
        %3322 = vmatprep.subr.mxu0 0.0
        %3323 = vmatpush1.msra.mxu0 0.0
        %3324 = vmatprep.subr.mxu0 0.0
        %3325 = vmatpush1.msra.mxu0 0.0
        %3326 = vmatprep.subr.mxu0 0.0
        %3327 = vmatpush1.msra.mxu0 0.0
        %3328 = vmatprep.subr.mxu0 0.0
        %3329 = vmatpush1.msra.mxu0 0.0
        %3330 = vmatprep.subr.mxu0 0.0
        %3331 = vmatpush1.msra.mxu0 0.0
        %3332 = vmatprep.subr.mxu0 0.0
        %3333 = vmatpush1.msra.mxu0 0.0
        %3334 = vmatprep.subr.mxu0 0.0
        %3335 = vmatpush1.msra.mxu0 0.0
        %3336 = vmatprep.subr.mxu0 0.0
        %3337 = vmatpush1.msra.mxu0 0.0
        %3338 = vmatprep.mubr.f32.mxu0 0.0
        %3339 = vmatmul.mubr.f32.gmra.mrb[0].mxu0 %v2929
        %v3340 = vpop.f32.mrb[0].mxu0
        %v3341 = vadd.f32 %v3257, %v3340
        %v3342 = vpop.f32.mrb[0].mxu0
        %v3343 = vadd.f32 %v3261, %v3342
        %3344 = vmatprep.mubr.f32.mxu0 0.0
        %3345 = vmatmul.mubr.f32.gmra.mrb[0].mxu0 %v2930
        %v3346 = vpop.f32.mrb[0].mxu0
        %v3347 = vadd.f32 %v3257, %v3346
        %v3348 = vpop.f32.mrb[0].mxu0
        %v3349 = vadd.f32 %v3261, %v3348
        %3350 = vmatprep.mubr.f32.mxu0 0.0
        %3351 = vmatmul.mubr.f32.gmra.mrb[0].mxu0 %v2931
        %v3352 = vpop.f32.mrb[0].mxu0
        %v3353 = vadd.f32 %v3257, %v3352
        %v3354 = vpop.f32.mrb[0].mxu0
        %v3355 = vadd.f32 %v3261, %v3354
        %3356 = vdwg.mxu0
        %3357 = vmatprep.subr.mxu0 %v3190
        %3358 = vmatpush1.msra.mxu0 %v3189
        %3359 = vmatprep.subr.mxu0 %v3194
        %3360 = vmatpush1.msra.mxu0 %v3193
        %3361 = vmatprep.subr.mxu0 %v3198
        %3362 = vmatpush1.msra.mxu0 %v3197
        %3363 = vmatprep.subr.mxu0 %v3202
        %3364 = vmatpush1.msra.mxu0 %v3201
        %3365 = vmatprep.subr.mxu0 %v3206
        %3366 = vmatpush1.msra.mxu0 %v3205
        %3367 = vmatprep.subr.mxu0 %v3210
        %3368 = vmatpush1.msra.mxu0 %v3209
        %3369 = vmatprep.subr.mxu0 %v3214
        %3370 = vmatpush1.msra.mxu0 %v3213
        %3371 = vmatprep.subr.mxu0 %v3218
        %3372 = vmatpush1.msra.mxu0 %v3217
        %3373 = vmatprep.subr.mxu0 %v3222
        %3374 = vmatpush1.msra.mxu0 %v3221
        %3375 = vmatprep.subr.mxu0 %v3226
        %3376 = vmatpush1.msra.mxu0 %v3225
        %3377 = vmatprep.subr.mxu0 %v3230
        %3378 = vmatpush1.msra.mxu0 %v3229
        %3379 = vmatprep.subr.mxu0 %v3234
        %3380 = vmatpush1.msra.mxu0 %v3233
        %3381 = vmatprep.subr.mxu0 %v3238
        %3382 = vmatpush1.msra.mxu0 %v3237
        %3383 = vmatprep.subr.mxu0 %v3242
        %3384 = vmatpush1.msra.mxu0 %v3241
        %3385 = vmatprep.subr.mxu0 %v3246
        %3386 = vmatpush1.msra.mxu0 %v3245
        %3387 = vmatprep.subr.mxu0 %v3250
        %3388 = vmatpush1.msra.mxu0 %v3249
        %3389 = vmatprep.subr.mxu0 0.0
        %3390 = vmatpush1.msra.mxu0 0.0
        %3391 = vmatprep.subr.mxu0 0.0
        %3392 = vmatpush1.msra.mxu0 0.0
        %3393 = vmatprep.subr.mxu0 0.0
        %3394 = vmatpush1.msra.mxu0 0.0
        %3395 = vmatprep.subr.mxu0 0.0
        %3396 = vmatpush1.msra.mxu0 0.0
        %3397 = vmatprep.subr.mxu0 0.0
        %3398 = vmatpush1.msra.mxu0 0.0
        %3399 = vmatprep.subr.mxu0 0.0
        %3400 = vmatpush1.msra.mxu0 0.0
        %3401 = vmatprep.subr.mxu0 0.0
        %3402 = vmatpush1.msra.mxu0 0.0
        %3403 = vmatprep.subr.mxu0 0.0
        %3404 = vmatpush1.msra.mxu0 0.0
        %3405 = vmatprep.subr.mxu0 0.0
        %3406 = vmatpush1.msra.mxu0 0.0
        %3407 = vmatprep.subr.mxu0 0.0
        %3408 = vmatpush1.msra.mxu0 0.0
        %3409 = vmatprep.subr.mxu0 0.0
        %3410 = vmatpush1.msra.mxu0 0.0
        %3411 = vmatprep.subr.mxu0 0.0
        %3412 = vmatpush1.msra.mxu0 0.0
        %3413 = vmatprep.subr.mxu0 0.0
        %3414 = vmatpush1.msra.mxu0 0.0
        %3415 = vmatprep.subr.mxu0 0.0
        %3416 = vmatpush1.msra.mxu0 0.0
        %3417 = vmatprep.subr.mxu0 0.0
        %3418 = vmatpush1.msra.mxu0 0.0
        %3419 = vmatprep.subr.mxu0 0.0
        %3420 = vmatpush1.msra.mxu0 0.0
        %3421 = vmatprep.mubr.f32.mxu0 0.0
        %3422 = vmatmul.mubr.f32.gmra.mrb[0].mxu0 %v2929
        %v3423 = vpop.f32.mrb[0].mxu0
        %v3424 = vadd.f32 %v3265, %v3423
        %v3425 = vpop.f32.mrb[0].mxu0
        %v3426 = vadd.f32 %v3269, %v3425
        %3427 = vmatprep.mubr.f32.mxu0 0.0
        %3428 = vmatmul.mubr.f32.gmra.mrb[0].mxu0 %v2930
        %v3429 = vpop.f32.mrb[0].mxu0
        %v3430 = vadd.f32 %v3265, %v3429
        %v3431 = vpop.f32.mrb[0].mxu0
        %v3432 = vadd.f32 %v3269, %v3431
        %3433 = vmatprep.mubr.f32.mxu0 0.0
        %3434 = vmatmul.mubr.f32.gmra.mrb[0].mxu0 %v2931
        %v3435 = vpop.f32.mrb[0].mxu0
        %v3436 = vadd.f32 %v3265, %v3435
        %v3437 = vpop.f32.mrb[0].mxu0
        %v3438 = vadd.f32 %v3269, %v3437
        %3439 = vdwg.mxu0
        %s3440 = scalar_lea.vmem [#allocation8], 512
        %v3441 = vld [vmem:[%s3440] sm:$0xff]
        %v3442 = vld [vmem:[%s3440 + $0x8] sm:$0xff]
        %v3443 = vld [vmem:[%s3440 + $0x10] sm:$0xff]
        %v3444 = vld [vmem:[%s3440 + $0x18] sm:$0xff]
        %v3445 = vld [vmem:[%s3440 + $0x20] sm:$0xff]
        %v3446 = vld [vmem:[%s3440 + $0x28] sm:$0xff]
        %v3447 = vld [vmem:[%s3440 + $0x30] sm:$0xff]
        %v3448 = vld [vmem:[%s3440 + $0x38] sm:$0xff]
        %v3449 = vld [vmem:[%s3440 + $0x40] sm:$0xff]
        %v3450 = vld [vmem:[%s3440 + $0x48] sm:$0xff]
        %v3451 = vld [vmem:[%s3440 + $0x50] sm:$0xff]
        %v3452 = vld [vmem:[%s3440 + $0x58] sm:$0xff]
        %v3453 = vld [vmem:[%s3440 + $0x60] sm:$0xff]
        %v3454 = vld [vmem:[%s3440 + $0x68] sm:$0xff]
        %v3455 = vld [vmem:[%s3440 + $0x70] sm:$0xff]
        %v3456 = vld [vmem:[%s3440 + $0x78] sm:$0xff]
        %v3457 = vld [vmem:[%s3440 + $0x80] sm:$0xff]
        %v3458 = vld [vmem:[%s3440 + $0x88] sm:$0xff]
        %v3459 = vld [vmem:[%s3440 + $0x90] sm:$0xff]
        %v3460 = vld [vmem:[%s3440 + $0x98] sm:$0xff]
        %v3461 = vld [vmem:[%s3440 + $0xa0] sm:$0xff]
        %v3462 = vld [vmem:[%s3440 + $0xa8] sm:$0xff]
        %v3463 = vld [vmem:[%s3440 + $0xb0] sm:$0xff]
        %v3464 = vld [vmem:[%s3440 + $0xb8] sm:$0xff]
        %v3465 = vld [vmem:[%s3440 + $0xc0] sm:$0xff]
        %v3466 = vld [vmem:[%s3440 + $0xc8] sm:$0xff]
        %v3467 = vld [vmem:[%s3440 + $0xd0] sm:$0xff]
        %v3468 = vld [vmem:[%s3440 + $0xd8] sm:$0xff]
        %v3469 = vld [vmem:[%s3440 + $0xe0] sm:$0xff]
        %v3470 = vld [vmem:[%s3440 + $0xe8] sm:$0xff]
        %v3471 = vld [vmem:[%s3440 + $0xf0] sm:$0xff]
        %v3472 = vld [vmem:[%s3440 + $0xf8] sm:$0xff]
        %v3473 = vld [vmem:[%s3440 + $0x100] sm:$0xff]
        %v3474 = vld [vmem:[%s3440 + $0x108] sm:$0xff]
        %v3475 = vld [vmem:[%s3440 + $0x110] sm:$0xff]
        %v3476 = vld [vmem:[%s3440 + $0x118] sm:$0xff]
        %v3477 = vld [vmem:[%s3440 + $0x120] sm:$0xff]
        %v3478 = vld [vmem:[%s3440 + $0x128] sm:$0xff]
        %v3479 = vld [vmem:[%s3440 + $0x130] sm:$0xff]
        %v3480 = vld [vmem:[%s3440 + $0x138] sm:$0xff]
        %v3481 = vld [vmem:[%s3440 + $0x140] sm:$0xff]
        %v3482 = vld [vmem:[%s3440 + $0x148] sm:$0xff]
        %v3483 = vld [vmem:[%s3440 + $0x150] sm:$0xff]
        %v3484 = vld [vmem:[%s3440 + $0x158] sm:$0xff]
        %v3485 = vld [vmem:[%s3440 + $0x160] sm:$0xff]
        %v3486 = vld [vmem:[%s3440 + $0x168] sm:$0xff]
        %v3487 = vld [vmem:[%s3440 + $0x170] sm:$0xff]
        %v3488 = vld [vmem:[%s3440 + $0x178] sm:$0xff]
        %v3489 = vld [vmem:[%s3440 + $0x180] sm:$0xff]
        %v3490 = vld [vmem:[%s3440 + $0x188] sm:$0xff]
        %v3491 = vld [vmem:[%s3440 + $0x190] sm:$0xff]
        %v3492 = vld [vmem:[%s3440 + $0x198] sm:$0xff]
        %v3493 = vld [vmem:[%s3440 + $0x1a0] sm:$0xff]
        %v3494 = vld [vmem:[%s3440 + $0x1a8] sm:$0xff]
        %v3495 = vld [vmem:[%s3440 + $0x1b0] sm:$0xff]
        %v3496 = vld [vmem:[%s3440 + $0x1b8] sm:$0xff]
        %v3497 = vld [vmem:[%s3440 + $0x1c0] sm:$0xff]
        %v3498 = vld [vmem:[%s3440 + $0x1c8] sm:$0xff]
        %v3499 = vld [vmem:[%s3440 + $0x1d0] sm:$0xff]
        %v3500 = vld [vmem:[%s3440 + $0x1d8] sm:$0xff]
        %v3501 = vld [vmem:[%s3440 + $0x1e0] sm:$0xff]
        %v3502 = vld [vmem:[%s3440 + $0x1e8] sm:$0xff]
        %v3503 = vld [vmem:[%s3440 + $0x1f0] sm:$0xff]
        %v3504 = vld [vmem:[%s3440 + $0x1f8] sm:$0xff]
        %3505 = vmatprep.subr.mxu0 %v3442
        %3506 = vmatpush1.msra.mxu0 %v3441
        %3507 = vmatprep.subr.mxu0 %v3446
        %3508 = vmatpush1.msra.mxu0 %v3445
        %3509 = vmatprep.subr.mxu0 %v3450
        %3510 = vmatpush1.msra.mxu0 %v3449
        %3511 = vmatprep.subr.mxu0 %v3454
        %3512 = vmatpush1.msra.mxu0 %v3453
        %3513 = vmatprep.subr.mxu0 %v3458
        %3514 = vmatpush1.msra.mxu0 %v3457
        %3515 = vmatprep.subr.mxu0 %v3462
        %3516 = vmatpush1.msra.mxu0 %v3461
        %3517 = vmatprep.subr.mxu0 %v3466
        %3518 = vmatpush1.msra.mxu0 %v3465
        %3519 = vmatprep.subr.mxu0 %v3470
        %3520 = vmatpush1.msra.mxu0 %v3469
        %3521 = vmatprep.subr.mxu0 %v3474
        %3522 = vmatpush1.msra.mxu0 %v3473
        %3523 = vmatprep.subr.mxu0 %v3478
        %3524 = vmatpush1.msra.mxu0 %v3477
        %3525 = vmatprep.subr.mxu0 %v3482
        %3526 = vmatpush1.msra.mxu0 %v3481
        %3527 = vmatprep.subr.mxu0 %v3486
        %3528 = vmatpush1.msra.mxu0 %v3485
        %3529 = vmatprep.subr.mxu0 %v3490
        %3530 = vmatpush1.msra.mxu0 %v3489
        %3531 = vmatprep.subr.mxu0 %v3494
        %3532 = vmatpush1.msra.mxu0 %v3493
        %3533 = vmatprep.subr.mxu0 %v3498
        %3534 = vmatpush1.msra.mxu0 %v3497
        %3535 = vmatprep.subr.mxu0 %v3502
        %3536 = vmatpush1.msra.mxu0 %v3501
        %3537 = vmatprep.subr.mxu0 0.0
        %3538 = vmatpush1.msra.mxu0 0.0
        %3539 = vmatprep.subr.mxu0 0.0
        %3540 = vmatpush1.msra.mxu0 0.0
        %3541 = vmatprep.subr.mxu0 0.0
        %3542 = vmatpush1.msra.mxu0 0.0
        %3543 = vmatprep.subr.mxu0 0.0
        %3544 = vmatpush1.msra.mxu0 0.0
        %3545 = vmatprep.subr.mxu0 0.0
        %3546 = vmatpush1.msra.mxu0 0.0
        %3547 = vmatprep.subr.mxu0 0.0
        %3548 = vmatpush1.msra.mxu0 0.0
        %3549 = vmatprep.subr.mxu0 0.0
        %3550 = vmatpush1.msra.mxu0 0.0
        %3551 = vmatprep.subr.mxu0 0.0
        %3552 = vmatpush1.msra.mxu0 0.0
        %3553 = vmatprep.subr.mxu0 0.0
        %3554 = vmatpush1.msra.mxu0 0.0
        %3555 = vmatprep.subr.mxu0 0.0
        %3556 = vmatpush1.msra.mxu0 0.0
        %3557 = vmatprep.subr.mxu0 0.0
        %3558 = vmatpush1.msra.mxu0 0.0
        %3559 = vmatprep.subr.mxu0 0.0
        %3560 = vmatpush1.msra.mxu0 0.0
        %3561 = vmatprep.subr.mxu0 0.0
        %3562 = vmatpush1.msra.mxu0 0.0
        %3563 = vmatprep.subr.mxu0 0.0
        %3564 = vmatpush1.msra.mxu0 0.0
        %3565 = vmatprep.subr.mxu0 0.0
        %3566 = vmatpush1.msra.mxu0 0.0
        %3567 = vmatprep.subr.mxu0 0.0
        %3568 = vmatpush1.msra.mxu0 0.0
        %3569 = vmatprep.mubr.f32.mxu0 0.0
        %3570 = vmatmul.mubr.f32.gmra.mrb[0].mxu0 %v2929
        %v3571 = vpop.f32.mrb[0].mxu0
        %v3572 = vadd.f32 0.0, %v3571
        %v3573 = vpop.f32.mrb[0].mxu0
        %v3574 = vadd.f32 0.0, %v3573
        %3575 = vmatprep.mubr.f32.mxu0 0.0
        %3576 = vmatmul.mubr.f32.gmra.mrb[0].mxu0 %v2930
        %v3577 = vpop.f32.mrb[0].mxu0
        %v3578 = vadd.f32 0.0, %v3577
        %v3579 = vpop.f32.mrb[0].mxu0
        %v3580 = vadd.f32 0.0, %v3579
        %3581 = vmatprep.mubr.f32.mxu0 0.0
        %3582 = vmatmul.mubr.f32.gmra.mrb[0].mxu0 %v2931
        %v3583 = vpop.f32.mrb[0].mxu0
        %v3584 = vadd.f32 0.0, %v3583
        %v3585 = vpop.f32.mrb[0].mxu0
        %v3586 = vadd.f32 0.0, %v3585
        %3587 = vdwg.mxu0
        %3588 = vmatprep.subr.mxu0 %v3444
        %3589 = vmatpush1.msra.mxu0 %v3443
        %3590 = vmatprep.subr.mxu0 %v3448
        %3591 = vmatpush1.msra.mxu0 %v3447
        %3592 = vmatprep.subr.mxu0 %v3452
        %3593 = vmatpush1.msra.mxu0 %v3451
        %3594 = vmatprep.subr.mxu0 %v3456
        %3595 = vmatpush1.msra.mxu0 %v3455
        %3596 = vmatprep.subr.mxu0 %v3460
        %3597 = vmatpush1.msra.mxu0 %v3459
        %3598 = vmatprep.subr.mxu0 %v3464
        %3599 = vmatpush1.msra.mxu0 %v3463
        %3600 = vmatprep.subr.mxu0 %v3468
        %3601 = vmatpush1.msra.mxu0 %v3467
        %3602 = vmatprep.subr.mxu0 %v3472
        %3603 = vmatpush1.msra.mxu0 %v3471
        %3604 = vmatprep.subr.mxu0 %v3476
        %3605 = vmatpush1.msra.mxu0 %v3475
        %3606 = vmatprep.subr.mxu0 %v3480
        %3607 = vmatpush1.msra.mxu0 %v3479
        %3608 = vmatprep.subr.mxu0 %v3484
        %3609 = vmatpush1.msra.mxu0 %v3483
        %3610 = vmatprep.subr.mxu0 %v3488
        %3611 = vmatpush1.msra.mxu0 %v3487
        %3612 = vmatprep.subr.mxu0 %v3492
        %3613 = vmatpush1.msra.mxu0 %v3491
        %3614 = vmatprep.subr.mxu0 %v3496
        %3615 = vmatpush1.msra.mxu0 %v3495
        %3616 = vmatprep.subr.mxu0 %v3500
        %3617 = vmatpush1.msra.mxu0 %v3499
        %3618 = vmatprep.subr.mxu0 %v3504
        %3619 = vmatpush1.msra.mxu0 %v3503
        %3620 = vmatprep.subr.mxu0 0.0
        %3621 = vmatpush1.msra.mxu0 0.0
        %3622 = vmatprep.subr.mxu0 0.0
        %3623 = vmatpush1.msra.mxu0 0.0
        %3624 = vmatprep.subr.mxu0 0.0
        %3625 = vmatpush1.msra.mxu0 0.0
        %3626 = vmatprep.subr.mxu0 0.0
        %3627 = vmatpush1.msra.mxu0 0.0
        %3628 = vmatprep.subr.mxu0 0.0
        %3629 = vmatpush1.msra.mxu0 0.0
        %3630 = vmatprep.subr.mxu0 0.0
        %3631 = vmatpush1.msra.mxu0 0.0
        %3632 = vmatprep.subr.mxu0 0.0
        %3633 = vmatpush1.msra.mxu0 0.0
        %3634 = vmatprep.subr.mxu0 0.0
        %3635 = vmatpush1.msra.mxu0 0.0
        %3636 = vmatprep.subr.mxu0 0.0
        %3637 = vmatpush1.msra.mxu0 0.0
        %3638 = vmatprep.subr.mxu0 0.0
        %3639 = vmatpush1.msra.mxu0 0.0
        %3640 = vmatprep.subr.mxu0 0.0
        %3641 = vmatpush1.msra.mxu0 0.0
        %3642 = vmatprep.subr.mxu0 0.0
        %3643 = vmatpush1.msra.mxu0 0.0
        %3644 = vmatprep.subr.mxu0 0.0
        %3645 = vmatpush1.msra.mxu0 0.0
        %3646 = vmatprep.subr.mxu0 0.0
        %3647 = vmatpush1.msra.mxu0 0.0
        %3648 = vmatprep.subr.mxu0 0.0
        %3649 = vmatpush1.msra.mxu0 0.0
        %3650 = vmatprep.subr.mxu0 0.0
        %3651 = vmatpush1.msra.mxu0 0.0
        %3652 = vmatprep.mubr.f32.mxu0 0.0
        %3653 = vmatmul.mubr.f32.gmra.mrb[0].mxu0 %v2929
        %v3654 = vpop.f32.mrb[0].mxu0
        %v3655 = vadd.f32 0.0, %v3654
        %v3656 = vpop.f32.mrb[0].mxu0
        %v3657 = vadd.f32 0.0, %v3656
        %3658 = vmatprep.mubr.f32.mxu0 0.0
        %3659 = vmatmul.mubr.f32.gmra.mrb[0].mxu0 %v2930
        %v3660 = vpop.f32.mrb[0].mxu0
        %v3661 = vadd.f32 0.0, %v3660
        %v3662 = vpop.f32.mrb[0].mxu0
        %v3663 = vadd.f32 0.0, %v3662
        %3664 = vmatprep.mubr.f32.mxu0 0.0
        %3665 = vmatmul.mubr.f32.gmra.mrb[0].mxu0 %v2931
        %v3666 = vpop.f32.mrb[0].mxu0
        %v3667 = vadd.f32 0.0, %v3666
        %v3668 = vpop.f32.mrb[0].mxu0
        %v3669 = vadd.f32 0.0, %v3668
        %3670 = vdwg.mxu0
        %3671 = vmatprep.subr.mxu0 0.0
        %3672 = vmatpush1.xpose.msra.mxu0 %v3341
        %3673 = vmatprep.subr.mxu0 0.0
        %3674 = vmatpush1.xpose.msra.mxu0 %v3347
        %3675 = vmatprep.subr.mxu0 0.0
        %3676 = vmatpush1.xpose.msra.mxu0 %v3353
        %3677 = vmatprep.subr.mxu0 0.0
        %3678 = vmatpush1.xpose.msra.mxu0 0.0
        %3679 = vmatprep.subr.mxu0 0.0
        %3680 = vmatpush1.xpose.msra.mxu0 0.0
        %3681 = vmatprep.subr.mxu0 0.0
        %3682 = vmatpush1.xpose.msra.mxu0 0.0
        %3683 = vmatprep.subr.mxu0 0.0
        %3684 = vmatpush1.xpose.msra.mxu0 0.0
        %3685 = vmatprep.subr.mxu0 0.0
        %3686 = vmatpush1.xpose.msra.mxu0 0.0
        %3687 = vmatprep.subr.mxu0 0.0
        %3688 = vmatpush1.xpose.msra.mxu0 0.0
        %3689 = vmatprep.subr.mxu0 0.0
        %3690 = vmatpush1.xpose.msra.mxu0 0.0
        %3691 = vmatprep.subr.mxu0 0.0
        %3692 = vmatpush1.xpose.msra.mxu0 0.0
        %3693 = vmatprep.subr.mxu0 0.0
        %3694 = vmatpush1.xpose.msra.mxu0 0.0
        %3695 = vmatprep.subr.mxu0 0.0
        %3696 = vmatpush1.xpose.msra.mxu0 0.0
        %3697 = vmatprep.subr.mxu0 0.0
        %3698 = vmatpush1.xpose.msra.mxu0 0.0
        %3699 = vmatprep.subr.mxu0 0.0
        %3700 = vmatpush1.xpose.msra.mxu0 0.0
        %3701 = vmatprep.subr.mxu0 0.0
        %3702 = vmatpush1.xpose.msra.mxu0 0.0
        %3703 = vmatprep.subr.mxu0 0.0
        %3704 = vmatpush1.xpose.msra.mxu0 0.0
        %3705 = vmatprep.subr.mxu0 0.0
        %3706 = vmatpush1.xpose.msra.mxu0 0.0
        %3707 = vmatprep.subr.mxu0 0.0
        %3708 = vmatpush1.xpose.msra.mxu0 0.0
        %3709 = vmatprep.subr.mxu0 0.0
        %3710 = vmatpush1.xpose.msra.mxu0 0.0
        %3711 = vmatprep.subr.mxu0 0.0
        %3712 = vmatpush1.xpose.msra.mxu0 0.0
        %3713 = vmatprep.subr.mxu0 0.0
        %3714 = vmatpush1.xpose.msra.mxu0 0.0
        %3715 = vmatprep.subr.mxu0 0.0
        %3716 = vmatpush1.xpose.msra.mxu0 0.0
        %3717 = vmatprep.subr.mxu0 0.0
        %3718 = vmatpush1.xpose.msra.mxu0 0.0
        %3719 = vmatprep.subr.mxu0 0.0
        %3720 = vmatpush1.xpose.msra.mxu0 0.0
        %3721 = vmatprep.subr.mxu0 0.0
        %3722 = vmatpush1.xpose.msra.mxu0 0.0
        %3723 = vmatprep.subr.mxu0 0.0
        %3724 = vmatpush1.xpose.msra.mxu0 0.0
        %3725 = vmatprep.subr.mxu0 0.0
        %3726 = vmatpush1.xpose.msra.mxu0 0.0
        %3727 = vmatprep.subr.mxu0 0.0
        %3728 = vmatpush1.xpose.msra.mxu0 0.0
        %3729 = vmatprep.subr.mxu0 0.0
        %3730 = vmatpush1.xpose.msra.mxu0 0.0
        %3731 = vmatprep.subr.mxu0 0.0
        %3732 = vmatpush1.xpose.msra.mxu0 0.0
        %3733 = vmatprep.subr.mxu0 0.0
        %3734 = vmatpush1.xpose.msra.mxu0 0.0
        %3735 = vmatprep.mubr.f32.mxu0 0.0
        %3736 = vmatmul.mubr.f32.gmra.mrb[0].mxu0 %v3087
        %v3737 = vpop.f32.mrb[0].mxu0
        %v3738 = vadd.f32 0.0, %v3737
        %v3739 = vpop.f32.mrb[0].mxu0
        %3740 = vmatprep.mubr.f32.mxu0 0.0
        %3741 = vmatmul.mubr.f32.gmra.mrb[0].mxu0 %v3093
        %v3742 = vpop.f32.mrb[0].mxu0
        %v3743 = vadd.f32 0.0, %v3742
        %v3744 = vpop.f32.mrb[0].mxu0
        %3745 = vmatprep.mubr.f32.mxu0 0.0
        %3746 = vmatmul.mubr.f32.gmra.mrb[0].mxu0 %v3099
        %v3747 = vpop.f32.mrb[0].mxu0
        %v3748 = vadd.f32 0.0, %v3747
        %v3749 = vpop.f32.mrb[0].mxu0
        %3750 = vdwg.mxu0
        %v3751 = vsel %vm1741, %v3738, -inf
        %3752 = vmax.xlane.f32.xlu0 %v3751
        %v3753 = vpop.xlane.xlu0 %3752
        %v3754 = vsel %vm1741, %v3743, -inf
        %3755 = vmax.xlane.f32.xlu0 %v3754
        %v3756 = vpop.xlane.xlu0 %3755
        %v3757 = vsel %vm1748, %v3748, -inf
        %3758 = vmax.xlane.f32.xlu0 %v3757
        %v3759 = vpop.xlane.xlu0 %3758
        %v3760 = vsub.f32 %v3738, %v3753
        %v3761 = vsub.f32 %v3743, %v3756
        %v3762 = vsub.f32 %v3748, %v3759
        %v3763 = vmul.f32 %v3760, 1.442695
        %v3764 = vpow.pop %v3763
        %v3765 = vmul.f32 %v3761, 1.442695
        %v3766 = vpow.pop %v3765
        %v3767 = vmul.f32 %v3762, 1.442695
        %v3768 = vpow.pop %v3767
        %v3769 = vsel %vm1741, %v3764, 0.0
        %3770 = vadd.xlane.f32.xlu0 %v3769
        %v3771 = vpop.xlane.xlu0 %3770
        %v3772 = vsel %vm1741, %v3766, 0.0
        %3773 = vadd.xlane.f32.xlu0 %v3772
        %v3774 = vpop.xlane.xlu0 %3773
        %v3775 = vsel %vm1748, %v3768, 0.0
        %3776 = vadd.xlane.f32.xlu0 %v3775
        %v3777 = vpop.xlane.xlu0 %3776
        %v3778 = vrcp.pop %v3771
        %v3779 = vrcp.pop %v3774
        %v3780 = vrcp.pop %v3777
        %v3781 = vmul.f32 %v3764, %v3778
        %v3782 = vmul.f32 %v3766, %v3779
        %v3783 = vmul.f32 %v3768, %v3780
        %3784 = vmatprep.subr.mxu0 0.0
        %3785 = vmatpush1.xpose.msra.mxu0 %v3343
        %3786 = vmatprep.subr.mxu0 0.0
        %3787 = vmatpush1.xpose.msra.mxu0 %v3349
        %3788 = vmatprep.subr.mxu0 0.0
        %3789 = vmatpush1.xpose.msra.mxu0 %v3355
        %3790 = vmatprep.subr.mxu0 0.0
        %3791 = vmatpush1.xpose.msra.mxu0 0.0
        %3792 = vmatprep.subr.mxu0 0.0
        %3793 = vmatpush1.xpose.msra.mxu0 0.0
        %3794 = vmatprep.subr.mxu0 0.0
        %3795 = vmatpush1.xpose.msra.mxu0 0.0
        %3796 = vmatprep.subr.mxu0 0.0
        %3797 = vmatpush1.xpose.msra.mxu0 0.0
        %3798 = vmatprep.subr.mxu0 0.0
        %3799 = vmatpush1.xpose.msra.mxu0 0.0
        %3800 = vmatprep.subr.mxu0 0.0
        %3801 = vmatpush1.xpose.msra.mxu0 0.0
        %3802 = vmatprep.subr.mxu0 0.0
        %3803 = vmatpush1.xpose.msra.mxu0 0.0
        %3804 = vmatprep.subr.mxu0 0.0
        %3805 = vmatpush1.xpose.msra.mxu0 0.0
        %3806 = vmatprep.subr.mxu0 0.0
        %3807 = vmatpush1.xpose.msra.mxu0 0.0
        %3808 = vmatprep.subr.mxu0 0.0
        %3809 = vmatpush1.xpose.msra.mxu0 0.0
        %3810 = vmatprep.subr.mxu0 0.0
        %3811 = vmatpush1.xpose.msra.mxu0 0.0
        %3812 = vmatprep.subr.mxu0 0.0
        %3813 = vmatpush1.xpose.msra.mxu0 0.0
        %3814 = vmatprep.subr.mxu0 0.0
        %3815 = vmatpush1.xpose.msra.mxu0 0.0
        %3816 = vmatprep.subr.mxu0 0.0
        %3817 = vmatpush1.xpose.msra.mxu0 0.0
        %3818 = vmatprep.subr.mxu0 0.0
        %3819 = vmatpush1.xpose.msra.mxu0 0.0
        %3820 = vmatprep.subr.mxu0 0.0
        %3821 = vmatpush1.xpose.msra.mxu0 0.0
        %3822 = vmatprep.subr.mxu0 0.0
        %3823 = vmatpush1.xpose.msra.mxu0 0.0
        %3824 = vmatprep.subr.mxu0 0.0
        %3825 = vmatpush1.xpose.msra.mxu0 0.0
        %3826 = vmatprep.subr.mxu0 0.0
        %3827 = vmatpush1.xpose.msra.mxu0 0.0
        %3828 = vmatprep.subr.mxu0 0.0
        %3829 = vmatpush1.xpose.msra.mxu0 0.0
        %3830 = vmatprep.subr.mxu0 0.0
        %3831 = vmatpush1.xpose.msra.mxu0 0.0
        %3832 = vmatprep.subr.mxu0 0.0
        %3833 = vmatpush1.xpose.msra.mxu0 0.0
        %3834 = vmatprep.subr.mxu0 0.0
        %3835 = vmatpush1.xpose.msra.mxu0 0.0
        %3836 = vmatprep.subr.mxu0 0.0
        %3837 = vmatpush1.xpose.msra.mxu0 0.0
        %3838 = vmatprep.subr.mxu0 0.0
        %3839 = vmatpush1.xpose.msra.mxu0 0.0
        %3840 = vmatprep.subr.mxu0 0.0
        %3841 = vmatpush1.xpose.msra.mxu0 0.0
        %3842 = vmatprep.subr.mxu0 0.0
        %3843 = vmatpush1.xpose.msra.mxu0 0.0
        %3844 = vmatprep.subr.mxu0 0.0
        %3845 = vmatpush1.xpose.msra.mxu0 0.0
        %3846 = vmatprep.subr.mxu0 0.0
        %3847 = vmatpush1.xpose.msra.mxu0 0.0
        %3848 = vmatprep.mubr.f32.mxu0 0.0
        %3849 = vmatmul.mubr.f32.gmra.mrb[0].mxu0 %v3089
        %v3850 = vpop.f32.mrb[0].mxu0
        %v3851 = vadd.f32 0.0, %v3850
        %v3852 = vpop.f32.mrb[0].mxu0
        %3853 = vmatprep.mubr.f32.mxu0 0.0
        %3854 = vmatmul.mubr.f32.gmra.mrb[0].mxu0 %v3095
        %v3855 = vpop.f32.mrb[0].mxu0
        %v3856 = vadd.f32 0.0, %v3855
        %v3857 = vpop.f32.mrb[0].mxu0
        %3858 = vmatprep.mubr.f32.mxu0 0.0
        %3859 = vmatmul.mubr.f32.gmra.mrb[0].mxu0 %v3101
        %v3860 = vpop.f32.mrb[0].mxu0
        %v3861 = vadd.f32 0.0, %v3860
        %v3862 = vpop.f32.mrb[0].mxu0
        %3863 = vdwg.mxu0
        %v3864 = vsel %vm1741, %v3851, -inf
        %3865 = vmax.xlane.f32.xlu0 %v3864
        %v3866 = vpop.xlane.xlu0 %3865
        %v3867 = vsel %vm1741, %v3856, -inf
        %3868 = vmax.xlane.f32.xlu0 %v3867
        %v3869 = vpop.xlane.xlu0 %3868
        %v3870 = vsel %vm1748, %v3861, -inf
        %3871 = vmax.xlane.f32.xlu0 %v3870
        %v3872 = vpop.xlane.xlu0 %3871
        %v3873 = vsub.f32 %v3851, %v3866
        %v3874 = vsub.f32 %v3856, %v3869
        %v3875 = vsub.f32 %v3861, %v3872
        %v3876 = vmul.f32 %v3873, 1.442695
        %v3877 = vpow.pop %v3876
        %v3878 = vmul.f32 %v3874, 1.442695
        %v3879 = vpow.pop %v3878
        %v3880 = vmul.f32 %v3875, 1.442695
        %v3881 = vpow.pop %v3880
        %v3882 = vsel %vm1741, %v3877, 0.0
        %3883 = vadd.xlane.f32.xlu0 %v3882
        %v3884 = vpop.xlane.xlu0 %3883
        %v3885 = vsel %vm1741, %v3879, 0.0
        %3886 = vadd.xlane.f32.xlu0 %v3885
        %v3887 = vpop.xlane.xlu0 %3886
        %v3888 = vsel %vm1748, %v3881, 0.0
        %3889 = vadd.xlane.f32.xlu0 %v3888
        %v3890 = vpop.xlane.xlu0 %3889
        %v3891 = vrcp.pop %v3884
        %v3892 = vrcp.pop %v3887
        %v3893 = vrcp.pop %v3890
        %v3894 = vmul.f32 %v3877, %v3891
        %v3895 = vmul.f32 %v3879, %v3892
        %v3896 = vmul.f32 %v3881, %v3893
        %v3898 = vsel %vm1741, %v3894, 0
        %v3901 = vsel %vm1741, %v3895, 0
        %v3904 = vsel %vm1741, %v3896, 0
        %v3907 = vsel %vm871, %v3586, 0
        %3909 = vmatprep.subr.mxu0 0.0
        %3910 = vmatpush1.msra.mxu0 %v3574
        %3911 = vmatprep.subr.mxu0 0.0
        %3912 = vmatpush1.msra.mxu0 %v3580
        %3913 = vmatprep.subr.mxu0 0.0
        %3914 = vmatpush1.msra.mxu0 %v3907
        %3915 = vmatprep.subr.mxu0 0.0
        %3916 = vmatpush1.msra.mxu0 0.0
        %3917 = vmatprep.subr.mxu0 0.0
        %3918 = vmatpush1.msra.mxu0 0.0
        %3919 = vmatprep.subr.mxu0 0.0
        %3920 = vmatpush1.msra.mxu0 0.0
        %3921 = vmatprep.subr.mxu0 0.0
        %3922 = vmatpush1.msra.mxu0 0.0
        %3923 = vmatprep.subr.mxu0 0.0
        %3924 = vmatpush1.msra.mxu0 0.0
        %3925 = vmatprep.subr.mxu0 0.0
        %3926 = vmatpush1.msra.mxu0 0.0
        %3927 = vmatprep.subr.mxu0 0.0
        %3928 = vmatpush1.msra.mxu0 0.0
        %3929 = vmatprep.subr.mxu0 0.0
        %3930 = vmatpush1.msra.mxu0 0.0
        %3931 = vmatprep.subr.mxu0 0.0
        %3932 = vmatpush1.msra.mxu0 0.0
        %3933 = vmatprep.subr.mxu0 0.0
        %3934 = vmatpush1.msra.mxu0 0.0
        %3935 = vmatprep.subr.mxu0 0.0
        %3936 = vmatpush1.msra.mxu0 0.0
        %3937 = vmatprep.subr.mxu0 0.0
        %3938 = vmatpush1.msra.mxu0 0.0
        %3939 = vmatprep.subr.mxu0 0.0
        %3940 = vmatpush1.msra.mxu0 0.0
        %3941 = vmatprep.subr.mxu0 0.0
        %3942 = vmatpush1.msra.mxu0 0.0
        %3943 = vmatprep.subr.mxu0 0.0
        %3944 = vmatpush1.msra.mxu0 0.0
        %3945 = vmatprep.subr.mxu0 0.0
        %3946 = vmatpush1.msra.mxu0 0.0
        %3947 = vmatprep.subr.mxu0 0.0
        %3948 = vmatpush1.msra.mxu0 0.0
        %3949 = vmatprep.subr.mxu0 0.0
        %3950 = vmatpush1.msra.mxu0 0.0
        %3951 = vmatprep.subr.mxu0 0.0
        %3952 = vmatpush1.msra.mxu0 0.0
        %3953 = vmatprep.subr.mxu0 0.0
        %3954 = vmatpush1.msra.mxu0 0.0
        %3955 = vmatprep.subr.mxu0 0.0
        %3956 = vmatpush1.msra.mxu0 0.0
        %3957 = vmatprep.subr.mxu0 0.0
        %3958 = vmatpush1.msra.mxu0 0.0
        %3959 = vmatprep.subr.mxu0 0.0
        %3960 = vmatpush1.msra.mxu0 0.0
        %3961 = vmatprep.subr.mxu0 0.0
        %3962 = vmatpush1.msra.mxu0 0.0
        %3963 = vmatprep.subr.mxu0 0.0
        %3964 = vmatpush1.msra.mxu0 0.0
        %3965 = vmatprep.subr.mxu0 0.0
        %3966 = vmatpush1.msra.mxu0 0.0
        %3967 = vmatprep.subr.mxu0 0.0
        %3968 = vmatpush1.msra.mxu0 0.0
        %3969 = vmatprep.subr.mxu0 0.0
        %3970 = vmatpush1.msra.mxu0 0.0
        %3971 = vmatprep.subr.mxu0 0.0
        %3972 = vmatpush1.msra.mxu0 0.0
        %3973 = vmatprep.mubr.f32.mxu0 0.0
        %3974 = vmatmul.mubr.f32.gmra.mrb[0].mxu0 %v3898
        %v3975 = vpop.f32.mrb[0].mxu0
        %v3976 = vadd.f32 0.0, %v3975
        %v3977 = vpop.f32.mrb[0].mxu0
        %3978 = vmatprep.mubr.f32.mxu0 0.0
        %3979 = vmatmul.mubr.f32.gmra.mrb[0].mxu0 %v3901
        %v3980 = vpop.f32.mrb[0].mxu0
        %v3981 = vadd.f32 0.0, %v3980
        %v3982 = vpop.f32.mrb[0].mxu0
        %3983 = vmatprep.mubr.f32.mxu0 0.0
        %3984 = vmatmul.mubr.f32.gmra.mrb[0].mxu0 %v3904
        %v3985 = vpop.f32.mrb[0].mxu0
        %v3986 = vadd.f32 0.0, %v3985
        %v3987 = vpop.f32.mrb[0].mxu0
        %3988 = vdwg.mxu0
        %v3990 = vsel %vm1741, %v3781, 0
        %v3993 = vsel %vm1741, %v3782, 0
        %v3996 = vsel %vm1741, %v3783, 0
        %v3999 = vsel %vm871, %v3584, 0
        %4001 = vmatprep.subr.mxu0 0.0
        %4002 = vmatpush1.msra.mxu0 %v3572
        %4003 = vmatprep.subr.mxu0 0.0
        %4004 = vmatpush1.msra.mxu0 %v3578
        %4005 = vmatprep.subr.mxu0 0.0
        %4006 = vmatpush1.msra.mxu0 %v3999
        %4007 = vmatprep.subr.mxu0 0.0
        %4008 = vmatpush1.msra.mxu0 0.0
        %4009 = vmatprep.subr.mxu0 0.0
        %4010 = vmatpush1.msra.mxu0 0.0
        %4011 = vmatprep.subr.mxu0 0.0
        %4012 = vmatpush1.msra.mxu0 0.0
        %4013 = vmatprep.subr.mxu0 0.0
        %4014 = vmatpush1.msra.mxu0 0.0
        %4015 = vmatprep.subr.mxu0 0.0
        %4016 = vmatpush1.msra.mxu0 0.0
        %4017 = vmatprep.subr.mxu0 0.0
        %4018 = vmatpush1.msra.mxu0 0.0
        %4019 = vmatprep.subr.mxu0 0.0
        %4020 = vmatpush1.msra.mxu0 0.0
        %4021 = vmatprep.subr.mxu0 0.0
        %4022 = vmatpush1.msra.mxu0 0.0
        %4023 = vmatprep.subr.mxu0 0.0
        %4024 = vmatpush1.msra.mxu0 0.0
        %4025 = vmatprep.subr.mxu0 0.0
        %4026 = vmatpush1.msra.mxu0 0.0
        %4027 = vmatprep.subr.mxu0 0.0
        %4028 = vmatpush1.msra.mxu0 0.0
        %4029 = vmatprep.subr.mxu0 0.0
        %4030 = vmatpush1.msra.mxu0 0.0
        %4031 = vmatprep.subr.mxu0 0.0
        %4032 = vmatpush1.msra.mxu0 0.0
        %4033 = vmatprep.subr.mxu0 0.0
        %4034 = vmatpush1.msra.mxu0 0.0
        %4035 = vmatprep.subr.mxu0 0.0
        %4036 = vmatpush1.msra.mxu0 0.0
        %4037 = vmatprep.subr.mxu0 0.0
        %4038 = vmatpush1.msra.mxu0 0.0
        %4039 = vmatprep.subr.mxu0 0.0
        %4040 = vmatpush1.msra.mxu0 0.0
        %4041 = vmatprep.subr.mxu0 0.0
        %4042 = vmatpush1.msra.mxu0 0.0
        %4043 = vmatprep.subr.mxu0 0.0
        %4044 = vmatpush1.msra.mxu0 0.0
        %4045 = vmatprep.subr.mxu0 0.0
        %4046 = vmatpush1.msra.mxu0 0.0
        %4047 = vmatprep.subr.mxu0 0.0
        %4048 = vmatpush1.msra.mxu0 0.0
        %4049 = vmatprep.subr.mxu0 0.0
        %4050 = vmatpush1.msra.mxu0 0.0
        %4051 = vmatprep.subr.mxu0 0.0
        %4052 = vmatpush1.msra.mxu0 0.0
        %4053 = vmatprep.subr.mxu0 0.0
        %4054 = vmatpush1.msra.mxu0 0.0
        %4055 = vmatprep.subr.mxu0 0.0
        %4056 = vmatpush1.msra.mxu0 0.0
        %4057 = vmatprep.subr.mxu0 0.0
        %4058 = vmatpush1.msra.mxu0 0.0
        %4059 = vmatprep.subr.mxu0 0.0
        %4060 = vmatpush1.msra.mxu0 0.0
        %4061 = vmatprep.subr.mxu0 0.0
        %4062 = vmatpush1.msra.mxu0 0.0
        %4063 = vmatprep.subr.mxu0 0.0
        %4064 = vmatpush1.msra.mxu0 0.0
        %4065 = vmatprep.mubr.f32.mxu0 0.0
        %4066 = vmatmul.mubr.f32.gmra.mrb[0].mxu0 %v3990
        %v4067 = vpop.f32.mrb[0].mxu0
        %v4068 = vadd.f32 %v3976, %v4067
        %v4069 = vpop.f32.mrb[0].mxu0
        %4070 = vmatprep.mubr.f32.mxu0 0.0
        %4071 = vmatmul.mubr.f32.gmra.mrb[0].mxu0 %v3993
        %v4072 = vpop.f32.mrb[0].mxu0
        %v4073 = vadd.f32 %v3981, %v4072
        %v4074 = vpop.f32.mrb[0].mxu0
        %4075 = vmatprep.mubr.f32.mxu0 0.0
        %4076 = vmatmul.mubr.f32.gmra.mrb[0].mxu0 %v3996
        %v4077 = vpop.f32.mrb[0].mxu0
        %v4078 = vadd.f32 %v3986, %v4077
        %v4079 = vpop.f32.mrb[0].mxu0
        %4080 = vdwg.mxu0
        %4081 = vmatprep.subr.mxu0 0.0
        %4082 = vmatpush1.xpose.msra.mxu0 %v3424
        %4083 = vmatprep.subr.mxu0 0.0
        %4084 = vmatpush1.xpose.msra.mxu0 %v3430
        %4085 = vmatprep.subr.mxu0 0.0
        %4086 = vmatpush1.xpose.msra.mxu0 %v3436
        %4087 = vmatprep.subr.mxu0 0.0
        %4088 = vmatpush1.xpose.msra.mxu0 0.0
        %4089 = vmatprep.subr.mxu0 0.0
        %4090 = vmatpush1.xpose.msra.mxu0 0.0
        %4091 = vmatprep.subr.mxu0 0.0
        %4092 = vmatpush1.xpose.msra.mxu0 0.0
        %4093 = vmatprep.subr.mxu0 0.0
        %4094 = vmatpush1.xpose.msra.mxu0 0.0
        %4095 = vmatprep.subr.mxu0 0.0
        %4096 = vmatpush1.xpose.msra.mxu0 0.0
        %4097 = vmatprep.subr.mxu0 0.0
        %4098 = vmatpush1.xpose.msra.mxu0 0.0
        %4099 = vmatprep.subr.mxu0 0.0
        %4100 = vmatpush1.xpose.msra.mxu0 0.0
        %4101 = vmatprep.subr.mxu0 0.0
        %4102 = vmatpush1.xpose.msra.mxu0 0.0
        %4103 = vmatprep.subr.mxu0 0.0
        %4104 = vmatpush1.xpose.msra.mxu0 0.0
        %4105 = vmatprep.subr.mxu0 0.0
        %4106 = vmatpush1.xpose.msra.mxu0 0.0
        %4107 = vmatprep.subr.mxu0 0.0
        %4108 = vmatpush1.xpose.msra.mxu0 0.0
        %4109 = vmatprep.subr.mxu0 0.0
        %4110 = vmatpush1.xpose.msra.mxu0 0.0
        %4111 = vmatprep.subr.mxu0 0.0
        %4112 = vmatpush1.xpose.msra.mxu0 0.0
        %4113 = vmatprep.subr.mxu0 0.0
        %4114 = vmatpush1.xpose.msra.mxu0 0.0
        %4115 = vmatprep.subr.mxu0 0.0
        %4116 = vmatpush1.xpose.msra.mxu0 0.0
        %4117 = vmatprep.subr.mxu0 0.0
        %4118 = vmatpush1.xpose.msra.mxu0 0.0
        %4119 = vmatprep.subr.mxu0 0.0
        %4120 = vmatpush1.xpose.msra.mxu0 0.0
        %4121 = vmatprep.subr.mxu0 0.0
        %4122 = vmatpush1.xpose.msra.mxu0 0.0
        %4123 = vmatprep.subr.mxu0 0.0
        %4124 = vmatpush1.xpose.msra.mxu0 0.0
        %4125 = vmatprep.subr.mxu0 0.0
        %4126 = vmatpush1.xpose.msra.mxu0 0.0
        %4127 = vmatprep.subr.mxu0 0.0
        %4128 = vmatpush1.xpose.msra.mxu0 0.0
        %4129 = vmatprep.subr.mxu0 0.0
        %4130 = vmatpush1.xpose.msra.mxu0 0.0
        %4131 = vmatprep.subr.mxu0 0.0
        %4132 = vmatpush1.xpose.msra.mxu0 0.0
        %4133 = vmatprep.subr.mxu0 0.0
        %4134 = vmatpush1.xpose.msra.mxu0 0.0
        %4135 = vmatprep.subr.mxu0 0.0
        %4136 = vmatpush1.xpose.msra.mxu0 0.0
        %4137 = vmatprep.subr.mxu0 0.0
        %4138 = vmatpush1.xpose.msra.mxu0 0.0
        %4139 = vmatprep.subr.mxu0 0.0
        %4140 = vmatpush1.xpose.msra.mxu0 0.0
        %4141 = vmatprep.subr.mxu0 0.0
        %4142 = vmatpush1.xpose.msra.mxu0 0.0
        %4143 = vmatprep.subr.mxu0 0.0
        %4144 = vmatpush1.xpose.msra.mxu0 0.0
        %4145 = vmatprep.mubr.f32.mxu0 0.0
        %4146 = vmatmul.mubr.f32.gmra.mrb[0].mxu0 %v3170
        %v4147 = vpop.f32.mrb[0].mxu0
        %v4148 = vadd.f32 0.0, %v4147
        %v4149 = vpop.f32.mrb[0].mxu0
        %4150 = vmatprep.mubr.f32.mxu0 0.0
        %4151 = vmatmul.mubr.f32.gmra.mrb[0].mxu0 %v3176
        %v4152 = vpop.f32.mrb[0].mxu0
        %v4153 = vadd.f32 0.0, %v4152
        %v4154 = vpop.f32.mrb[0].mxu0
        %4155 = vmatprep.mubr.f32.mxu0 0.0
        %4156 = vmatmul.mubr.f32.gmra.mrb[0].mxu0 %v3182
        %v4157 = vpop.f32.mrb[0].mxu0
        %v4158 = vadd.f32 0.0, %v4157
        %v4159 = vpop.f32.mrb[0].mxu0
        %4160 = vdwg.mxu0
        %v4161 = vsel %vm1741, %v4148, -inf
        %4162 = vmax.xlane.f32.xlu0 %v4161
        %v4163 = vpop.xlane.xlu0 %4162
        %v4164 = vsel %vm1741, %v4153, -inf
        %4165 = vmax.xlane.f32.xlu0 %v4164
        %v4166 = vpop.xlane.xlu0 %4165
        %v4167 = vsel %vm1748, %v4158, -inf
        %4168 = vmax.xlane.f32.xlu0 %v4167
        %v4169 = vpop.xlane.xlu0 %4168
        %v4170 = vsub.f32 %v4148, %v4163
        %v4171 = vsub.f32 %v4153, %v4166
        %v4172 = vsub.f32 %v4158, %v4169
        %v4173 = vmul.f32 %v4170, 1.442695
        %v4174 = vpow.pop %v4173
        %v4175 = vmul.f32 %v4171, 1.442695
        %v4176 = vpow.pop %v4175
        %v4177 = vmul.f32 %v4172, 1.442695
        %v4178 = vpow.pop %v4177
        %v4179 = vsel %vm1741, %v4174, 0.0
        %4180 = vadd.xlane.f32.xlu0 %v4179
        %v4181 = vpop.xlane.xlu0 %4180
        %v4182 = vsel %vm1741, %v4176, 0.0
        %4183 = vadd.xlane.f32.xlu0 %v4182
        %v4184 = vpop.xlane.xlu0 %4183
        %v4185 = vsel %vm1748, %v4178, 0.0
        %4186 = vadd.xlane.f32.xlu0 %v4185
        %v4187 = vpop.xlane.xlu0 %4186
        %v4188 = vrcp.pop %v4181
        %v4189 = vrcp.pop %v4184
        %v4190 = vrcp.pop %v4187
        %v4191 = vmul.f32 %v4174, %v4188
        %v4192 = vmul.f32 %v4176, %v4189
        %v4193 = vmul.f32 %v4178, %v4190
        %v4195 = vsel %vm1741, %v4191, 0
        %v4198 = vsel %vm1741, %v4192, 0
        %v4201 = vsel %vm1741, %v4193, 0
        %v4204 = vsel %vm871, %v3667, 0
        %4206 = vmatprep.subr.mxu0 0.0
        %4207 = vmatpush1.msra.mxu0 %v3655
        %4208 = vmatprep.subr.mxu0 0.0
        %4209 = vmatpush1.msra.mxu0 %v3661
        %4210 = vmatprep.subr.mxu0 0.0
        %4211 = vmatpush1.msra.mxu0 %v4204
        %4212 = vmatprep.subr.mxu0 0.0
        %4213 = vmatpush1.msra.mxu0 0.0
        %4214 = vmatprep.subr.mxu0 0.0
        %4215 = vmatpush1.msra.mxu0 0.0
        %4216 = vmatprep.subr.mxu0 0.0
        %4217 = vmatpush1.msra.mxu0 0.0
        %4218 = vmatprep.subr.mxu0 0.0
        %4219 = vmatpush1.msra.mxu0 0.0
        %4220 = vmatprep.subr.mxu0 0.0
        %4221 = vmatpush1.msra.mxu0 0.0
        %4222 = vmatprep.subr.mxu0 0.0
        %4223 = vmatpush1.msra.mxu0 0.0
        %4224 = vmatprep.subr.mxu0 0.0
        %4225 = vmatpush1.msra.mxu0 0.0
        %4226 = vmatprep.subr.mxu0 0.0
        %4227 = vmatpush1.msra.mxu0 0.0
        %4228 = vmatprep.subr.mxu0 0.0
        %4229 = vmatpush1.msra.mxu0 0.0
        %4230 = vmatprep.subr.mxu0 0.0
        %4231 = vmatpush1.msra.mxu0 0.0
        %4232 = vmatprep.subr.mxu0 0.0
        %4233 = vmatpush1.msra.mxu0 0.0
        %4234 = vmatprep.subr.mxu0 0.0
        %4235 = vmatpush1.msra.mxu0 0.0
        %4236 = vmatprep.subr.mxu0 0.0
        %4237 = vmatpush1.msra.mxu0 0.0
        %4238 = vmatprep.subr.mxu0 0.0
        %4239 = vmatpush1.msra.mxu0 0.0
        %4240 = vmatprep.subr.mxu0 0.0
        %4241 = vmatpush1.msra.mxu0 0.0
        %4242 = vmatprep.subr.mxu0 0.0
        %4243 = vmatpush1.msra.mxu0 0.0
        %4244 = vmatprep.subr.mxu0 0.0
        %4245 = vmatpush1.msra.mxu0 0.0
        %4246 = vmatprep.subr.mxu0 0.0
        %4247 = vmatpush1.msra.mxu0 0.0
        %4248 = vmatprep.subr.mxu0 0.0
        %4249 = vmatpush1.msra.mxu0 0.0
        %4250 = vmatprep.subr.mxu0 0.0
        %4251 = vmatpush1.msra.mxu0 0.0
        %4252 = vmatprep.subr.mxu0 0.0
        %4253 = vmatpush1.msra.mxu0 0.0
        %4254 = vmatprep.subr.mxu0 0.0
        %4255 = vmatpush1.msra.mxu0 0.0
        %4256 = vmatprep.subr.mxu0 0.0
        %4257 = vmatpush1.msra.mxu0 0.0
        %4258 = vmatprep.subr.mxu0 0.0
        %4259 = vmatpush1.msra.mxu0 0.0
        %4260 = vmatprep.subr.mxu0 0.0
        %4261 = vmatpush1.msra.mxu0 0.0
        %4262 = vmatprep.subr.mxu0 0.0
        %4263 = vmatpush1.msra.mxu0 0.0
        %4264 = vmatprep.subr.mxu0 0.0
        %4265 = vmatpush1.msra.mxu0 0.0
        %4266 = vmatprep.subr.mxu0 0.0
        %4267 = vmatpush1.msra.mxu0 0.0
        %4268 = vmatprep.subr.mxu0 0.0
        %4269 = vmatpush1.msra.mxu0 0.0
        %4270 = vmatprep.mubr.f32.mxu0 0.0
        %4271 = vmatmul.mubr.f32.gmra.mrb[0].mxu0 %v4195
        %v4272 = vpop.f32.mrb[0].mxu0
        %v4273 = vadd.f32 0.0, %v4272
        %v4274 = vpop.f32.mrb[0].mxu0
        %4275 = vmatprep.mubr.f32.mxu0 0.0
        %4276 = vmatmul.mubr.f32.gmra.mrb[0].mxu0 %v4198
        %v4277 = vpop.f32.mrb[0].mxu0
        %v4278 = vadd.f32 0.0, %v4277
        %v4279 = vpop.f32.mrb[0].mxu0
        %4280 = vmatprep.mubr.f32.mxu0 0.0
        %4281 = vmatmul.mubr.f32.gmra.mrb[0].mxu0 %v4201
        %v4282 = vpop.f32.mrb[0].mxu0
        %v4283 = vadd.f32 0.0, %v4282
        %v4284 = vpop.f32.mrb[0].mxu0
        %4285 = vdwg.mxu0
        %v4286 = vadd.f32 %v4068, %v4273
        %v4287 = vadd.f32 %v4073, %v4278
        %v4288 = vadd.f32 %v4078, %v4283
        %4289 = vmatprep.subr.mxu0 0.0
        %4290 = vmatpush1.xpose.msra.mxu0 %v3426
        %4291 = vmatprep.subr.mxu0 0.0
        %4292 = vmatpush1.xpose.msra.mxu0 %v3432
        %4293 = vmatprep.subr.mxu0 0.0
        %4294 = vmatpush1.xpose.msra.mxu0 %v3438
        %4295 = vmatprep.subr.mxu0 0.0
        %4296 = vmatpush1.xpose.msra.mxu0 0.0
        %4297 = vmatprep.subr.mxu0 0.0
        %4298 = vmatpush1.xpose.msra.mxu0 0.0
        %4299 = vmatprep.subr.mxu0 0.0
        %4300 = vmatpush1.xpose.msra.mxu0 0.0
        %4301 = vmatprep.subr.mxu0 0.0
        %4302 = vmatpush1.xpose.msra.mxu0 0.0
        %4303 = vmatprep.subr.mxu0 0.0
        %4304 = vmatpush1.xpose.msra.mxu0 0.0
        %4305 = vmatprep.subr.mxu0 0.0
        %4306 = vmatpush1.xpose.msra.mxu0 0.0
        %4307 = vmatprep.subr.mxu0 0.0
        %4308 = vmatpush1.xpose.msra.mxu0 0.0
        %4309 = vmatprep.subr.mxu0 0.0
        %4310 = vmatpush1.xpose.msra.mxu0 0.0
        %4311 = vmatprep.subr.mxu0 0.0
        %4312 = vmatpush1.xpose.msra.mxu0 0.0
        %4313 = vmatprep.subr.mxu0 0.0
        %4314 = vmatpush1.xpose.msra.mxu0 0.0
        %4315 = vmatprep.subr.mxu0 0.0
        %4316 = vmatpush1.xpose.msra.mxu0 0.0
        %4317 = vmatprep.subr.mxu0 0.0
        %4318 = vmatpush1.xpose.msra.mxu0 0.0
        %4319 = vmatprep.subr.mxu0 0.0
        %4320 = vmatpush1.xpose.msra.mxu0 0.0
        %4321 = vmatprep.subr.mxu0 0.0
        %4322 = vmatpush1.xpose.msra.mxu0 0.0
        %4323 = vmatprep.subr.mxu0 0.0
        %4324 = vmatpush1.xpose.msra.mxu0 0.0
        %4325 = vmatprep.subr.mxu0 0.0
        %4326 = vmatpush1.xpose.msra.mxu0 0.0
        %4327 = vmatprep.subr.mxu0 0.0
        %4328 = vmatpush1.xpose.msra.mxu0 0.0
        %4329 = vmatprep.subr.mxu0 0.0
        %4330 = vmatpush1.xpose.msra.mxu0 0.0
        %4331 = vmatprep.subr.mxu0 0.0
        %4332 = vmatpush1.xpose.msra.mxu0 0.0
        %4333 = vmatprep.subr.mxu0 0.0
        %4334 = vmatpush1.xpose.msra.mxu0 0.0
        %4335 = vmatprep.subr.mxu0 0.0
        %4336 = vmatpush1.xpose.msra.mxu0 0.0
        %4337 = vmatprep.subr.mxu0 0.0
        %4338 = vmatpush1.xpose.msra.mxu0 0.0
        %4339 = vmatprep.subr.mxu0 0.0
        %4340 = vmatpush1.xpose.msra.mxu0 0.0
        %4341 = vmatprep.subr.mxu0 0.0
        %4342 = vmatpush1.xpose.msra.mxu0 0.0
        %4343 = vmatprep.subr.mxu0 0.0
        %4344 = vmatpush1.xpose.msra.mxu0 0.0
        %4345 = vmatprep.subr.mxu0 0.0
        %4346 = vmatpush1.xpose.msra.mxu0 0.0
        %4347 = vmatprep.subr.mxu0 0.0
        %4348 = vmatpush1.xpose.msra.mxu0 0.0
        %4349 = vmatprep.subr.mxu0 0.0
        %4350 = vmatpush1.xpose.msra.mxu0 0.0
        %4351 = vmatprep.subr.mxu0 0.0
        %4352 = vmatpush1.xpose.msra.mxu0 0.0
        %4353 = vmatprep.mubr.f32.mxu0 0.0
        %4354 = vmatmul.mubr.f32.gmra.mrb[0].mxu0 %v3172
        %v4355 = vpop.f32.mrb[0].mxu0
        %v4356 = vadd.f32 0.0, %v4355
        %v4357 = vpop.f32.mrb[0].mxu0
        %4358 = vmatprep.mubr.f32.mxu0 0.0
        %4359 = vmatmul.mubr.f32.gmra.mrb[0].mxu0 %v3178
        %v4360 = vpop.f32.mrb[0].mxu0
        %v4361 = vadd.f32 0.0, %v4360
        %v4362 = vpop.f32.mrb[0].mxu0
        %4363 = vmatprep.mubr.f32.mxu0 0.0
        %4364 = vmatmul.mubr.f32.gmra.mrb[0].mxu0 %v3184
        %v4365 = vpop.f32.mrb[0].mxu0
        %v4366 = vadd.f32 0.0, %v4365
        %v4367 = vpop.f32.mrb[0].mxu0
        %4368 = vdwg.mxu0
        %v4369 = vsel %vm1741, %v4356, -inf
        %4370 = vmax.xlane.f32.xlu0 %v4369
        %v4371 = vpop.xlane.xlu0 %4370
        %v4372 = vsel %vm1741, %v4361, -inf
        %4373 = vmax.xlane.f32.xlu0 %v4372
        %v4374 = vpop.xlane.xlu0 %4373
        %v4375 = vsel %vm1748, %v4366, -inf
        %4376 = vmax.xlane.f32.xlu0 %v4375
        %v4377 = vpop.xlane.xlu0 %4376
        %v4378 = vsub.f32 %v4356, %v4371
        %v4379 = vsub.f32 %v4361, %v4374
        %v4380 = vsub.f32 %v4366, %v4377
        %v4381 = vmul.f32 %v4378, 1.442695
        %v4382 = vpow.pop %v4381
        %v4383 = vmul.f32 %v4379, 1.442695
        %v4384 = vpow.pop %v4383
        %v4385 = vmul.f32 %v4380, 1.442695
        %v4386 = vpow.pop %v4385
        %v4387 = vsel %vm1741, %v4382, 0.0
        %4388 = vadd.xlane.f32.xlu0 %v4387
        %v4389 = vpop.xlane.xlu0 %4388
        %v4390 = vsel %vm1741, %v4384, 0.0
        %4391 = vadd.xlane.f32.xlu0 %v4390
        %v4392 = vpop.xlane.xlu0 %4391
        %v4393 = vsel %vm1748, %v4386, 0.0
        %4394 = vadd.xlane.f32.xlu0 %v4393
        %v4395 = vpop.xlane.xlu0 %4394
        %v4396 = vrcp.pop %v4389
        %v4397 = vrcp.pop %v4392
        %v4398 = vrcp.pop %v4395
        %v4399 = vmul.f32 %v4382, %v4396
        %v4400 = vmul.f32 %v4384, %v4397
        %v4401 = vmul.f32 %v4386, %v4398
        %v4403 = vsel %vm1741, %v4399, 0
        %v4406 = vsel %vm1741, %v4400, 0
        %v4409 = vsel %vm1741, %v4401, 0
        %v4412 = vsel %vm871, %v3669, 0
        %4414 = vmatprep.subr.mxu0 0.0
        %4415 = vmatpush1.msra.mxu0 %v3657
        %4416 = vmatprep.subr.mxu0 0.0
        %4417 = vmatpush1.msra.mxu0 %v3663
        %4418 = vmatprep.subr.mxu0 0.0
        %4419 = vmatpush1.msra.mxu0 %v4412
        %4420 = vmatprep.subr.mxu0 0.0
        %4421 = vmatpush1.msra.mxu0 0.0
        %4422 = vmatprep.subr.mxu0 0.0
        %4423 = vmatpush1.msra.mxu0 0.0
        %4424 = vmatprep.subr.mxu0 0.0
        %4425 = vmatpush1.msra.mxu0 0.0
        %4426 = vmatprep.subr.mxu0 0.0
        %4427 = vmatpush1.msra.mxu0 0.0
        %4428 = vmatprep.subr.mxu0 0.0
        %4429 = vmatpush1.msra.mxu0 0.0
        %4430 = vmatprep.subr.mxu0 0.0
        %4431 = vmatpush1.msra.mxu0 0.0
        %4432 = vmatprep.subr.mxu0 0.0
        %4433 = vmatpush1.msra.mxu0 0.0
        %4434 = vmatprep.subr.mxu0 0.0
        %4435 = vmatpush1.msra.mxu0 0.0
        %4436 = vmatprep.subr.mxu0 0.0
        %4437 = vmatpush1.msra.mxu0 0.0
        %4438 = vmatprep.subr.mxu0 0.0
        %4439 = vmatpush1.msra.mxu0 0.0
        %4440 = vmatprep.subr.mxu0 0.0
        %4441 = vmatpush1.msra.mxu0 0.0
        %4442 = vmatprep.subr.mxu0 0.0
        %4443 = vmatpush1.msra.mxu0 0.0
        %4444 = vmatprep.subr.mxu0 0.0
        %4445 = vmatpush1.msra.mxu0 0.0
        %4446 = vmatprep.subr.mxu0 0.0
        %4447 = vmatpush1.msra.mxu0 0.0
        %4448 = vmatprep.subr.mxu0 0.0
        %4449 = vmatpush1.msra.mxu0 0.0
        %4450 = vmatprep.subr.mxu0 0.0
        %4451 = vmatpush1.msra.mxu0 0.0
        %4452 = vmatprep.subr.mxu0 0.0
        %4453 = vmatpush1.msra.mxu0 0.0
        %4454 = vmatprep.subr.mxu0 0.0
        %4455 = vmatpush1.msra.mxu0 0.0
        %4456 = vmatprep.subr.mxu0 0.0
        %4457 = vmatpush1.msra.mxu0 0.0
        %4458 = vmatprep.subr.mxu0 0.0
        %4459 = vmatpush1.msra.mxu0 0.0
        %4460 = vmatprep.subr.mxu0 0.0
        %4461 = vmatpush1.msra.mxu0 0.0
        %4462 = vmatprep.subr.mxu0 0.0
        %4463 = vmatpush1.msra.mxu0 0.0
        %4464 = vmatprep.subr.mxu0 0.0
        %4465 = vmatpush1.msra.mxu0 0.0
        %4466 = vmatprep.subr.mxu0 0.0
        %4467 = vmatpush1.msra.mxu0 0.0
        %4468 = vmatprep.subr.mxu0 0.0
        %4469 = vmatpush1.msra.mxu0 0.0
        %4470 = vmatprep.subr.mxu0 0.0
        %4471 = vmatpush1.msra.mxu0 0.0
        %4472 = vmatprep.subr.mxu0 0.0
        %4473 = vmatpush1.msra.mxu0 0.0
        %4474 = vmatprep.subr.mxu0 0.0
        %4475 = vmatpush1.msra.mxu0 0.0
        %4476 = vmatprep.subr.mxu0 0.0
        %4477 = vmatpush1.msra.mxu0 0.0
        %4478 = vmatprep.mubr.f32.mxu0 0.0
        %4479 = vmatmul.mubr.f32.gmra.mrb[0].mxu0 %v4403
        %v4480 = vpop.f32.mrb[0].mxu0
        %v4481 = vadd.f32 0.0, %v4480
        %v4482 = vpop.f32.mrb[0].mxu0
        %4483 = vmatprep.mubr.f32.mxu0 0.0
        %4484 = vmatmul.mubr.f32.gmra.mrb[0].mxu0 %v4406
        %v4485 = vpop.f32.mrb[0].mxu0
        %v4486 = vadd.f32 0.0, %v4485
        %v4487 = vpop.f32.mrb[0].mxu0
        %4488 = vmatprep.mubr.f32.mxu0 0.0
        %4489 = vmatmul.mubr.f32.gmra.mrb[0].mxu0 %v4409
        %v4490 = vpop.f32.mrb[0].mxu0
        %v4491 = vadd.f32 0.0, %v4490
        %v4492 = vpop.f32.mrb[0].mxu0
        %4493 = vdwg.mxu0
        %v4494 = vadd.f32 %v4286, %v4481
        %v4495 = vadd.f32 %v4287, %v4486
        %v4496 = vadd.f32 %v4288, %v4491
        %v4497 = vadd.f32 %v2929, %v4494
        %v4498 = vadd.f32 %v2930, %v4495
        %v4499 = vadd.f32 %v2931, %v4496
        %s4500 = scalar_lea.vmem %s10, 1
        %v4501 = vld [vmem:[%s4500] sm:$0x1]
        %v4503 = vlaneseq
        %v4504 = vshrl.u32 %v4503, 7
        %v4505 = vsub.s32 0, %v4504
        %v4506 = vrot.slane %v4501, %v4505
        %v4508 = vadd.f32 %v4497, %v4506
        %v4509 = vadd.f32 %v4498, %v4506
        %v4510 = vadd.f32 %v4499, %v4506
        %s4511 = scalar_lea.vmem %s11, 1
        %v4512 = vld [vmem:[%s4511] sm:$0x1]
        %s4513 = scalar_lea.vmem %s12, 1
        %v4514 = vld [vmem:[%s4513] sm:$0x1]
        %4515 = vadd.xlane.f32.xlu0 %v4508
        %v4516 = vpop.xlane.xlu0 %4515
        %4517 = vadd.xlane.f32.xlu0 %v4509
        %v4518 = vpop.xlane.xlu0 %4517
        %v4519 = vsel %vm871, %v4510, 0.0
        %4520 = vadd.xlane.f32.xlu0 %v4519
        %v4521 = vpop.xlane.xlu0 %4520
        %v4522 = vmul.f32 %v4508, %v4508
        %v4523 = vmul.f32 %v4509, %v4509
        %v4524 = vmul.f32 %v4510, %v4510
        %4525 = vadd.xlane.f32.xlu0 %v4522
        %v4526 = vpop.xlane.xlu0 %4525
        %4527 = vadd.xlane.f32.xlu0 %v4523
        %v4528 = vpop.xlane.xlu0 %4527
        %v4529 = vsel %vm871, %v4524, 0.0
        %4530 = vadd.xlane.f32.xlu0 %v4529
        %v4531 = vpop.xlane.xlu0 %4530
        %v4532 = vmul.f32 %v4516, 0.015625
        %v4533 = vmul.f32 %v4518, 0.015625
        %v4534 = vmul.f32 %v4521, 0.015625
        %v4535 = vmul.f32 %v4526, 0.015625
        %v4536 = vmul.f32 %v4528, 0.015625
        %v4537 = vmul.f32 %v4531, 0.015625
        %v4538 = vmul.f32 %v4532, %v4532
        %v4539 = vmul.f32 %v4533, %v4533
        %v4540 = vmul.f32 %v4534, %v4534
        %v4541 = vsub.f32 %v4535, %v4538
        %v4542 = vsub.f32 %v4536, %v4539
        %v4543 = vsub.f32 %v4537, %v4540
        %v4544 = vsub.f32 %v4508, %v4532
        %v4545 = vsub.f32 %v4509, %v4533
        %v4546 = vsub.f32 %v4510, %v4534
        %v4547 = vadd.f32 %v4541, 1e-05
        %v4548 = vadd.f32 %v4542, 1e-05
        %v4549 = vadd.f32 %v4543, 1e-05
        %v4550 = vrsqrt.pop %v4547
        %v4551 = vrsqrt.pop %v4548
        %v4552 = vrsqrt.pop %v4549
        %v4553 = vmul.f32 %v4544, %v4550
        %v4554 = vmul.f32 %v4545, %v4551
        %v4555 = vmul.f32 %v4546, %v4552
        %v4557 = vlaneseq
        %v4558 = vshrl.u32 %v4557, 7
        %v4559 = vsub.s32 0, %v4558
        %v4560 = vrot.slane %v4512, %v4559
        %v4562 = vmul.f32 %v4553, %v4560
        %v4563 = vmul.f32 %v4554, %v4560
        %v4564 = vmul.f32 %v4555, %v4560
        %v4566 = vlaneseq
        %v4567 = vshrl.u32 %v4566, 7
        %v4568 = vsub.s32 0, %v4567
        %v4569 = vrot.slane %v4514, %v4568
        %v4571 = vadd.f32 %v4562, %v4569
        %v4572 = vadd.f32 %v4563, %v4569
        %v4573 = vadd.f32 %v4564, %v4569
        %s4574 = scalar_lea.vmem [#allocation10], 256
        %v4575 = vld [vmem:[%s4574] sm:$0xff]
        %v4576 = vld [vmem:[%s4574 + $0x8] sm:$0xff]
        %v4577 = vld [vmem:[%s4574 + $0x10] sm:$0xff]
        %v4578 = vld [vmem:[%s4574 + $0x18] sm:$0xff]
        %v4579 = vld [vmem:[%s4574 + $0x20] sm:$0xff]
        %v4580 = vld [vmem:[%s4574 + $0x28] sm:$0xff]
        %v4581 = vld [vmem:[%s4574 + $0x30] sm:$0xff]
        %v4582 = vld [vmem:[%s4574 + $0x38] sm:$0xff]
        %v4583 = vld [vmem:[%s4574 + $0x40] sm:$0xff]
        %v4584 = vld [vmem:[%s4574 + $0x48] sm:$0xff]
        %v4585 = vld [vmem:[%s4574 + $0x50] sm:$0xff]
        %v4586 = vld [vmem:[%s4574 + $0x58] sm:$0xff]
        %v4587 = vld [vmem:[%s4574 + $0x60] sm:$0xff]
        %v4588 = vld [vmem:[%s4574 + $0x68] sm:$0xff]
        %v4589 = vld [vmem:[%s4574 + $0x70] sm:$0xff]
        %v4590 = vld [vmem:[%s4574 + $0x78] sm:$0xff]
        %v4591 = vld [vmem:[%s4574 + $0x80] sm:$0xff]
        %v4592 = vld [vmem:[%s4574 + $0x88] sm:$0xff]
        %v4593 = vld [vmem:[%s4574 + $0x90] sm:$0xff]
        %v4594 = vld [vmem:[%s4574 + $0x98] sm:$0xff]
        %v4595 = vld [vmem:[%s4574 + $0xa0] sm:$0xff]
        %v4596 = vld [vmem:[%s4574 + $0xa8] sm:$0xff]
        %v4597 = vld [vmem:[%s4574 + $0xb0] sm:$0xff]
        %v4598 = vld [vmem:[%s4574 + $0xb8] sm:$0xff]
        %v4599 = vld [vmem:[%s4574 + $0xc0] sm:$0xff]
        %v4600 = vld [vmem:[%s4574 + $0xc8] sm:$0xff]
        %v4601 = vld [vmem:[%s4574 + $0xd0] sm:$0xff]
        %v4602 = vld [vmem:[%s4574 + $0xd8] sm:$0xff]
        %v4603 = vld [vmem:[%s4574 + $0xe0] sm:$0xff]
        %v4604 = vld [vmem:[%s4574 + $0xe8] sm:$0xff]
        %v4605 = vld [vmem:[%s4574 + $0xf0] sm:$0xff]
        %v4606 = vld [vmem:[%s4574 + $0xf8] sm:$0xff]
        %s4607 = scalar_lea.vmem %s14, 2
        %v4608 = vld [vmem:[%s4607] sm:$0x3]
        %v4610 = vlaneseq
        %v4611 = vshrl.u32 %v4610, 7
        %v4612 = vsub.s32 0, %v4611
        %v4613 = vrot.slane %v4608, %v4612
        %v4614 = vlaneseq
        %v4615 = vshrl.u32 %v4614, 7
        %v4616 = vsub.s32 1, %v4615
        %v4617 = vrot.slane %v4608, %v4616
        %4620 = vmatprep.subr.mxu0 %v4576
        %4621 = vmatpush1.msra.mxu0 %v4575
        %4622 = vmatprep.subr.mxu0 %v4578
        %4623 = vmatpush1.msra.mxu0 %v4577
        %4624 = vmatprep.subr.mxu0 %v4580
        %4625 = vmatpush1.msra.mxu0 %v4579
        %4626 = vmatprep.subr.mxu0 %v4582
        %4627 = vmatpush1.msra.mxu0 %v4581
        %4628 = vmatprep.subr.mxu0 %v4584
        %4629 = vmatpush1.msra.mxu0 %v4583
        %4630 = vmatprep.subr.mxu0 %v4586
        %4631 = vmatpush1.msra.mxu0 %v4585
        %4632 = vmatprep.subr.mxu0 %v4588
        %4633 = vmatpush1.msra.mxu0 %v4587
        %4634 = vmatprep.subr.mxu0 %v4590
        %4635 = vmatpush1.msra.mxu0 %v4589
        %4636 = vmatprep.subr.mxu0 %v4592
        %4637 = vmatpush1.msra.mxu0 %v4591
        %4638 = vmatprep.subr.mxu0 %v4594
        %4639 = vmatpush1.msra.mxu0 %v4593
        %4640 = vmatprep.subr.mxu0 %v4596
        %4641 = vmatpush1.msra.mxu0 %v4595
        %4642 = vmatprep.subr.mxu0 %v4598
        %4643 = vmatpush1.msra.mxu0 %v4597
        %4644 = vmatprep.subr.mxu0 %v4600
        %4645 = vmatpush1.msra.mxu0 %v4599
        %4646 = vmatprep.subr.mxu0 %v4602
        %4647 = vmatpush1.msra.mxu0 %v4601
        %4648 = vmatprep.subr.mxu0 %v4604
        %4649 = vmatpush1.msra.mxu0 %v4603
        %4650 = vmatprep.subr.mxu0 %v4606
        %4651 = vmatpush1.msra.mxu0 %v4605
        %4652 = vmatprep.subr.mxu0 0.0
        %4653 = vmatpush1.msra.mxu0 0.0
        %4654 = vmatprep.subr.mxu0 0.0
        %4655 = vmatpush1.msra.mxu0 0.0
        %4656 = vmatprep.subr.mxu0 0.0
        %4657 = vmatpush1.msra.mxu0 0.0
        %4658 = vmatprep.subr.mxu0 0.0
        %4659 = vmatpush1.msra.mxu0 0.0
        %4660 = vmatprep.subr.mxu0 0.0
        %4661 = vmatpush1.msra.mxu0 0.0
        %4662 = vmatprep.subr.mxu0 0.0
        %4663 = vmatpush1.msra.mxu0 0.0
        %4664 = vmatprep.subr.mxu0 0.0
        %4665 = vmatpush1.msra.mxu0 0.0
        %4666 = vmatprep.subr.mxu0 0.0
        %4667 = vmatpush1.msra.mxu0 0.0
        %4668 = vmatprep.subr.mxu0 0.0
        %4669 = vmatpush1.msra.mxu0 0.0
        %4670 = vmatprep.subr.mxu0 0.0
        %4671 = vmatpush1.msra.mxu0 0.0
        %4672 = vmatprep.subr.mxu0 0.0
        %4673 = vmatpush1.msra.mxu0 0.0
        %4674 = vmatprep.subr.mxu0 0.0
        %4675 = vmatpush1.msra.mxu0 0.0
        %4676 = vmatprep.subr.mxu0 0.0
        %4677 = vmatpush1.msra.mxu0 0.0
        %4678 = vmatprep.subr.mxu0 0.0
        %4679 = vmatpush1.msra.mxu0 0.0
        %4680 = vmatprep.subr.mxu0 0.0
        %4681 = vmatpush1.msra.mxu0 0.0
        %4682 = vmatprep.subr.mxu0 0.0
        %4683 = vmatpush1.msra.mxu0 0.0
        %4684 = vmatprep.mubr.f32.mxu0 0.0
        %4685 = vmatmul.mubr.f32.gmra.mrb[0].mxu0 %v4571
        %v4686 = vpop.f32.mrb[0].mxu0
        %v4687 = vadd.f32 %v4613, %v4686
        %v4688 = vpop.f32.mrb[0].mxu0
        %v4689 = vadd.f32 %v4617, %v4688
        %4690 = vmatprep.mubr.f32.mxu0 0.0
        %4691 = vmatmul.mubr.f32.gmra.mrb[0].mxu0 %v4572
        %v4692 = vpop.f32.mrb[0].mxu0
        %v4693 = vadd.f32 %v4613, %v4692
        %v4694 = vpop.f32.mrb[0].mxu0
        %v4695 = vadd.f32 %v4617, %v4694
        %4696 = vmatprep.mubr.f32.mxu0 0.0
        %4697 = vmatmul.mubr.f32.gmra.mrb[0].mxu0 %v4573
        %v4698 = vpop.f32.mrb[0].mxu0
        %v4699 = vadd.f32 %v4613, %v4698
        %v4700 = vpop.f32.mrb[0].mxu0
        %v4701 = vadd.f32 %v4617, %v4700
        %4702 = vdwg.mxu0
        %v4703 = vmul.f32 %v4687, 0.5
        %v4704 = vmul.f32 %v4689, 0.5
        %v4705 = vmul.f32 %v4693, 0.5
        %v4706 = vmul.f32 %v4695, 0.5
        %v4707 = vmul.f32 %v4699, 0.5
        %v4708 = vmul.f32 %v4701, 0.5
        %v4709 = vmul.f32 %v4687, %v4687
        %v4710 = vmul.f32 %v4689, %v4689
        %v4711 = vmul.f32 %v4693, %v4693
        %v4712 = vmul.f32 %v4695, %v4695
        %v4713 = vmul.f32 %v4699, %v4699
        %v4714 = vmul.f32 %v4701, %v4701
        %v4715 = vmul.f32 %v4709, %v4687
        %v4716 = vmul.f32 %v4710, %v4689
        %v4717 = vmul.f32 %v4711, %v4693
        %v4718 = vmul.f32 %v4712, %v4695
        %v4719 = vmul.f32 %v4713, %v4699
        %v4720 = vmul.f32 %v4714, %v4701
        %v4721 = vmul.f32 %v4715, 0.044715
        %v4722 = vmul.f32 %v4716, 0.044715
        %v4723 = vmul.f32 %v4717, 0.044715
        %v4724 = vmul.f32 %v4718, 0.044715
        %v4725 = vmul.f32 %v4719, 0.044715
        %v4726 = vmul.f32 %v4720, 0.044715
        %v4727 = vadd.f32 %v4687, %v4721
        %v4728 = vadd.f32 %v4689, %v4722
        %v4729 = vadd.f32 %v4693, %v4723
        %v4730 = vadd.f32 %v4695, %v4724
        %v4731 = vadd.f32 %v4699, %v4725
        %v4732 = vadd.f32 %v4701, %v4726
        %v4733 = vmul.f32 %v4727, 0.7978846
        %v4734 = vmul.f32 %v4728, 0.7978846
        %v4735 = vmul.f32 %v4729, 0.7978846
        %v4736 = vmul.f32 %v4730, 0.7978846
        %v4737 = vmul.f32 %v4731, 0.7978846
        %v4738 = vmul.f32 %v4732, 0.7978846
        %v4739 = vtanh.pop %v4733
        %v4740 = vtanh.pop %v4734
        %v4741 = vtanh.pop %v4735
        %v4742 = vtanh.pop %v4736
        %v4743 = vtanh.pop %v4737
        %v4744 = vtanh.pop %v4738
        %v4745 = vadd.f32 %v4739, 1.0
        %v4746 = vadd.f32 %v4740, 1.0
        %v4747 = vadd.f32 %v4741, 1.0
        %v4748 = vadd.f32 %v4742, 1.0
        %v4749 = vadd.f32 %v4743, 1.0
        %v4750 = vadd.f32 %v4744, 1.0
        %v4751 = vmul.f32 %v4703, %v4745
        %v4752 = vmul.f32 %v4704, %v4746
        %v4753 = vmul.f32 %v4705, %v4747
        %v4754 = vmul.f32 %v4706, %v4748
        %v4755 = vmul.f32 %v4707, %v4749
        %v4756 = vmul.f32 %v4708, %v4750
        %s4757 = scalar_lea.vmem [#allocation11], 256
        %v4758 = vld [vmem:[%s4757] sm:$0xff]
        %v4759 = vld [vmem:[%s4757 + $0x8] sm:$0xff]
        %v4760 = vld [vmem:[%s4757 + $0x10] sm:$0xff]
        %v4761 = vld [vmem:[%s4757 + $0x18] sm:$0xff]
        %v4762 = vld [vmem:[%s4757 + $0x20] sm:$0xff]
        %v4763 = vld [vmem:[%s4757 + $0x28] sm:$0xff]
        %v4764 = vld [vmem:[%s4757 + $0x30] sm:$0xff]
        %v4765 = vld [vmem:[%s4757 + $0x38] sm:$0xff]
        %v4766 = vld [vmem:[%s4757 + $0x40] sm:$0xff]
        %v4767 = vld [vmem:[%s4757 + $0x48] sm:$0xff]
        %v4768 = vld [vmem:[%s4757 + $0x50] sm:$0xff]
        %v4769 = vld [vmem:[%s4757 + $0x58] sm:$0xff]
        %v4770 = vld [vmem:[%s4757 + $0x60] sm:$0xff]
        %v4771 = vld [vmem:[%s4757 + $0x68] sm:$0xff]
        %v4772 = vld [vmem:[%s4757 + $0x70] sm:$0xff]
        %v4773 = vld [vmem:[%s4757 + $0x78] sm:$0xff]
        %v4774 = vld [vmem:[%s4757 + $0x80] sm:$0xff]
        %v4775 = vld [vmem:[%s4757 + $0x88] sm:$0xff]
        %v4776 = vld [vmem:[%s4757 + $0x90] sm:$0xff]
        %v4777 = vld [vmem:[%s4757 + $0x98] sm:$0xff]
        %v4778 = vld [vmem:[%s4757 + $0xa0] sm:$0xff]
        %v4779 = vld [vmem:[%s4757 + $0xa8] sm:$0xff]
        %v4780 = vld [vmem:[%s4757 + $0xb0] sm:$0xff]
        %v4781 = vld [vmem:[%s4757 + $0xb8] sm:$0xff]
        %v4782 = vld [vmem:[%s4757 + $0xc0] sm:$0xff]
        %v4783 = vld [vmem:[%s4757 + $0xc8] sm:$0xff]
        %v4784 = vld [vmem:[%s4757 + $0xd0] sm:$0xff]
        %v4785 = vld [vmem:[%s4757 + $0xd8] sm:$0xff]
        %v4786 = vld [vmem:[%s4757 + $0xe0] sm:$0xff]
        %v4787 = vld [vmem:[%s4757 + $0xe8] sm:$0xff]
        %v4788 = vld [vmem:[%s4757 + $0xf0] sm:$0xff]
        %v4789 = vld [vmem:[%s4757 + $0xf8] sm:$0xff]
        %4790 = vmatprep.subr.mxu0 0.0
        %4791 = vmatpush1.msra.mxu0 %v4758
        %4792 = vmatprep.subr.mxu0 0.0
        %4793 = vmatpush1.msra.mxu0 %v4759
        %4794 = vmatprep.subr.mxu0 0.0
        %4795 = vmatpush1.msra.mxu0 %v4760
        %4796 = vmatprep.subr.mxu0 0.0
        %4797 = vmatpush1.msra.mxu0 %v4761
        %4798 = vmatprep.subr.mxu0 0.0
        %4799 = vmatpush1.msra.mxu0 %v4762
        %4800 = vmatprep.subr.mxu0 0.0
        %4801 = vmatpush1.msra.mxu0 %v4763
        %4802 = vmatprep.subr.mxu0 0.0
        %4803 = vmatpush1.msra.mxu0 %v4764
        %4804 = vmatprep.subr.mxu0 0.0
        %4805 = vmatpush1.msra.mxu0 %v4765
        %4806 = vmatprep.subr.mxu0 0.0
        %4807 = vmatpush1.msra.mxu0 %v4766
        %4808 = vmatprep.subr.mxu0 0.0
        %4809 = vmatpush1.msra.mxu0 %v4767
        %4810 = vmatprep.subr.mxu0 0.0
        %4811 = vmatpush1.msra.mxu0 %v4768
        %4812 = vmatprep.subr.mxu0 0.0
        %4813 = vmatpush1.msra.mxu0 %v4769
        %4814 = vmatprep.subr.mxu0 0.0
        %4815 = vmatpush1.msra.mxu0 %v4770
        %4816 = vmatprep.subr.mxu0 0.0
        %4817 = vmatpush1.msra.mxu0 %v4771
        %4818 = vmatprep.subr.mxu0 0.0
        %4819 = vmatpush1.msra.mxu0 %v4772
        %4820 = vmatprep.subr.mxu0 0.0
        %4821 = vmatpush1.msra.mxu0 %v4773
        %4822 = vmatprep.subr.mxu0 0.0
        %4823 = vmatpush1.msra.mxu0 %v4774
        %4824 = vmatprep.subr.mxu0 0.0
        %4825 = vmatpush1.msra.mxu0 %v4775
        %4826 = vmatprep.subr.mxu0 0.0
        %4827 = vmatpush1.msra.mxu0 %v4776
        %4828 = vmatprep.subr.mxu0 0.0
        %4829 = vmatpush1.msra.mxu0 %v4777
        %4830 = vmatprep.subr.mxu0 0.0
        %4831 = vmatpush1.msra.mxu0 %v4778
        %4832 = vmatprep.subr.mxu0 0.0
        %4833 = vmatpush1.msra.mxu0 %v4779
        %4834 = vmatprep.subr.mxu0 0.0
        %4835 = vmatpush1.msra.mxu0 %v4780
        %4836 = vmatprep.subr.mxu0 0.0
        %4837 = vmatpush1.msra.mxu0 %v4781
        %4838 = vmatprep.subr.mxu0 0.0
        %4839 = vmatpush1.msra.mxu0 %v4782
        %4840 = vmatprep.subr.mxu0 0.0
        %4841 = vmatpush1.msra.mxu0 %v4783
        %4842 = vmatprep.subr.mxu0 0.0
        %4843 = vmatpush1.msra.mxu0 %v4784
        %4844 = vmatprep.subr.mxu0 0.0
        %4845 = vmatpush1.msra.mxu0 %v4785
        %4846 = vmatprep.subr.mxu0 0.0
        %4847 = vmatpush1.msra.mxu0 %v4786
        %4848 = vmatprep.subr.mxu0 0.0
        %4849 = vmatpush1.msra.mxu0 %v4787
        %4850 = vmatprep.subr.mxu0 0.0
        %4851 = vmatpush1.msra.mxu0 %v4788
        %4852 = vmatprep.subr.mxu0 0.0
        %4853 = vmatpush1.msra.mxu0 %v4789
        %4854 = vmatprep.mubr.f32.mxu0 %v4752
        %4855 = vmatmul.mubr.f32.gmra.mrb[0].mxu0 %v4751
        %v4856 = vpop.f32.mrb[0].mxu0
        %v4857 = vadd.f32 0.0, %v4856
        %v4858 = vpop.f32.mrb[0].mxu0
        %4859 = vmatprep.mubr.f32.mxu0 %v4754
        %4860 = vmatmul.mubr.f32.gmra.mrb[0].mxu0 %v4753
        %v4861 = vpop.f32.mrb[0].mxu0
        %v4862 = vpop.f32.mrb[0].mxu0
        %4863 = vmatprep.mubr.f32.mxu0 %v4756
        %4864 = vmatmul.mubr.f32.gmra.mrb[0].mxu0 %v4755
        %v4865 = vpop.f32.mrb[0].mxu0
        %v4866 = vpop.f32.mrb[0].mxu0
        %4867 = vdwg.mxu0
        %v4868 = vadd.f32 %v4508, %v4857
        %s4869 = scalar_lea.vmem %s16, 1
        %v4870 = vld [vmem:[%s4869] sm:$0x1]
        %v4872 = vlaneseq
        %v4873 = vshrl.u32 %v4872, 7
        %v4874 = vsub.s32 0, %v4873
        %v4875 = vrot.slane %v4870, %v4874
        %v4877 = vadd.f32 %v4868, %v4875
        %v4878 = vld [vmem:[%s17] sm:$0x1]
        %v4879 = vld [vmem:[%s18] sm:$0x1]
        %v4880 = vsel %vm871, %v4877, 0.0
        %4881 = vadd.xlane.f32.xlu0 %v4880
        %v4882 = vpop.xlane.xlu0 %4881
        %v4883 = vmul.f32 %v4877, %v4877
        %v4884 = vsel %vm871, %v4883, 0.0
        %4885 = vadd.xlane.f32.xlu0 %v4884
        %v4886 = vpop.xlane.xlu0 %4885
        %v4887 = vmul.f32 %v4882, 0.015625
        %v4888 = vmul.f32 %v4886, 0.015625
        %v4889 = vmul.f32 %v4887, %v4887
        %v4890 = vsub.f32 %v4888, %v4889
        %v4891 = vsub.f32 %v4877, %v4887
        %v4892 = vadd.f32 %v4890, 1e-05
        %v4893 = vrsqrt.pop %v4892
        %v4894 = vmul.f32 %v4891, %v4893
        %v4895 = vmul.f32 %v4894, %v4878
        %v4896 = vadd.f32 %v4895, %v4879
        %v4897 = vld [vmem:[%s19] sm:$0xff]
        %v4898 = vld [vmem:[%s19 + $0x8] sm:$0xff]
        %v4899 = vld [vmem:[%s19 + $0x10] sm:$0xff]
        %v4900 = vld [vmem:[%s19 + $0x18] sm:$0xff]
        %v4901 = vld [vmem:[%s19 + $0x20] sm:$0xff]
        %v4902 = vld [vmem:[%s19 + $0x28] sm:$0xff]
        %v4903 = vld [vmem:[%s19 + $0x30] sm:$0xff]
        %v4904 = vld [vmem:[%s19 + $0x38] sm:$0xff]
        %v4905 = vld [vmem:[%s19 + $0x40] sm:$0xff]
        %v4906 = vld [vmem:[%s19 + $0x48] sm:$0xff]
        %v4907 = vld [vmem:[%s19 + $0x50] sm:$0xff]
        %v4908 = vld [vmem:[%s19 + $0x58] sm:$0xff]
        %v4909 = vld [vmem:[%s19 + $0x60] sm:$0xff]
        %v4910 = vld [vmem:[%s19 + $0x68] sm:$0xff]
        %v4911 = vld [vmem:[%s19 + $0x70] sm:$0xff]
        %v4912 = vld [vmem:[%s19 + $0x78] sm:$0xff]
        %v4913 = vld [vmem:[%s20] sm:$0x1]
        %4914 = vmatprep.subr.mxu0 0.0
        %4915 = vmatpush1.msra.mxu0 %v4897
        %4916 = vmatprep.subr.mxu0 0.0
        %4917 = vmatpush1.msra.mxu0 %v4898
        %4918 = vmatprep.subr.mxu0 0.0
        %4919 = vmatpush1.msra.mxu0 %v4899
        %4920 = vmatprep.subr.mxu0 0.0
        %4921 = vmatpush1.msra.mxu0 %v4900
        %4922 = vmatprep.subr.mxu0 0.0
        %4923 = vmatpush1.msra.mxu0 %v4901
        %4924 = vmatprep.subr.mxu0 0.0
        %4925 = vmatpush1.msra.mxu0 %v4902
        %4926 = vmatprep.subr.mxu0 0.0
        %4927 = vmatpush1.msra.mxu0 %v4903
        %4928 = vmatprep.subr.mxu0 0.0
        %4929 = vmatpush1.msra.mxu0 %v4904
        %4930 = vmatprep.subr.mxu0 0.0
        %4931 = vmatpush1.msra.mxu0 %v4905
        %4932 = vmatprep.subr.mxu0 0.0
        %4933 = vmatpush1.msra.mxu0 %v4906
        %4934 = vmatprep.subr.mxu0 0.0
        %4935 = vmatpush1.msra.mxu0 %v4907
        %4936 = vmatprep.subr.mxu0 0.0
        %4937 = vmatpush1.msra.mxu0 %v4908
        %4938 = vmatprep.subr.mxu0 0.0
        %4939 = vmatpush1.msra.mxu0 %v4909
        %4940 = vmatprep.subr.mxu0 0.0
        %4941 = vmatpush1.msra.mxu0 %v4910
        %4942 = vmatprep.subr.mxu0 0.0
        %4943 = vmatpush1.msra.mxu0 %v4911
        %4944 = vmatprep.subr.mxu0 0.0
        %4945 = vmatpush1.msra.mxu0 %v4912
        %4946 = vmatprep.subr.mxu0 0.0
        %4947 = vmatpush1.msra.mxu0 0.0
        %4948 = vmatprep.subr.mxu0 0.0
        %4949 = vmatpush1.msra.mxu0 0.0
        %4950 = vmatprep.subr.mxu0 0.0
        %4951 = vmatpush1.msra.mxu0 0.0
        %4952 = vmatprep.subr.mxu0 0.0
        %4953 = vmatpush1.msra.mxu0 0.0
        %4954 = vmatprep.subr.mxu0 0.0
        %4955 = vmatpush1.msra.mxu0 0.0
        %4956 = vmatprep.subr.mxu0 0.0
        %4957 = vmatpush1.msra.mxu0 0.0
        %4958 = vmatprep.subr.mxu0 0.0
        %4959 = vmatpush1.msra.mxu0 0.0
        %4960 = vmatprep.subr.mxu0 0.0
        %4961 = vmatpush1.msra.mxu0 0.0
        %4962 = vmatprep.subr.mxu0 0.0
        %4963 = vmatpush1.msra.mxu0 0.0
        %4964 = vmatprep.subr.mxu0 0.0
        %4965 = vmatpush1.msra.mxu0 0.0
        %4966 = vmatprep.subr.mxu0 0.0
        %4967 = vmatpush1.msra.mxu0 0.0
        %4968 = vmatprep.subr.mxu0 0.0
        %4969 = vmatpush1.msra.mxu0 0.0
        %4970 = vmatprep.subr.mxu0 0.0
        %4971 = vmatpush1.msra.mxu0 0.0
        %4972 = vmatprep.subr.mxu0 0.0
        %4973 = vmatpush1.msra.mxu0 0.0
        %4974 = vmatprep.subr.mxu0 0.0
        %4975 = vmatpush1.msra.mxu0 0.0
        %4976 = vmatprep.subr.mxu0 0.0
        %4977 = vmatpush1.msra.mxu0 0.0
        %4978 = vmatprep.mubr.f32.mxu0 0.0
        %4979 = vmatmul.mubr.f32.gmra.mrb[0].mxu0 %v4896
        %v4980 = vpop.f32.mrb[0].mxu0
        %v4981 = vadd.f32 %v4913, %v4980
        %v4982 = vpop.f32.mrb[0].mxu0
        %4983 = vdwg.mxu0
        %4984 = vst [vmem:[%s736] sm:$0x1] %v4981
        %s4985 = sand.u32 %s493, 1
        %s4986 = scalar_lea.sflag [#allocation4], %s4985
        %s4987 = sand.u32 %s493, 1
        %s4988 = scalar_lea.vmem [#allocation13], %s4987
        // Predicated region
        $region129: #{vit_pallas.1} parent=103 // pred_check
          %p4989 = pneg %p503
        $region130: #{vit_pallas.1} parent=103 // pred_check_branch
          %4991 = sbr.rel (%p4989) target = $region132
        $region131: #{vit_pallas.1} parent=103 // pred_region
          %s4993 = ssub.s32 16, 16
          %4994 = vsyncadd %s4986, %s4993
          %s4995 = smul.addr %s39, 16
          %s4996 = scalar_lea.hbm %s21, %s4995
          %s4998 = sshll.u32 %s4988, 4
          %s4999 = int_to_ptr.vmem [resolvable:$true] %s4998
          %5001 = dma.vmem_to_hbm [thread:$0]  %s4999, 16, %s4996, %s4986
        $region132: #{vit_pallas.1} parent=103 // pred_fallthru
          _
      $region104: #{vit_pallas.1} parent=5 // pred_fallthru
        _
      %p5002 = scmp.le.s32.totalorder 2, %s34
      // Predicated region
      $region133: #{vit_pallas.1} parent=5 // pred_check
        %p5003 = pneg %p5002
      $region134: #{vit_pallas.1} parent=5 // pred_check_branch
        %5005 = sbr.rel (%p5003) target = $region136
      $region135: #{vit_pallas.1} parent=5 // pred_region
        %s5006 = ssub.s32 %s34, 2
        // Predicated region
        $region137: #{vit_pallas.1} parent=135 // pred_check
          %p5007 = pneg %p509
        $region138: #{vit_pallas.1} parent=135 // pred_check_branch
          %5009 = sbr.rel (%p5007) target = $region140
        $region139: #{vit_pallas.1} parent=135 // pred_region
          %s5010 = sand.u32 %s494, 1
          %s5011 = scalar_lea.sflag [#allocation4], %s5010
          %s5012 = sand.u32 %s494, 1
          %s5013 = scalar_lea.vmem [#allocation13], %s5012
          %5014 = dma.done %s5011, 16
        $region140: #{vit_pallas.1} parent=135 // pred_fallthru
          _
      $region136: #{vit_pallas.1} parent=5 // pred_fallthru
        _
    $region6: #{vit_pallas.1} parent=1 // loop_footer
      %s38 = sadd.s32 1, %s34
    $region7: #{vit_pallas.1} parent=1 // loop_footer_branch
      %33 = sbr.rel target = $region3
    $region8: #{vit_pallas.1} parent=1 // loop_exit
      _
    %5015 = vsyncpa [#allocation3], 1
    %s5016 = scalar_lea.sflag [#allocation3], 1
    %5017 = vsyncpa %s5016, 1
    %5018 = vsyncpa [#allocation6], 1
    %5019 = vsyncpa [#allocation9], 1
    %5020 = vsyncpa [#allocation12], 1
    %5021 = vsyncpa [#allocation4], 1
    %s5022 = scalar_lea.sflag [#allocation4], 1
    %5023 = vsyncpa %s5022, 1

</llo_original>
